<compile_context>
chip_gen: v6e
topology: v6e:2x2x1
jax: 0.10.0
libtpu: 0.0.40
codegen_flags: <defaults>
</compile_context>

<pallas_src>
import functools

import jax
import jax.numpy as jnp
from jax.experimental import pallas as pl
from jax.experimental.pallas import tpu as pltpu


# -----------------------------------------------------------------------------
# small helpers
# -----------------------------------------------------------------------------
def _round_up(x, m):
    return ((x + m - 1) // m) * m


def _pick_tile(dim, max_tile, align):
    """Largest tile <= max_tile that divides dim (dim is a multiple of align)."""
    t = min(dim, max_tile)
    t = max((t // align) * align, align)
    while dim % t:
        t -= align
    return t


def _pad_gate_cols(w, h, hp):
    """Pad each of the 4 (i,f,g,o) gate blocks along the last axis from h to hp."""
    lead = w.shape[:-1]
    w4 = w.reshape(*lead, 4, h)
    w4 = jnp.pad(w4, [(0, 0)] * len(lead) + [(0, 0), (0, hp - h)])
    return w4.reshape(*lead, 4 * hp)


def _tpu_info():
    try:
        return pltpu.get_tpu_info()
    except Exception:
        return None


def _vmem_capacity_bytes(default=64 * 2**20):
    info = _tpu_info()
    if info is not None:
        for attr in ("vmem_capacity_bytes", "vmem_bytes", "vmem_size_bytes"):
            v = getattr(info, attr, None)
            if v:
                return int(v)
    return default  # conservative (v7x-sized) default


def _vmem_limit_bytes():
    cap = _vmem_capacity_bytes()
    return int(min(max(cap * 3 // 4, 32 * 2**20), 112 * 2**20))


def _num_tensorcores(default=1):
    # Batch-block split only pays off on multi-TC parts (v7x); default to 1.
    info = _tpu_info()
    if info is not None:
        for attr in ("num_cores", "core_count", "num_tensorcores", "tensorcore_count"):
            v = getattr(info, attr, None)
            if v:
                return int(v)
    return default


def _auto_time_chunk(hp, t):
    # Keep (double-buffered gx chunk + y chunk + W_hh) inside the scoped VMEM
    # budget even at large Hp (v7x has only 64 MiB physical VMEM).
    if hp >= 2048:
        c = 4
    elif hp >= 1024:
        c = 8
    elif hp >= 512:
        c = 16
    else:
        c = 32
    return max(1, min(c, t))


# -----------------------------------------------------------------------------
# Tiled linear kernel:  out = x @ w + b   (grid over rows, cols, K-accumulation)
# bf16 MXU operands, f32 accumulation.  When the output dtype is f32 the
# accumulation happens directly in o_ref (resident across the arbitrary K axis)
# and no scratch is allocated; for bf16 outputs (gx) an f32 scratch is used.
# -----------------------------------------------------------------------------
def _linear_kernel(x_ref, w_ref, b_ref, o_ref, *scratch):
    acc_ref = scratch[0] if scratch else o_ref
    k = pl.program_id(2)

    @pl.when(k == 0)
    def _():
        acc_ref[...] = jnp.zeros_like(acc_ref)

    acc_ref[...] += jnp.dot(x_ref[...].astype(jnp.bfloat16), w_ref[...],
                            preferred_element_type=jnp.float32)

    @pl.when(k == pl.num_programs(2) - 1)
    def _():
        o_ref[...] = (acc_ref[...] + b_ref[...]).astype(o_ref.dtype)


def linear(x2d, w_t, bias, *, out_dtype=jnp.float32):
    """x2d: (N, K), w_t: (K, Dout) bf16, bias: (1, Dout) f32 -> (N, Dout).

    N must be a multiple of 8, K and Dout multiples of 128 (wrapper pads).
    Tile caps adapt to the detected VMEM capacity.
    """
    N, K = x2d.shape
    Dout = w_t.shape[-1]
    assert N % 8 == 0 and K % 128 == 0 and Dout % 128 == 0, (N, K, Dout)

    big_vmem = _vmem_capacity_bytes() >= 96 * 2**20      # v5e/v6e: 128 MiB
    max_tn, max_td, max_tk = (512, 1024, 1024) if big_vmem else (256, 512, 512)
    tn = _pick_tile(N, max_tn, 8)
    td = _pick_tile(Dout, max_td, 128)
    tk = _pick_tile(K, max_tk, 128)
    grid = (N // tn, Dout // td, K // tk)

    use_scratch = (out_dtype != jnp.float32)   # f32 output accumulates in-place
    scratch_shapes = [pltpu.VMEM((tn, td), jnp.float32)] if use_scratch else []

    return pl.pallas_call(
        _linear_kernel,
        out_shape=jax.ShapeDtypeStruct((N, Dout), out_dtype),
        grid_spec=pltpu.PrefetchScalarGridSpec(
            num_scalar_prefetch=0,
            grid=grid,
            in_specs=[
                pl.BlockSpec((tn, tk), lambda i, j, k: (i, k)),
                pl.BlockSpec((tk, td), lambda i, j, k: (k, j)),
                pl.BlockSpec((1, td), lambda i, j, k: (0, j)),
            ],
            out_specs=pl.BlockSpec((tn, td), lambda i, j, k: (i, j)),
            scratch_shapes=scratch_shapes,
        ),
        compiler_params=pltpu.CompilerParams(
            dimension_semantics=("parallel", "parallel", "arbitrary"),
            vmem_limit_bytes=_vmem_limit_bytes()),
    )(x2d, w_t, bias)


# -----------------------------------------------------------------------------
# LSTM recurrence kernel: one grid step per TIME CHUNK; only the recurrent
# matmul (h @ W_hh^T) is done here -- the input projection + bias arrive
# precomputed in gx (bf16).  h/c carried in vregs inside the chunk, scratch
# across chunks; h_T/c_T written only on the last chunk.  A ragged last chunk
# (T padded up to a chunk multiple) freezes the carry via a select.
#
# NOTE: correctness of the h/c carry requires the time axis to be the LAST
# (fastest-iterating, "arbitrary") grid axis with batch as the leading
# "parallel" axis; do not reorder the grid.
# -----------------------------------------------------------------------------
def _lstm_chunk_kernel(gx_ref, whh_ref, h0_ref, c0_ref,
                       y_ref, hT_ref, cT_ref, h_sc, c_sc,
                       *, chunk, t_valid, masked):
    t_step = pl.program_id(1)            # time-chunk index (axis 1, arbitrary)

    @pl.when(t_step == 0)
    def _():
        h_sc[...] = h0_ref[...]
        c_sc[...] = c0_ref[...]

    Hp = h_sc.shape[-1]

    def step(t, carry):
        h_prev, c_prev = carry
        # W_hh streamed from VMEM inside the dot (not hoisted into a value:
        # avoids spilling the whole register file across the unrolled loop).
        gates = gx_ref[t].astype(jnp.float32) + jnp.dot(
            h_prev.astype(jnp.bfloat16), whh_ref[...],
            preferred_element_type=jnp.float32)
        # gate slices are lane-tile aligned because Hp is a multiple of 128
        i_g = jax.nn.sigmoid(gates[:, 0 * Hp:1 * Hp])
        f_g = jax.nn.sigmoid(gates[:, 1 * Hp:2 * Hp])
        g_g = jnp.tanh(gates[:, 2 * Hp:3 * Hp])
        o_g = jax.nn.sigmoid(gates[:, 3 * Hp:4 * Hp])
        c_new = f_g * c_prev + i_g * g_g
        h_new = o_g * jnp.tanh(c_new)
        if masked:                         # ragged last chunk: freeze the carry
            valid = (t_step * chunk + t) < t_valid
            h_new = jnp.where(valid, h_new, h_prev)
            c_new = jnp.where(valid, c_new, c_prev)
        y_ref[t] = h_new                   # one lane-dense store per timestep
        return h_new, c_new

    h_fin, c_fin = jax.lax.fori_loop(
        0, chunk, step, (h_sc[...], c_sc[...]), unroll=True)

    # single carry writeback per chunk (store-light inner loop)
    h_sc[...] = h_fin
    c_sc[...] = c_fin

    @pl.when(t_step == pl.num_programs(1) - 1)
    def _():
        hT_ref[...] = h_fin
        cT_ref[...] = c_fin


def lstm_recurrence(gx_tbg, whh_t, h0, c0, *, chunk, t_valid):
    """Sequential LSTM recurrence given precomputed input projections.

    gx_tbg : (T_pad, Bp, 4*Hp)  time-major  x @ W_ih^T + (b_ih + b_hh)  (bf16)
    whh_t  : (Hp, 4*Hp)  bf16
    h0, c0 : (Bp, Hp)    f32
    returns y (T_pad, Bp, Hp), h_T (Bp, Hp), c_T (Bp, Hp)   (all f32)
    """
    T_pad, Bp, G = gx_tbg.shape
    Hp = h0.shape[-1]
    assert G == 4 * Hp and Bp % 8 == 0 and Hp % 128 == 0
    assert T_pad % chunk == 0

    # split the batch across TensorCores only when the chip actually has >1 TC
    n_tc = _num_tensorcores()
    bB = Bp // 2 if (n_tc >= 2 and Bp % 16 == 0) else Bp
    grid = (Bp // bB, T_pad // chunk)
    masked = (T_pad != t_valid)

    kernel = functools.partial(_lstm_chunk_kernel,
                               chunk=chunk, t_valid=t_valid, masked=masked)

    return pl.pallas_call(
        kernel,
        out_shape=(
            jax.ShapeDtypeStruct((T_pad, Bp, Hp), jnp.float32),
            jax.ShapeDtypeStruct((Bp, Hp), jnp.float32),
            jax.ShapeDtypeStruct((Bp, Hp), jnp.float32),
        ),
        grid_spec=pltpu.PrefetchScalarGridSpec(
            num_scalar_prefetch=0,
            grid=grid,
            in_specs=[
                pl.BlockSpec((chunk, bB, 4 * Hp), lambda b, s: (s, b, 0)),  # gx
                pl.BlockSpec((Hp, 4 * Hp), lambda b, s: (0, 0)),            # W_hh^T
                pl.BlockSpec((bB, Hp), lambda b, s: (b, 0)),                # h0
                pl.BlockSpec((bB, Hp), lambda b, s: (b, 0)),                # c0
            ],
            out_specs=[
                pl.BlockSpec((chunk, bB, Hp), lambda b, s: (s, b, 0)),      # y
                pl.BlockSpec((bB, Hp), lambda b, s: (b, 0)),                # h_T
                pl.BlockSpec((bB, Hp), lambda b, s: (b, 0)),                # c_T
            ],
            scratch_shapes=[
                pltpu.VMEM((bB, Hp), jnp.float32),   # h carry across chunks
                pltpu.VMEM((bB, Hp), jnp.float32),   # c carry across chunks
            ],
        ),
        compiler_params=pltpu.CompilerParams(
            dimension_semantics=("parallel", "arbitrary"),
            vmem_limit_bytes=_vmem_limit_bytes()),
    )(gx_tbg, whh_t, h0, c0)


# -----------------------------------------------------------------------------
# Parameter construction (deterministic, mirroring nn.LSTM / nn.Linear init)
# -----------------------------------------------------------------------------
def init_params(key, vocab_size, hidden_size, num_layers):
    H = hidden_size
    k = 1.0 / jnp.sqrt(jnp.float32(H))   # PyTorch LSTM default init scale
    params = {"lstm": []}
    for layer in range(num_layers):
        d_in = vocab_size if layer == 0 else H
        key, k1, k2, k3, k4 = jax.random.split(key, 5)
        w_ih = jax.random.uniform(k1, (4 * H, d_in), jnp.float32, -k, k)
        w_hh = jax.random.uniform(k2, (4 * H, H), jnp.float32, -k, k)
        b_ih = jax.random.uniform(k3, (4 * H,), jnp.float32, -k, k)
        b_hh = jax.random.uniform(k4, (4 * H,), jnp.float32, -k, k)
        # init_weights(): zero the forget-gate bias slice [H:2H] of each bias.
        b_ih = b_ih.at[H:2 * H].set(0.0)
        b_hh = b_hh.at[H:2 * H].set(0.0)
        params["lstm"].append({
            "wih_t": w_ih.T,                       # (d_in, 4H)
            "whh_t": w_hh.T,                       # (H, 4H)
            "bias": (b_ih + b_hh)[None, :],        # (1, 4H)
        })
    key, k5 = jax.random.split(key)
    out_dim = vocab_size + 4 * hidden_size
    # init_weights(): linear weight ~ U(-0.1, 0.1), bias = 0
    lin_w = jax.random.uniform(k5, (out_dim, H), jnp.float32, -0.1, 0.1)
    params["linear"] = {"w_t": lin_w.T, "b": jnp.zeros((1, out_dim), jnp.float32)}
    return params


# -----------------------------------------------------------------------------
# RNNLM forward
# -----------------------------------------------------------------------------
def rnnlm_forward(params, x_btv, initial_state, *, time_chunk=None):
    """x_btv: (B, T, vocab) batch-first, like the PyTorch module.

    Returns (out, (h_n, c_n)):
      out : (B, T, vocab + 4*hidden)
      h_n : (num_layers, B, hidden)
      c_n : (num_layers, B, hidden)
    """
    h0_all, c0_all = initial_state         # (L, B, H) each
    B, T, V = x_btv.shape
    H = h0_all.shape[-1]

    # Pad to TPU-friendly shapes: batch -> multiple of 8 (f32 sublanes),
    # features/hidden -> multiple of 128 (lanes), time -> multiple of the
    # recurrence chunk.  Zero padding is exact through the math (padded gate
    # columns stay identically zero in bf16 too); padded rows/cols/timesteps
    # are dropped at the end (h_T/c_T freeze the carry at t = T).
    Bp = _round_up(B, 8)
    Hp = _round_up(H, 128)
    Vp = _round_up(V, 128)
    Dout = V + 4 * H
    Dout_p = _round_up(Dout, 128)

    TT = time_chunk if time_chunk is not None else _auto_time_chunk(Hp, T)
    TT = max(1, min(TT, T))
    T_pad = _round_up(T, TT)

    # Wrapper-side transposes live on the two narrowest tensors (x: Vp wide,
    # y: Hp wide) rather than gx (4*Hp) or the vocab-sized head output.
    x = jnp.pad(x_btv, ((0, Bp - B), (0, T_pad - T), (0, Vp - V)))
    x_tbd = jnp.transpose(x, (1, 0, 2))    # time-major (T_pad, Bp, Vp)

    h_finals, c_finals = [], []
    for layer, p in enumerate(params["lstm"]):
        d_in = V if layer == 0 else H
        d_in_p = Vp if layer == 0 else Hp

        wih_t = _pad_gate_cols(p["wih_t"], H, Hp)              # (d_in, 4Hp)
        wih_t = jnp.pad(wih_t, ((0, d_in_p - d_in), (0, 0))).astype(jnp.bfloat16)
        whh_t = _pad_gate_cols(p["whh_t"], H, Hp)              # (H, 4Hp)
        whh_t = jnp.pad(whh_t, ((0, Hp - H), (0, 0))).astype(jnp.bfloat16)
        bias = _pad_gate_cols(p["bias"], H, Hp)                # (1, 4Hp) f32

        h0 = jnp.pad(h0_all[layer], ((0, Bp - B), (0, Hp - H)))
        c0 = jnp.pad(c0_all[layer], ((0, Bp - B), (0, Hp - H)))

        # Phase 1: input projection hoisted out of the recurrence -- one large
        # bf16 MXU matmul over all timesteps, bias folded in, gx stored bf16.
        gx = linear(x_tbd.reshape(T_pad * Bp, d_in_p), wih_t, bias,
                    out_dtype=jnp.bfloat16)
        gx = gx.reshape(T_pad, Bp, 4 * Hp)

        # Phase 2: the serial recurrence (W_hh only), chunked over time.
        y, h_T, c_T = lstm_recurrence(gx, whh_t, h0, c0, chunk=TT, t_valid=T)
        h_finals.append(h_T[:B, :H])
        c_finals.append(c_T[:B, :H])
        # inter-layer dropout (p=0.5) treated as identity (eval mode)
        x_tbd = y                          # (T_pad, Bp, Hp)

    # output dropout treated as identity (eval mode)
    lin_w = jnp.pad(params["linear"]["w_t"],
                    ((0, Hp - H), (0, Dout_p - Dout))).astype(jnp.bfloat16)
    lin_b = jnp.pad(params["linear"]["b"], ((0, 0), (0, Dout_p - Dout)))

    # Transpose the narrow hidden states to batch-major BEFORE the vocab-sized
    # head so the largest tensor is produced batch-major directly (no separate
    # HBM transpose pass on the head output).
    y_btd = jnp.transpose(x_tbd, (1, 0, 2))[:, :T, :]          # (Bp, T, Hp)
    out2d = linear(y_btd.reshape(Bp * T, Hp), lin_w, lin_b,
                   out_dtype=jnp.float32)                      # (Bp*T, Dout_p)
    out = out2d.reshape(Bp, T, Dout_p)[:B, :, :Dout]           # (B, T, Dout)

    return out, (jnp.stack(h_finals, axis=0), jnp.stack(c_finals, axis=0))


# -----------------------------------------------------------------------------
# Pure-JAX reference for correctness checking
# -----------------------------------------------------------------------------
def rnnlm_reference(params, x_btv, initial_state):
    h0_all, c0_all = initial_state
    B, T, _ = x_btv.shape
    H = h0_all.shape[-1]
    x = x_btv
    h_fin, c_fin = [], []
    for layer, p in enumerate(params["lstm"]):
        h = h0_all[layer]
        c = c0_all[layer]
        ys = []
        for t in range(T):
            g = x[:, t, :] @ p["wih_t"] + h @ p["whh_t"] + p["bias"]
            i = jax.nn.sigmoid(g[:, 0:H])
            f = jax.nn.sigmoid(g[:, H:2 * H])
            gg = jnp.tanh(g[:, 2 * H:3 * H])
            o = jax.nn.sigmoid(g[:, 3 * H:4 * H])
            c = f * c + i * gg
            h = o * jnp.tanh(c)
            ys.append(h)
        x = jnp.stack(ys, axis=1)
        h_fin.append(h)
        c_fin.append(c)
    out = x @ params["linear"]["w_t"] + params["linear"]["b"]
    return out, (jnp.stack(h_fin, 0), jnp.stack(c_fin, 0))


if __name__ == "__main__":
    vocab_size = 16
    hidden_size = 32
    num_layers = 2
    batch_size = 2
    seq_len = 8

    key = jax.random.PRNGKey(0)
    key, pkey, xkey = jax.random.split(key, 3)

    params = init_params(pkey, vocab_size, hidden_size, num_layers)
    x = jax.random.normal(xkey, (batch_size, seq_len, vocab_size), jnp.float32)
    initial_state = (
        jnp.zeros((num_layers, batch_size, hidden_size), jnp.float32),
        jnp.zeros((num_layers, batch_size, hidden_size), jnp.float32),
    )

    fwd = jax.jit(rnnlm_forward, static_argnames=("time_chunk",))

    out, (h_n, c_n) = fwd(params, x, initial_state)
    out = jax.block_until_ready(out)
    h_n = jax.block_until_ready(h_n)
    c_n = jax.block_until_ready(c_n)

    assert out.shape == (batch_size, seq_len, vocab_size + 4 * hidden_size)
    assert h_n.shape == (num_layers, batch_size, hidden_size)
    assert c_n.shape == (num_layers, batch_size, hidden_size)

    # correctness vs. pure-JAX f32 reference (tolerance relaxed for bf16 MXU
    # operands + bf16 gx intermediate)
    ref_out, (ref_h, ref_c) = rnnlm_reference(params, x, initial_state)
    tol = dict(atol=3e-2, rtol=3e-2)
    assert jnp.allclose(out, ref_out, **tol)
    assert jnp.allclose(h_n, ref_h, **tol)
    assert jnp.allclose(c_n, ref_c, **tol)

    # also exercise the chunked-time path with a ragged last chunk
    # (T=8, chunk=3 -> T padded to 9, carry frozen past t=7)
    out2, (h_n2, c_n2) = fwd(params, x, initial_state, time_chunk=3)
    out2 = jax.block_until_ready(out2)
    h_n2 = jax.block_until_ready(h_n2)
    c_n2 = jax.block_until_ready(c_n2)
    assert jnp.allclose(out2, ref_out, **tol)
    assert jnp.allclose(h_n2, ref_h, **tol)
    assert jnp.allclose(c_n2, ref_c, **tol)

    print("KERNEL_OK")
</pallas_src>

<mosaic_0001>
module attributes {stable_mosaic.version = 11 : i64} {
  func.func @_linear_kernel(%arg0: i32, %arg1: i32, %arg2: i32, %arg3: memref<64x128xf32, #tpu.memory_space<vmem>>, %arg4: memref<128x512xbf16, #tpu.memory_space<vmem>>, %arg5: memref<1x512xf32, #tpu.memory_space<vmem>>, %arg6: memref<64x512xbf16, #tpu.memory_space<vmem>>, %arg7: memref<64x512xf32, #tpu.memory_space<vmem>>) attributes {dimension_semantics = [#tpu.dimension_semantics<parallel>, #tpu.dimension_semantics<parallel>, #tpu.dimension_semantics<arbitrary>], iteration_bounds = array<i64: 1, 1, 1>, scalar_prefetch = 0 : i64, scratch_operands = 1 : i64, tpu.core_type = #tpu.core_type<tc>, window_params = [{transform_indices = @transform_0, window_bounds = array<i64: 64, 128>}, {transform_indices = @transform_1, window_bounds = array<i64: 128, 512>}, {transform_indices = @transform_2, window_bounds = array<i64: 1, 512>}, {transform_indices = @transform_3, window_bounds = array<i64: 64, 512>}]} {
    %c0_i32 = arith.constant 0 : i32
    %0 = arith.cmpi eq, %arg2, %c0_i32 : i32
    %1 = arith.extui %0 : i1 to i32
    %c0_i32_0 = arith.constant 0 : i32
    %2 = arith.cmpi ne, %1, %c0_i32_0 : i32
    scf.if %2 {
      %cst_10 = arith.constant 0.000000e+00 : f32
      %13 = vector.broadcast %cst_10 : f32 to vector<64x512xf32>
      %c0_11 = arith.constant 0 : index
      %c0_12 = arith.constant 0 : index
      %14 = vector.load %arg7[%c0_11, %c0_12] : memref<64x512xf32, #tpu.memory_space<vmem>>, vector<64x512xf32>
      tpu.vector_store %arg7[%c0_11, %c0_12], %13 {strides = array<i32>} : memref<64x512xf32, #tpu.memory_space<vmem>>, vector<64x512xf32>,
    } else {
    }
    %c0 = arith.constant 0 : index
    %c0_1 = arith.constant 0 : index
    %3 = vector.load %arg7[%c0, %c0_1] : memref<64x512xf32, #tpu.memory_space<vmem>>, vector<64x512xf32>
    %c0_2 = arith.constant 0 : index
    %c0_3 = arith.constant 0 : index
    %4 = vector.load %arg3[%c0_2, %c0_3] : memref<64x128xf32, #tpu.memory_space<vmem>>, vector<64x128xf32>
    %5 = arith.truncf %4 : vector<64x128xf32> to vector<64x128xbf16>
    %c0_4 = arith.constant 0 : index
    %c0_5 = arith.constant 0 : index
    %6 = vector.load %arg4[%c0_4, %c0_5] : memref<128x512xbf16, #tpu.memory_space<vmem>>, vector<128x512xbf16>
    %cst = arith.constant dense<0.000000e+00> : vector<64x512xf32>
    %7 = tpu.matmul %5, %6, %cst {dimension_numbers = #tpu.dot_dimension_numbers<[1], [0], [0], [1], [0, 0, 1, 1], [], []>} : vector<64x128xbf16>, vector<128x512xbf16>, vector<64x512xf32> -> vector<64x512xf32>
    %8 = arith.addf %3, %7 : vector<64x512xf32>
    %c0_6 = arith.constant 0 : index
    %c0_7 = arith.constant 0 : index
    %9 = vector.load %arg7[%c0_6, %c0_7] : memref<64x512xf32, #tpu.memory_space<vmem>>, vector<64x512xf32>
    tpu.vector_store %arg7[%c0_6, %c0_7], %8 {strides = array<i32>} : memref<64x512xf32, #tpu.memory_space<vmem>>, vector<64x512xf32>,
    %c0_i32_8 = arith.constant 0 : i32
    %10 = arith.cmpi eq, %arg2, %c0_i32_8 : i32
    %11 = arith.extui %10 : i1 to i32
    %c0_i32_9 = arith.constant 0 : i32
    %12 = arith.cmpi ne, %11, %c0_i32_9 : i32
    scf.if %12 {
      %c0_10 = arith.constant 0 : index
      %c0_11 = arith.constant 0 : index
      %13 = vector.load %arg7[%c0_10, %c0_11] : memref<64x512xf32, #tpu.memory_space<vmem>>, vector<64x512xf32>
      %c0_12 = arith.constant 0 : index
      %c0_13 = arith.constant 0 : index
      %14 = vector.load %arg5[%c0_12, %c0_13] : memref<1x512xf32, #tpu.memory_space<vmem>>, vector<1x512xf32>
      %15 = vector.broadcast %14 : vector<1x512xf32> to vector<64x512xf32>
      %16 = arith.addf %13, %15 : vector<64x512xf32>
      %17 = arith.truncf %16 : vector<64x512xf32> to vector<64x512xbf16>
      %c0_14 = arith.constant 0 : index
      %c0_15 = arith.constant 0 : index
      %18 = vector.load %arg6[%c0_14, %c0_15] : memref<64x512xbf16, #tpu.memory_space<vmem>>, vector<64x512xbf16>
      tpu.vector_store %arg6[%c0_14, %c0_15], %17 {strides = array<i32>} : memref<64x512xbf16, #tpu.memory_space<vmem>>, vector<64x512xbf16>,
    } else {
    }
    return
  }
  func.func @transform_0(%arg0: i32, %arg1: i32, %arg2: i32) -> (i32, i32) {
    %c0_i32 = arith.constant 0 : i32
    return %arg0, %arg2 : i32, i32
  }
  func.func @transform_1(%arg0: i32, %arg1: i32, %arg2: i32) -> (i32, i32) {
    %c0_i32 = arith.constant 0 : i32
    return %arg2, %arg1 : i32, i32
  }
  func.func @transform_2(%arg0: i32, %arg1: i32, %arg2: i32) -> (i32, i32) {
    %c0_i32 = arith.constant 0 : i32
    %c0_i32_0 = arith.constant 0 : i32
    return %c0_i32, %arg1 : i32, i32
  }
  func.func @transform_3(%arg0: i32, %arg1: i32, %arg2: i32) -> (i32, i32) {
    %c0_i32 = arith.constant 0 : i32
    return %arg0, %arg1 : i32, i32
  }
}

module attributes {stable_mosaic.version = 11 : i64} {
  func.func @_linear_kernel(%arg0: i32, %arg1: i32, %arg2: i32, %arg3: memref<64x128xf32, #tpu.memory_space<vmem>>, %arg4: memref<128x256xbf16, #tpu.memory_space<vmem>>, %arg5: memref<1x256xf32, #tpu.memory_space<vmem>>, %arg6: memref<64x256xf32, #tpu.memory_space<vmem>>) attributes {dimension_semantics = [#tpu.dimension_semantics<parallel>, #tpu.dimension_semantics<parallel>, #tpu.dimension_semantics<arbitrary>], iteration_bounds = array<i64: 1, 1, 1>, scalar_prefetch = 0 : i64, scratch_operands = 0 : i64, tpu.core_type = #tpu.core_type<tc>, window_params = [{transform_indices = @transform_0, window_bounds = array<i64: 64, 128>}, {transform_indices = @transform_1, window_bounds = array<i64: 128, 256>}, {transform_indices = @transform_2, window_bounds = array<i64: 1, 256>}, {transform_indices = @transform_3, window_bounds = array<i64: 64, 256>}]} {
    %c0_i32 = arith.constant 0 : i32
    %0 = arith.cmpi eq, %arg2, %c0_i32 : i32
    %1 = arith.extui %0 : i1 to i32
    %c0_i32_0 = arith.constant 0 : i32
    %2 = arith.cmpi ne, %1, %c0_i32_0 : i32
    scf.if %2 {
      %cst_10 = arith.constant 0.000000e+00 : f32
      %13 = vector.broadcast %cst_10 : f32 to vector<64x256xf32>
      %c0_11 = arith.constant 0 : index
      %c0_12 = arith.constant 0 : index
      %14 = vector.load %arg6[%c0_11, %c0_12] : memref<64x256xf32, #tpu.memory_space<vmem>>, vector<64x256xf32>
      tpu.vector_store %arg6[%c0_11, %c0_12], %13 {strides = array<i32>} : memref<64x256xf32, #tpu.memory_space<vmem>>, vector<64x256xf32>,
    } else {
    }
    %c0 = arith.constant 0 : index
    %c0_1 = arith.constant 0 : index
    %3 = vector.load %arg6[%c0, %c0_1] : memref<64x256xf32, #tpu.memory_space<vmem>>, vector<64x256xf32>
    %c0_2 = arith.constant 0 : index
    %c0_3 = arith.constant 0 : index
    %4 = vector.load %arg3[%c0_2, %c0_3] : memref<64x128xf32, #tpu.memory_space<vmem>>, vector<64x128xf32>
    %5 = arith.truncf %4 : vector<64x128xf32> to vector<64x128xbf16>
    %c0_4 = arith.constant 0 : index
    %c0_5 = arith.constant 0 : index
    %6 = vector.load %arg4[%c0_4, %c0_5] : memref<128x256xbf16, #tpu.memory_space<vmem>>, vector<128x256xbf16>
    %cst = arith.constant dense<0.000000e+00> : vector<64x256xf32>
    %7 = tpu.matmul %5, %6, %cst {dimension_numbers = #tpu.dot_dimension_numbers<[1], [0], [0], [1], [0, 0, 1, 1], [], []>} : vector<64x128xbf16>, vector<128x256xbf16>, vector<64x256xf32> -> vector<64x256xf32>
    %8 = arith.addf %3, %7 : vector<64x256xf32>
    %c0_6 = arith.constant 0 : index
    %c0_7 = arith.constant 0 : index
    %9 = vector.load %arg6[%c0_6, %c0_7] : memref<64x256xf32, #tpu.memory_space<vmem>>, vector<64x256xf32>
    tpu.vector_store %arg6[%c0_6, %c0_7], %8 {strides = array<i32>} : memref<64x256xf32, #tpu.memory_space<vmem>>, vector<64x256xf32>,
    %c0_i32_8 = arith.constant 0 : i32
    %10 = arith.cmpi eq, %arg2, %c0_i32_8 : i32
    %11 = arith.extui %10 : i1 to i32
    %c0_i32_9 = arith.constant 0 : i32
    %12 = arith.cmpi ne, %11, %c0_i32_9 : i32
    scf.if %12 {
      %c0_10 = arith.constant 0 : index
      %c0_11 = arith.constant 0 : index
      %13 = vector.load %arg6[%c0_10, %c0_11] : memref<64x256xf32, #tpu.memory_space<vmem>>, vector<64x256xf32>
      %c0_12 = arith.constant 0 : index
      %c0_13 = arith.constant 0 : index
      %14 = vector.load %arg5[%c0_12, %c0_13] : memref<1x256xf32, #tpu.memory_space<vmem>>, vector<1x256xf32>
      %15 = vector.broadcast %14 : vector<1x256xf32> to vector<64x256xf32>
      %16 = arith.addf %13, %15 : vector<64x256xf32>
      %c0_14 = arith.constant 0 : index
      %c0_15 = arith.constant 0 : index
      %17 = vector.load %arg6[%c0_14, %c0_15] : memref<64x256xf32, #tpu.memory_space<vmem>>, vector<64x256xf32>
      tpu.vector_store %arg6[%c0_14, %c0_15], %16 {strides = array<i32>} : memref<64x256xf32, #tpu.memory_space<vmem>>, vector<64x256xf32>,
    } else {
    }
    return
  }
  func.func @transform_0(%arg0: i32, %arg1: i32, %arg2: i32) -> (i32, i32) {
    %c0_i32 = arith.constant 0 : i32
    return %arg0, %arg2 : i32, i32
  }
  func.func @transform_1(%arg0: i32, %arg1: i32, %arg2: i32) -> (i32, i32) {
    %c0_i32 = arith.constant 0 : i32
    return %arg2, %arg1 : i32, i32
  }
  func.func @transform_2(%arg0: i32, %arg1: i32, %arg2: i32) -> (i32, i32) {
    %c0_i32 = arith.constant 0 : i32
    %c0_i32_0 = arith.constant 0 : i32
    return %c0_i32, %arg1 : i32, i32
  }
  func.func @transform_3(%arg0: i32, %arg1: i32, %arg2: i32) -> (i32, i32) {
    %c0_i32 = arith.constant 0 : i32
    return %arg0, %arg1 : i32, i32
  }
}

module attributes {stable_mosaic.version = 11 : i64} {
  func.func @_lstm_chunk_kernel(%arg0: i32, %arg1: i32, %arg2: memref<8x8x512xbf16, #tpu.memory_space<vmem>>, %arg3: memref<128x512xbf16, #tpu.memory_space<vmem>>, %arg4: memref<8x128xf32, #tpu.memory_space<vmem>>, %arg5: memref<8x128xf32, #tpu.memory_space<vmem>>, %arg6: memref<8x8x128xf32, #tpu.memory_space<vmem>>, %arg7: memref<8x128xf32, #tpu.memory_space<vmem>>, %arg8: memref<8x128xf32, #tpu.memory_space<vmem>>, %arg9: memref<8x128xf32, #tpu.memory_space<vmem>>, %arg10: memref<8x128xf32, #tpu.memory_space<vmem>>) attributes {dimension_semantics = [#tpu.dimension_semantics<parallel>, #tpu.dimension_semantics<arbitrary>], iteration_bounds = array<i64: 1, 1>, scalar_prefetch = 0 : i64, scratch_operands = 2 : i64, tpu.core_type = #tpu.core_type<tc>, window_params = [{transform_indices = @transform_0, window_bounds = array<i64: 8, 8, 512>}, {pipeline_mode = #tpu.pipeline_mode<synchronous>, transform_indices = @transform_1, window_bounds = array<i64: 128, 512>}, {transform_indices = @transform_2, window_bounds = array<i64: 8, 128>}, {transform_indices = @transform_3, window_bounds = array<i64: 8, 128>}, {transform_indices = @transform_4, window_bounds = array<i64: 8, 8, 128>}, {transform_indices = @transform_5, window_bounds = array<i64: 8, 128>}, {transform_indices = @transform_6, window_bounds = array<i64: 8, 128>}]} {
    %c0_i32 = arith.constant 0 : i32
    %0 = arith.cmpi eq, %arg1, %c0_i32 : i32
    %1 = arith.extui %0 : i1 to i32
    %c0_i32_0 = arith.constant 0 : i32
    %2 = arith.cmpi ne, %1, %c0_i32_0 : i32
    scf.if %2 {
      %c0_90 = arith.constant 0 : index
      %c0_91 = arith.constant 0 : index
      %306 = vector.load %arg4[%c0_90, %c0_91] : memref<8x128xf32, #tpu.memory_space<vmem>>, vector<8x128xf32>
      %c0_92 = arith.constant 0 : index
      %c0_93 = arith.constant 0 : index
      %307 = vector.load %arg9[%c0_92, %c0_93] : memref<8x128xf32, #tpu.memory_space<vmem>>, vector<8x128xf32>
      tpu.vector_store %arg9[%c0_92, %c0_93], %306 {strides = array<i32>} : memref<8x128xf32, #tpu.memory_space<vmem>>, vector<8x128xf32>,
      %c0_94 = arith.constant 0 : index
      %c0_95 = arith.constant 0 : index
      %308 = vector.load %arg5[%c0_94, %c0_95] : memref<8x128xf32, #tpu.memory_space<vmem>>, vector<8x128xf32>
      %c0_96 = arith.constant 0 : index
      %c0_97 = arith.constant 0 : index
      %309 = vector.load %arg10[%c0_96, %c0_97] : memref<8x128xf32, #tpu.memory_space<vmem>>, vector<8x128xf32>
      tpu.vector_store %arg10[%c0_96, %c0_97], %308 {strides = array<i32>} : memref<8x128xf32, #tpu.memory_space<vmem>>, vector<8x128xf32>,
    } else {
    }
    %c0 = arith.constant 0 : index
    %c0_1 = arith.constant 0 : index
    %3 = vector.load %arg9[%c0, %c0_1] : memref<8x128xf32, #tpu.memory_space<vmem>>, vector<8x128xf32>
    %c0_2 = arith.constant 0 : index
    %c0_3 = arith.constant 0 : index
    %4 = vector.load %arg10[%c0_2, %c0_3] : memref<8x128xf32, #tpu.memory_space<vmem>>, vector<8x128xf32>
    %c0_i32_4 = arith.constant 0 : i32
    %5 = arith.index_cast %c0_i32_4 : i32 to index
    %c0_5 = arith.constant 0 : index
    %c0_6 = arith.constant 0 : index
    %6 = vector.load %arg2[%5, %c0_5, %c0_6] : memref<8x8x512xbf16, #tpu.memory_space<vmem>>, vector<1x8x512xbf16>
    %7 = vector.shape_cast %6 : vector<1x8x512xbf16> to vector<8x512xbf16>
    %8 = arith.extf %7 : vector<8x512xbf16> to vector<8x512xf32>
    %9 = arith.truncf %3 : vector<8x128xf32> to vector<8x128xbf16>
    %c0_7 = arith.constant 0 : index
    %c0_8 = arith.constant 0 : index
    %10 = vector.load %arg3[%c0_7, %c0_8] : memref<128x512xbf16, #tpu.memory_space<vmem>>, vector<128x512xbf16>
    %cst = arith.constant dense<0.000000e+00> : vector<8x512xf32>
    %11 = tpu.matmul %9, %10, %cst {dimension_numbers = #tpu.dot_dimension_numbers<[1], [0], [0], [1], [0, 0, 1, 1], [], []>} : vector<8x128xbf16>, vector<128x512xbf16>, vector<8x512xf32> -> vector<8x512xf32>
    %12 = arith.addf %8, %11 : vector<8x512xf32>
    %13 = vector.extract_strided_slice %12 {offsets = [0, 0], sizes = [8, 128], strides = [1, 1]} : vector<8x512xf32> to vector<8x128xf32>
    %14 = arith.negf %13 : vector<8x128xf32>
    %15 = math.exp %14 : vector<8x128xf32>
    %cst_9 = arith.constant 1.000000e+00 : f32
    %16 = vector.broadcast %cst_9 : f32 to vector<8x128xf32>
    %17 = arith.addf %16, %15 : vector<8x128xf32>
    %18 = arith.divf %16, %17 : vector<8x128xf32>
    %19 = vector.extract_strided_slice %12 {offsets = [0, 128], sizes = [8, 128], strides = [1, 1]} : vector<8x512xf32> to vector<8x128xf32>
    %20 = arith.negf %19 : vector<8x128xf32>
    %21 = math.exp %20 : vector<8x128xf32>
    %cst_10 = arith.constant 1.000000e+00 : f32
    %22 = vector.broadcast %cst_10 : f32 to vector<8x128xf32>
    %23 = arith.addf %22, %21 : vector<8x128xf32>
    %24 = arith.divf %22, %23 : vector<8x128xf32>
    %25 = vector.extract_strided_slice %12 {offsets = [0, 256], sizes = [8, 128], strides = [1, 1]} : vector<8x512xf32> to vector<8x128xf32>
    %26 = math.tanh %25 : vector<8x128xf32>
    %27 = vector.extract_strided_slice %12 {offsets = [0, 384], sizes = [8, 128], strides = [1, 1]} : vector<8x512xf32> to vector<8x128xf32>
    %28 = arith.negf %27 : vector<8x128xf32>
    %29 = math.exp %28 : vector<8x128xf32>
    %cst_11 = arith.constant 1.000000e+00 : f32
    %30 = vector.broadcast %cst_11 : f32 to vector<8x128xf32>
    %31 = arith.addf %30, %29 : vector<8x128xf32>
    %32 = arith.divf %30, %31 : vector<8x128xf32>
    %33 = arith.mulf %24, %4 : vector<8x128xf32>
    %34 = arith.mulf %18, %26 : vector<8x128xf32>
    %35 = arith.addf %33, %34 : vector<8x128xf32>
    %36 = math.tanh %35 : vector<8x128xf32>
    %37 = arith.mulf %32, %36 : vector<8x128xf32>
    %38 = arith.index_cast %c0_i32_4 : i32 to index
    %c0_12 = arith.constant 0 : index
    %c0_13 = arith.constant 0 : index
    %39 = vector.load %arg6[%38, %c0_12, %c0_13] : memref<8x8x128xf32, #tpu.memory_space<vmem>>, vector<1x8x128xf32>
    %40 = vector.shape_cast %39 : vector<1x8x128xf32> to vector<8x128xf32>
    %41 = vector.shape_cast %37 : vector<8x128xf32> to vector<1x8x128xf32>
    tpu.vector_store %arg6[%38, %c0_12, %c0_13], %41 {strides = array<i32>} : memref<8x8x128xf32, #tpu.memory_space<vmem>>, vector<1x8x128xf32>,
    %c1_i32 = arith.constant 1 : i32
    %42 = arith.index_cast %c1_i32 : i32 to index
    %c0_14 = arith.constant 0 : index
    %c0_15 = arith.constant 0 : index
    %43 = vector.load %arg2[%42, %c0_14, %c0_15] : memref<8x8x512xbf16, #tpu.memory_space<vmem>>, vector<1x8x512xbf16>
    %44 = vector.shape_cast %43 : vector<1x8x512xbf16> to vector<8x512xbf16>
    %45 = arith.extf %44 : vector<8x512xbf16> to vector<8x512xf32>
    %46 = arith.truncf %37 : vector<8x128xf32> to vector<8x128xbf16>
    %c0_16 = arith.constant 0 : index
    %c0_17 = arith.constant 0 : index
    %47 = vector.load %arg3[%c0_16, %c0_17] : memref<128x512xbf16, #tpu.memory_space<vmem>>, vector<128x512xbf16>
    %cst_18 = arith.constant dense<0.000000e+00> : vector<8x512xf32>
    %48 = tpu.matmul %46, %47, %cst_18 {dimension_numbers = #tpu.dot_dimension_numbers<[1], [0], [0], [1], [0, 0, 1, 1], [], []>} : vector<8x128xbf16>, vector<128x512xbf16>, vector<8x512xf32> -> vector<8x512xf32>
    %49 = arith.addf %45, %48 : vector<8x512xf32>
    %50 = vector.extract_strided_slice %49 {offsets = [0, 0], sizes = [8, 128], strides = [1, 1]} : vector<8x512xf32> to vector<8x128xf32>
    %51 = arith.negf %50 : vector<8x128xf32>
    %52 = math.exp %51 : vector<8x128xf32>
    %cst_19 = arith.constant 1.000000e+00 : f32
    %53 = vector.broadcast %cst_19 : f32 to vector<8x128xf32>
    %54 = arith.addf %53, %52 : vector<8x128xf32>
    %55 = arith.divf %53, %54 : vector<8x128xf32>
    %56 = vector.extract_strided_slice %49 {offsets = [0, 128], sizes = [8, 128], strides = [1, 1]} : vector<8x512xf32> to vector<8x128xf32>
    %57 = arith.negf %56 : vector<8x128xf32>
    %58 = math.exp %57 : vector<8x128xf32>
    %cst_20 = arith.constant 1.000000e+00 : f32
    %59 = vector.broadcast %cst_20 : f32 to vector<8x128xf32>
    %60 = arith.addf %59, %58 : vector<8x128xf32>
    %61 = arith.divf %59, %60 : vector<8x128xf32>
    %62 = vector.extract_strided_slice %49 {offsets = [0, 256], sizes = [8, 128], strides = [1, 1]} : vector<8x512xf32> to vector<8x128xf32>
    %63 = math.tanh %62 : vector<8x128xf32>
    %64 = vector.extract_strided_slice %49 {offsets = [0, 384], sizes = [8, 128], strides = [1, 1]} : vector<8x512xf32> to vector<8x128xf32>
    %65 = arith.negf %64 : vector<8x128xf32>
    %66 = math.exp %65 : vector<8x128xf32>
    %cst_21 = arith.constant 1.000000e+00 : f32
    %67 = vector.broadcast %cst_21 : f32 to vector<8x128xf32>
    %68 = arith.addf %67, %66 : vector<8x128xf32>
    %69 = arith.divf %67, %68 : vector<8x128xf32>
    %70 = arith.mulf %61, %35 : vector<8x128xf32>
    %71 = arith.mulf %55, %63 : vector<8x128xf32>
    %72 = arith.addf %70, %71 : vector<8x128xf32>
    %73 = math.tanh %72 : vector<8x128xf32>
    %74 = arith.mulf %69, %73 : vector<8x128xf32>
    %75 = arith.index_cast %c1_i32 : i32 to index
    %c0_22 = arith.constant 0 : index
    %c0_23 = arith.constant 0 : index
    %76 = vector.load %arg6[%75, %c0_22, %c0_23] : memref<8x8x128xf32, #tpu.memory_space<vmem>>, vector<1x8x128xf32>
    %77 = vector.shape_cast %76 : vector<1x8x128xf32> to vector<8x128xf32>
    %78 = vector.shape_cast %74 : vector<8x128xf32> to vector<1x8x128xf32>
    tpu.vector_store %arg6[%75, %c0_22, %c0_23], %78 {strides = array<i32>} : memref<8x8x128xf32, #tpu.memory_space<vmem>>, vector<1x8x128xf32>,
    %c2_i32 = arith.constant 2 : i32
    %79 = arith.index_cast %c2_i32 : i32 to index
    %c0_24 = arith.constant 0 : index
    %c0_25 = arith.constant 0 : index
    %80 = vector.load %arg2[%79, %c0_24, %c0_25] : memref<8x8x512xbf16, #tpu.memory_space<vmem>>, vector<1x8x512xbf16>
    %81 = vector.shape_cast %80 : vector<1x8x512xbf16> to vector<8x512xbf16>
    %82 = arith.extf %81 : vector<8x512xbf16> to vector<8x512xf32>
    %83 = arith.truncf %74 : vector<8x128xf32> to vector<8x128xbf16>
    %c0_26 = arith.constant 0 : index
    %c0_27 = arith.constant 0 : index
    %84 = vector.load %arg3[%c0_26, %c0_27] : memref<128x512xbf16, #tpu.memory_space<vmem>>, vector<128x512xbf16>
    %cst_28 = arith.constant dense<0.000000e+00> : vector<8x512xf32>
    %85 = tpu.matmul %83, %84, %cst_28 {dimension_numbers = #tpu.dot_dimension_numbers<[1], [0], [0], [1], [0, 0, 1, 1], [], []>} : vector<8x128xbf16>, vector<128x512xbf16>, vector<8x512xf32> -> vector<8x512xf32>
    %86 = arith.addf %82, %85 : vector<8x512xf32>
    %87 = vector.extract_strided_slice %86 {offsets = [0, 0], sizes = [8, 128], strides = [1, 1]} : vector<8x512xf32> to vector<8x128xf32>
    %88 = arith.negf %87 : vector<8x128xf32>
    %89 = math.exp %88 : vector<8x128xf32>
    %cst_29 = arith.constant 1.000000e+00 : f32
    %90 = vector.broadcast %cst_29 : f32 to vector<8x128xf32>
    %91 = arith.addf %90, %89 : vector<8x128xf32>
    %92 = arith.divf %90, %91 : vector<8x128xf32>
    %93 = vector.extract_strided_slice %86 {offsets = [0, 128], sizes = [8, 128], strides = [1, 1]} : vector<8x512xf32> to vector<8x128xf32>
    %94 = arith.negf %93 : vector<8x128xf32>
    %95 = math.exp %94 : vector<8x128xf32>
    %cst_30 = arith.constant 1.000000e+00 : f32
    %96 = vector.broadcast %cst_30 : f32 to vector<8x128xf32>
    %97 = arith.addf %96, %95 : vector<8x128xf32>
    %98 = arith.divf %96, %97 : vector<8x128xf32>
    %99 = vector.extract_strided_slice %86 {offsets = [0, 256], sizes = [8, 128], strides = [1, 1]} : vector<8x512xf32> to vector<8x128xf32>
    %100 = math.tanh %99 : vector<8x128xf32>
    %101 = vector.extract_strided_slice %86 {offsets = [0, 384], sizes = [8, 128], strides = [1, 1]} : vector<8x512xf32> to vector<8x128xf32>
    %102 = arith.negf %101 : vector<8x128xf32>
    %103 = math.exp %102 : vector<8x128xf32>
    %cst_31 = arith.constant 1.000000e+00 : f32
    %104 = vector.broadcast %cst_31 : f32 to vector<8x128xf32>
    %105 = arith.addf %104, %103 : vector<8x128xf32>
    %106 = arith.divf %104, %105 : vector<8x128xf32>
    %107 = arith.mulf %98, %72 : vector<8x128xf32>
    %108 = arith.mulf %92, %100 : vector<8x128xf32>
    %109 = arith.addf %107, %108 : vector<8x128xf32>
    %110 = math.tanh %109 : vector<8x128xf32>
    %111 = arith.mulf %106, %110 : vector<8x128xf32>
    %112 = arith.index_cast %c2_i32 : i32 to index
    %c0_32 = arith.constant 0 : index
    %c0_33 = arith.constant 0 : index
    %113 = vector.load %arg6[%112, %c0_32, %c0_33] : memref<8x8x128xf32, #tpu.memory_space<vmem>>, vector<1x8x128xf32>
    %114 = vector.shape_cast %113 : vector<1x8x128xf32> to vector<8x128xf32>
    %115 = vector.shape_cast %111 : vector<8x128xf32> to vector<1x8x128xf32>
    tpu.vector_store %arg6[%112, %c0_32, %c0_33], %115 {strides = array<i32>} : memref<8x8x128xf32, #tpu.memory_space<vmem>>, vector<1x8x128xf32>,
    %c3_i32 = arith.constant 3 : i32
    %116 = arith.index_cast %c3_i32 : i32 to index
    %c0_34 = arith.constant 0 : index
    %c0_35 = arith.constant 0 : index
    %117 = vector.load %arg2[%116, %c0_34, %c0_35] : memref<8x8x512xbf16, #tpu.memory_space<vmem>>, vector<1x8x512xbf16>
    %118 = vector.shape_cast %117 : vector<1x8x512xbf16> to vector<8x512xbf16>
    %119 = arith.extf %118 : vector<8x512xbf16> to vector<8x512xf32>
    %120 = arith.truncf %111 : vector<8x128xf32> to vector<8x128xbf16>
    %c0_36 = arith.constant 0 : index
    %c0_37 = arith.constant 0 : index
    %121 = vector.load %arg3[%c0_36, %c0_37] : memref<128x512xbf16, #tpu.memory_space<vmem>>, vector<128x512xbf16>
    %cst_38 = arith.constant dense<0.000000e+00> : vector<8x512xf32>
    %122 = tpu.matmul %120, %121, %cst_38 {dimension_numbers = #tpu.dot_dimension_numbers<[1], [0], [0], [1], [0, 0, 1, 1], [], []>} : vector<8x128xbf16>, vector<128x512xbf16>, vector<8x512xf32> -> vector<8x512xf32>
    %123 = arith.addf %119, %122 : vector<8x512xf32>
    %124 = vector.extract_strided_slice %123 {offsets = [0, 0], sizes = [8, 128], strides = [1, 1]} : vector<8x512xf32> to vector<8x128xf32>
    %125 = arith.negf %124 : vector<8x128xf32>
    %126 = math.exp %125 : vector<8x128xf32>
    %cst_39 = arith.constant 1.000000e+00 : f32
    %127 = vector.broadcast %cst_39 : f32 to vector<8x128xf32>
    %128 = arith.addf %127, %126 : vector<8x128xf32>
    %129 = arith.divf %127, %128 : vector<8x128xf32>
    %130 = vector.extract_strided_slice %123 {offsets = [0, 128], sizes = [8, 128], strides = [1, 1]} : vector<8x512xf32> to vector<8x128xf32>
    %131 = arith.negf %130 : vector<8x128xf32>
    %132 = math.exp %131 : vector<8x128xf32>
    %cst_40 = arith.constant 1.000000e+00 : f32
    %133 = vector.broadcast %cst_40 : f32 to vector<8x128xf32>
    %134 = arith.addf %133, %132 : vector<8x128xf32>
    %135 = arith.divf %133, %134 : vector<8x128xf32>
    %136 = vector.extract_strided_slice %123 {offsets = [0, 256], sizes = [8, 128], strides = [1, 1]} : vector<8x512xf32> to vector<8x128xf32>
    %137 = math.tanh %136 : vector<8x128xf32>
    %138 = vector.extract_strided_slice %123 {offsets = [0, 384], sizes = [8, 128], strides = [1, 1]} : vector<8x512xf32> to vector<8x128xf32>
    %139 = arith.negf %138 : vector<8x128xf32>
    %140 = math.exp %139 : vector<8x128xf32>
    %cst_41 = arith.constant 1.000000e+00 : f32
    %141 = vector.broadcast %cst_41 : f32 to vector<8x128xf32>
    %142 = arith.addf %141, %140 : vector<8x128xf32>
    %143 = arith.divf %141, %142 : vector<8x128xf32>
    %144 = arith.mulf %135, %109 : vector<8x128xf32>
    %145 = arith.mulf %129, %137 : vector<8x128xf32>
    %146 = arith.addf %144, %145 : vector<8x128xf32>
    %147 = math.tanh %146 : vector<8x128xf32>
    %148 = arith.mulf %143, %147 : vector<8x128xf32>
    %149 = arith.index_cast %c3_i32 : i32 to index
    %c0_42 = arith.constant 0 : index
    %c0_43 = arith.constant 0 : index
    %150 = vector.load %arg6[%149, %c0_42, %c0_43] : memref<8x8x128xf32, #tpu.memory_space<vmem>>, vector<1x8x128xf32>
    %151 = vector.shape_cast %150 : vector<1x8x128xf32> to vector<8x128xf32>
    %152 = vector.shape_cast %148 : vector<8x128xf32> to vector<1x8x128xf32>
    tpu.vector_store %arg6[%149, %c0_42, %c0_43], %152 {strides = array<i32>} : memref<8x8x128xf32, #tpu.memory_space<vmem>>, vector<1x8x128xf32>,
    %c4_i32 = arith.constant 4 : i32
    %153 = arith.index_cast %c4_i32 : i32 to index
    %c0_44 = arith.constant 0 : index
    %c0_45 = arith.constant 0 : index
    %154 = vector.load %arg2[%153, %c0_44, %c0_45] : memref<8x8x512xbf16, #tpu.memory_space<vmem>>, vector<1x8x512xbf16>
    %155 = vector.shape_cast %154 : vector<1x8x512xbf16> to vector<8x512xbf16>
    %156 = arith.extf %155 : vector<8x512xbf16> to vector<8x512xf32>
    %157 = arith.truncf %148 : vector<8x128xf32> to vector<8x128xbf16>
    %c0_46 = arith.constant 0 : index
    %c0_47 = arith.constant 0 : index
    %158 = vector.load %arg3[%c0_46, %c0_47] : memref<128x512xbf16, #tpu.memory_space<vmem>>, vector<128x512xbf16>
    %cst_48 = arith.constant dense<0.000000e+00> : vector<8x512xf32>
    %159 = tpu.matmul %157, %158, %cst_48 {dimension_numbers = #tpu.dot_dimension_numbers<[1], [0], [0], [1], [0, 0, 1, 1], [], []>} : vector<8x128xbf16>, vector<128x512xbf16>, vector<8x512xf32> -> vector<8x512xf32>
    %160 = arith.addf %156, %159 : vector<8x512xf32>
    %161 = vector.extract_strided_slice %160 {offsets = [0, 0], sizes = [8, 128], strides = [1, 1]} : vector<8x512xf32> to vector<8x128xf32>
    %162 = arith.negf %161 : vector<8x128xf32>
    %163 = math.exp %162 : vector<8x128xf32>
    %cst_49 = arith.constant 1.000000e+00 : f32
    %164 = vector.broadcast %cst_49 : f32 to vector<8x128xf32>
    %165 = arith.addf %164, %163 : vector<8x128xf32>
    %166 = arith.divf %164, %165 : vector<8x128xf32>
    %167 = vector.extract_strided_slice %160 {offsets = [0, 128], sizes = [8, 128], strides = [1, 1]} : vector<8x512xf32> to vector<8x128xf32>
    %168 = arith.negf %167 : vector<8x128xf32>
    %169 = math.exp %168 : vector<8x128xf32>
    %cst_50 = arith.constant 1.000000e+00 : f32
    %170 = vector.broadcast %cst_50 : f32 to vector<8x128xf32>
    %171 = arith.addf %170, %169 : vector<8x128xf32>
    %172 = arith.divf %170, %171 : vector<8x128xf32>
    %173 = vector.extract_strided_slice %160 {offsets = [0, 256], sizes = [8, 128], strides = [1, 1]} : vector<8x512xf32> to vector<8x128xf32>
    %174 = math.tanh %173 : vector<8x128xf32>
    %175 = vector.extract_strided_slice %160 {offsets = [0, 384], sizes = [8, 128], strides = [1, 1]} : vector<8x512xf32> to vector<8x128xf32>
    %176 = arith.negf %175 : vector<8x128xf32>
    %177 = math.exp %176 : vector<8x128xf32>
    %cst_51 = arith.constant 1.000000e+00 : f32
    %178 = vector.broadcast %cst_51 : f32 to vector<8x128xf32>
    %179 = arith.addf %178, %177 : vector<8x128xf32>
    %180 = arith.divf %178, %179 : vector<8x128xf32>
    %181 = arith.mulf %172, %146 : vector<8x128xf32>
    %182 = arith.mulf %166, %174 : vector<8x128xf32>
    %183 = arith.addf %181, %182 : vector<8x128xf32>
    %184 = math.tanh %183 : vector<8x128xf32>
    %185 = arith.mulf %180, %184 : vector<8x128xf32>
    %186 = arith.index_cast %c4_i32 : i32 to index
    %c0_52 = arith.constant 0 : index
    %c0_53 = arith.constant 0 : index
    %187 = vector.load %arg6[%186, %c0_52, %c0_53] : memref<8x8x128xf32, #tpu.memory_space<vmem>>, vector<1x8x128xf32>
    %188 = vector.shape_cast %187 : vector<1x8x128xf32> to vector<8x128xf32>
    %189 = vector.shape_cast %185 : vector<8x128xf32> to vector<1x8x128xf32>
    tpu.vector_store %arg6[%186, %c0_52, %c0_53], %189 {strides = array<i32>} : memref<8x8x128xf32, #tpu.memory_space<vmem>>, vector<1x8x128xf32>,
    %c5_i32 = arith.constant 5 : i32
    %190 = arith.index_cast %c5_i32 : i32 to index
    %c0_54 = arith.constant 0 : index
    %c0_55 = arith.constant 0 : index
    %191 = vector.load %arg2[%190, %c0_54, %c0_55] : memref<8x8x512xbf16, #tpu.memory_space<vmem>>, vector<1x8x512xbf16>
    %192 = vector.shape_cast %191 : vector<1x8x512xbf16> to vector<8x512xbf16>
    %193 = arith.extf %192 : vector<8x512xbf16> to vector<8x512xf32>
    %194 = arith.truncf %185 : vector<8x128xf32> to vector<8x128xbf16>
    %c0_56 = arith.constant 0 : index
    %c0_57 = arith.constant 0 : index
    %195 = vector.load %arg3[%c0_56, %c0_57] : memref<128x512xbf16, #tpu.memory_space<vmem>>, vector<128x512xbf16>
    %cst_58 = arith.constant dense<0.000000e+00> : vector<8x512xf32>
    %196 = tpu.matmul %194, %195, %cst_58 {dimension_numbers = #tpu.dot_dimension_numbers<[1], [0], [0], [1], [0, 0, 1, 1], [], []>} : vector<8x128xbf16>, vector<128x512xbf16>, vector<8x512xf32> -> vector<8x512xf32>
    %197 = arith.addf %193, %196 : vector<8x512xf32>
    %198 = vector.extract_strided_slice %197 {offsets = [0, 0], sizes = [8, 128], strides = [1, 1]} : vector<8x512xf32> to vector<8x128xf32>
    %199 = arith.negf %198 : vector<8x128xf32>
    %200 = math.exp %199 : vector<8x128xf32>
    %cst_59 = arith.constant 1.000000e+00 : f32
    %201 = vector.broadcast %cst_59 : f32 to vector<8x128xf32>
    %202 = arith.addf %201, %200 : vector<8x128xf32>
    %203 = arith.divf %201, %202 : vector<8x128xf32>
    %204 = vector.extract_strided_slice %197 {offsets = [0, 128], sizes = [8, 128], strides = [1, 1]} : vector<8x512xf32> to vector<8x128xf32>
    %205 = arith.negf %204 : vector<8x128xf32>
    %206 = math.exp %205 : vector<8x128xf32>
    %cst_60 = arith.constant 1.000000e+00 : f32
    %207 = vector.broadcast %cst_60 : f32 to vector<8x128xf32>
    %208 = arith.addf %207, %206 : vector<8x128xf32>
    %209 = arith.divf %207, %208 : vector<8x128xf32>
    %210 = vector.extract_strided_slice %197 {offsets = [0, 256], sizes = [8, 128], strides = [1, 1]} : vector<8x512xf32> to vector<8x128xf32>
    %211 = math.tanh %210 : vector<8x128xf32>
    %212 = vector.extract_strided_slice %197 {offsets = [0, 384], sizes = [8, 128], strides = [1, 1]} : vector<8x512xf32> to vector<8x128xf32>
    %213 = arith.negf %212 : vector<8x128xf32>
    %214 = math.exp %213 : vector<8x128xf32>
    %cst_61 = arith.constant 1.000000e+00 : f32
    %215 = vector.broadcast %cst_61 : f32 to vector<8x128xf32>
    %216 = arith.addf %215, %214 : vector<8x128xf32>
    %217 = arith.divf %215, %216 : vector<8x128xf32>
    %218 = arith.mulf %209, %183 : vector<8x128xf32>
    %219 = arith.mulf %203, %211 : vector<8x128xf32>
    %220 = arith.addf %218, %219 : vector<8x128xf32>
    %221 = math.tanh %220 : vector<8x128xf32>
    %222 = arith.mulf %217, %221 : vector<8x128xf32>
    %223 = arith.index_cast %c5_i32 : i32 to index
    %c0_62 = arith.constant 0 : index
    %c0_63 = arith.constant 0 : index
    %224 = vector.load %arg6[%223, %c0_62, %c0_63] : memref<8x8x128xf32, #tpu.memory_space<vmem>>, vector<1x8x128xf32>
    %225 = vector.shape_cast %224 : vector<1x8x128xf32> to vector<8x128xf32>
    %226 = vector.shape_cast %222 : vector<8x128xf32> to vector<1x8x128xf32>
    tpu.vector_store %arg6[%223, %c0_62, %c0_63], %226 {strides = array<i32>} : memref<8x8x128xf32, #tpu.memory_space<vmem>>, vector<1x8x128xf32>,
    %c6_i32 = arith.constant 6 : i32
    %227 = arith.index_cast %c6_i32 : i32 to index
    %c0_64 = arith.constant 0 : index
    %c0_65 = arith.constant 0 : index
    %228 = vector.load %arg2[%227, %c0_64, %c0_65] : memref<8x8x512xbf16, #tpu.memory_space<vmem>>, vector<1x8x512xbf16>
    %229 = vector.shape_cast %228 : vector<1x8x512xbf16> to vector<8x512xbf16>
    %230 = arith.extf %229 : vector<8x512xbf16> to vector<8x512xf32>
    %231 = arith.truncf %222 : vector<8x128xf32> to vector<8x128xbf16>
    %c0_66 = arith.constant 0 : index
    %c0_67 = arith.constant 0 : index
    %232 = vector.load %arg3[%c0_66, %c0_67] : memref<128x512xbf16, #tpu.memory_space<vmem>>, vector<128x512xbf16>
    %cst_68 = arith.constant dense<0.000000e+00> : vector<8x512xf32>
    %233 = tpu.matmul %231, %232, %cst_68 {dimension_numbers = #tpu.dot_dimension_numbers<[1], [0], [0], [1], [0, 0, 1, 1], [], []>} : vector<8x128xbf16>, vector<128x512xbf16>, vector<8x512xf32> -> vector<8x512xf32>
    %234 = arith.addf %230, %233 : vector<8x512xf32>
    %235 = vector.extract_strided_slice %234 {offsets = [0, 0], sizes = [8, 128], strides = [1, 1]} : vector<8x512xf32> to vector<8x128xf32>
    %236 = arith.negf %235 : vector<8x128xf32>
    %237 = math.exp %236 : vector<8x128xf32>
    %cst_69 = arith.constant 1.000000e+00 : f32
    %238 = vector.broadcast %cst_69 : f32 to vector<8x128xf32>
    %239 = arith.addf %238, %237 : vector<8x128xf32>
    %240 = arith.divf %238, %239 : vector<8x128xf32>
    %241 = vector.extract_strided_slice %234 {offsets = [0, 128], sizes = [8, 128], strides = [1, 1]} : vector<8x512xf32> to vector<8x128xf32>
    %242 = arith.negf %241 : vector<8x128xf32>
    %243 = math.exp %242 : vector<8x128xf32>
    %cst_70 = arith.constant 1.000000e+00 : f32
    %244 = vector.broadcast %cst_70 : f32 to vector<8x128xf32>
    %245 = arith.addf %244, %243 : vector<8x128xf32>
    %246 = arith.divf %244, %245 : vector<8x128xf32>
    %247 = vector.extract_strided_slice %234 {offsets = [0, 256], sizes = [8, 128], strides = [1, 1]} : vector<8x512xf32> to vector<8x128xf32>
    %248 = math.tanh %247 : vector<8x128xf32>
    %249 = vector.extract_strided_slice %234 {offsets = [0, 384], sizes = [8, 128], strides = [1, 1]} : vector<8x512xf32> to vector<8x128xf32>
    %250 = arith.negf %249 : vector<8x128xf32>
    %251 = math.exp %250 : vector<8x128xf32>
    %cst_71 = arith.constant 1.000000e+00 : f32
    %252 = vector.broadcast %cst_71 : f32 to vector<8x128xf32>
    %253 = arith.addf %252, %251 : vector<8x128xf32>
    %254 = arith.divf %252, %253 : vector<8x128xf32>
    %255 = arith.mulf %246, %220 : vector<8x128xf32>
    %256 = arith.mulf %240, %248 : vector<8x128xf32>
    %257 = arith.addf %255, %256 : vector<8x128xf32>
    %258 = math.tanh %257 : vector<8x128xf32>
    %259 = arith.mulf %254, %258 : vector<8x128xf32>
    %260 = arith.index_cast %c6_i32 : i32 to index
    %c0_72 = arith.constant 0 : index
    %c0_73 = arith.constant 0 : index
    %261 = vector.load %arg6[%260, %c0_72, %c0_73] : memref<8x8x128xf32, #tpu.memory_space<vmem>>, vector<1x8x128xf32>
    %262 = vector.shape_cast %261 : vector<1x8x128xf32> to vector<8x128xf32>
    %263 = vector.shape_cast %259 : vector<8x128xf32> to vector<1x8x128xf32>
    tpu.vector_store %arg6[%260, %c0_72, %c0_73], %263 {strides = array<i32>} : memref<8x8x128xf32, #tpu.memory_space<vmem>>, vector<1x8x128xf32>,
    %c7_i32 = arith.constant 7 : i32
    %264 = arith.index_cast %c7_i32 : i32 to index
    %c0_74 = arith.constant 0 : index
    %c0_75 = arith.constant 0 : index
    %265 = vector.load %arg2[%264, %c0_74, %c0_75] : memref<8x8x512xbf16, #tpu.memory_space<vmem>>, vector<1x8x512xbf16>
    %266 = vector.shape_cast %265 : vector<1x8x512xbf16> to vector<8x512xbf16>
    %267 = arith.extf %266 : vector<8x512xbf16> to vector<8x512xf32>
    %268 = arith.truncf %259 : vector<8x128xf32> to vector<8x128xbf16>
    %c0_76 = arith.constant 0 : index
    %c0_77 = arith.constant 0 : index
    %269 = vector.load %arg3[%c0_76, %c0_77] : memref<128x512xbf16, #tpu.memory_space<vmem>>, vector<128x512xbf16>
    %cst_78 = arith.constant dense<0.000000e+00> : vector<8x512xf32>
    %270 = tpu.matmul %268, %269, %cst_78 {dimension_numbers = #tpu.dot_dimension_numbers<[1], [0], [0], [1], [0, 0, 1, 1], [], []>} : vector<8x128xbf16>, vector<128x512xbf16>, vector<8x512xf32> -> vector<8x512xf32>
    %271 = arith.addf %267, %270 : vector<8x512xf32>
    %272 = vector.extract_strided_slice %271 {offsets = [0, 0], sizes = [8, 128], strides = [1, 1]} : vector<8x512xf32> to vector<8x128xf32>
    %273 = arith.negf %272 : vector<8x128xf32>
    %274 = math.exp %273 : vector<8x128xf32>
    %cst_79 = arith.constant 1.000000e+00 : f32
    %275 = vector.broadcast %cst_79 : f32 to vector<8x128xf32>
    %276 = arith.addf %275, %274 : vector<8x128xf32>
    %277 = arith.divf %275, %276 : vector<8x128xf32>
    %278 = vector.extract_strided_slice %271 {offsets = [0, 128], sizes = [8, 128], strides = [1, 1]} : vector<8x512xf32> to vector<8x128xf32>
    %279 = arith.negf %278 : vector<8x128xf32>
    %280 = math.exp %279 : vector<8x128xf32>
    %cst_80 = arith.constant 1.000000e+00 : f32
    %281 = vector.broadcast %cst_80 : f32 to vector<8x128xf32>
    %282 = arith.addf %281, %280 : vector<8x128xf32>
    %283 = arith.divf %281, %282 : vector<8x128xf32>
    %284 = vector.extract_strided_slice %271 {offsets = [0, 256], sizes = [8, 128], strides = [1, 1]} : vector<8x512xf32> to vector<8x128xf32>
    %285 = math.tanh %284 : vector<8x128xf32>
    %286 = vector.extract_strided_slice %271 {offsets = [0, 384], sizes = [8, 128], strides = [1, 1]} : vector<8x512xf32> to vector<8x128xf32>
    %287 = arith.negf %286 : vector<8x128xf32>
    %288 = math.exp %287 : vector<8x128xf32>
    %cst_81 = arith.constant 1.000000e+00 : f32
    %289 = vector.broadcast %cst_81 : f32 to vector<8x128xf32>
    %290 = arith.addf %289, %288 : vector<8x128xf32>
    %291 = arith.divf %289, %290 : vector<8x128xf32>
    %292 = arith.mulf %283, %257 : vector<8x128xf32>
    %293 = arith.mulf %277, %285 : vector<8x128xf32>
    %294 = arith.addf %292, %293 : vector<8x128xf32>
    %295 = math.tanh %294 : vector<8x128xf32>
    %296 = arith.mulf %291, %295 : vector<8x128xf32>
    %297 = arith.index_cast %c7_i32 : i32 to index
    %c0_82 = arith.constant 0 : index
    %c0_83 = arith.constant 0 : index
    %298 = vector.load %arg6[%297, %c0_82, %c0_83] : memref<8x8x128xf32, #tpu.memory_space<vmem>>, vector<1x8x128xf32>
    %299 = vector.shape_cast %298 : vector<1x8x128xf32> to vector<8x128xf32>
    %300 = vector.shape_cast %296 : vector<8x128xf32> to vector<1x8x128xf32>
    tpu.vector_store %arg6[%297, %c0_82, %c0_83], %300 {strides = array<i32>} : memref<8x8x128xf32, #tpu.memory_space<vmem>>, vector<1x8x128xf32>,
    %c8_i32 = arith.constant 8 : i32
    %c0_84 = arith.constant 0 : index
    %c0_85 = arith.constant 0 : index
    %301 = vector.load %arg9[%c0_84, %c0_85] : memref<8x128xf32, #tpu.memory_space<vmem>>, vector<8x128xf32>
    tpu.vector_store %arg9[%c0_84, %c0_85], %296 {strides = array<i32>} : memref<8x128xf32, #tpu.memory_space<vmem>>, vector<8x128xf32>,
    %c0_86 = arith.constant 0 : index
    %c0_87 = arith.constant 0 : index
    %302 = vector.load %arg10[%c0_86, %c0_87] : memref<8x128xf32, #tpu.memory_space<vmem>>, vector<8x128xf32>
    tpu.vector_store %arg10[%c0_86, %c0_87], %294 {strides = array<i32>} : memref<8x128xf32, #tpu.memory_space<vmem>>, vector<8x128xf32>,
    %c0_i32_88 = arith.constant 0 : i32
    %303 = arith.cmpi eq, %arg1, %c0_i32_88 : i32
    %304 = arith.extui %303 : i1 to i32
    %c0_i32_89 = arith.constant 0 : i32
    %305 = arith.cmpi ne, %304, %c0_i32_89 : i32
    scf.if %305 {
      %c0_90 = arith.constant 0 : index
      %c0_91 = arith.constant 0 : index
      %306 = vector.load %arg7[%c0_90, %c0_91] : memref<8x128xf32, #tpu.memory_space<vmem>>, vector<8x128xf32>
      tpu.vector_store %arg7[%c0_90, %c0_91], %296 {strides = array<i32>} : memref<8x128xf32, #tpu.memory_space<vmem>>, vector<8x128xf32>,
      %c0_92 = arith.constant 0 : index
      %c0_93 = arith.constant 0 : index
      %307 = vector.load %arg8[%c0_92, %c0_93] : memref<8x128xf32, #tpu.memory_space<vmem>>, vector<8x128xf32>
      tpu.vector_store %arg8[%c0_92, %c0_93], %294 {strides = array<i32>} : memref<8x128xf32, #tpu.memory_space<vmem>>, vector<8x128xf32>,
    } else {
    }
    return
  }
  func.func @transform_0(%arg0: i32, %arg1: i32) -> (i32, i32, i32) {
    %c0_i32 = arith.constant 0 : i32
    %c0_i32_0 = arith.constant 0 : i32
    return %arg1, %arg0, %c0_i32 : i32, i32, i32
  }
  func.func @transform_1(%arg0: i32, %arg1: i32) -> (i32, i32) {
    %c0_i32 = arith.constant 0 : i32
    %c0_i32_0 = arith.constant 0 : i32
    %c0_i32_1 = arith.constant 0 : i32
    return %c0_i32, %c0_i32_0 : i32, i32
  }
  func.func @transform_2(%arg0: i32, %arg1: i32) -> (i32, i32) {
    %c0_i32 = arith.constant 0 : i32
    %c0_i32_0 = arith.constant 0 : i32
    return %arg0, %c0_i32 : i32, i32
  }
  func.func @transform_3(%arg0: i32, %arg1: i32) -> (i32, i32) {
    %c0_i32 = arith.constant 0 : i32
    %c0_i32_0 = arith.constant 0 : i32
    return %arg0, %c0_i32 : i32, i32
  }
  func.func @transform_4(%arg0: i32, %arg1: i32) -> (i32, i32, i32) {
    %c0_i32 = arith.constant 0 : i32
    %c0_i32_0 = arith.constant 0 : i32
    return %arg1, %arg0, %c0_i32 : i32, i32, i32
  }
  func.func @transform_5(%arg0: i32, %arg1: i32) -> (i32, i32) {
    %c0_i32 = arith.constant 0 : i32
    %c0_i32_0 = arith.constant 0 : i32
    return %arg0, %c0_i32 : i32, i32
  }
  func.func @transform_6(%arg0: i32, %arg1: i32) -> (i32, i32) {
    %c0_i32 = arith.constant 0 : i32
    %c0_i32_0 = arith.constant 0 : i32
    return %arg0, %c0_i32 : i32, i32
  }
}

</mosaic_0001>

<llo_original>
// kernel: rnnlm_forward.9
$region0: #{rnnlm_forward.9}
  #allocation0 [shape = 'u32[]', space=smem, size = 0x4, offset = 0x4, fixed_abs, tag = 'smem constant byte address 0x4 - core index']
  #allocation1 [shape = 'u32[144,128]{1,0:T(1,128)}', space=vmem, size = 0x12000, scoped, tag = 'internal scratch']
  %s0 = inlined_call_operand.vmem [shape: f32[64,128], index: 0, kind: input, shape index: {}]
  %s1 = inlined_call_operand.vmem [shape: bf16[128,256], index: 1, kind: input, shape index: {}]
  %s2 = inlined_call_operand.vmem [shape: f32[1,256], index: 2, kind: input, shape index: {}]
  %s3 = inlined_call_operand.vmem [shape: f32[64,256], index: 3, kind: output, shape index: {}]
  %s4 = sld [smem:[#allocation0]]
  $region30: #{rnnlm_forward.9} parent=0
    _
  %s6 = ssub.s32 1, %s4
  %s7 = scalar_select 0, %s6, %s4
  // Predicated region
  $region2: #{rnnlm_forward.9} parent=0 // pred_check
    _
  $region3: #{rnnlm_forward.9} parent=0 // pred_check_branch
    %9 = sbr.rel (0) target = $region5
  $region4: #{rnnlm_forward.9} parent=0 // pred_region
    _
  $region5: #{rnnlm_forward.9} parent=0 // pred_fallthru
    _
  // Predicated region
  $region6: #{rnnlm_forward.9} parent=0 // pred_check
    _
  $region7: #{rnnlm_forward.9} parent=0 // pred_check_branch
    %11 = sbr.rel (0) target = $region9
  $region8: #{rnnlm_forward.9} parent=0 // pred_region
    _
  $region9: #{rnnlm_forward.9} parent=0 // pred_fallthru
    _
  // Predicated region
  $region10: #{rnnlm_forward.9} parent=0 // pred_check
    _
  $region11: #{rnnlm_forward.9} parent=0 // pred_check_branch
    %13 = sbr.rel (0) target = $region13
  $region12: #{rnnlm_forward.9} parent=0 // pred_region
    _
  $region13: #{rnnlm_forward.9} parent=0 // pred_fallthru
    _
  %p15 = scmp.eq.s32.totalorder 0, 0
  // Predicated region
  $region14: #{rnnlm_forward.9} parent=0 // pred_check
    %p16 = pneg %p15
  $region15: #{rnnlm_forward.9} parent=0 // pred_check_branch
    %18 = sbr.rel (%p16) target = $region17
  $region16: #{rnnlm_forward.9} parent=0 // pred_region
    %19 = vst [vmem:[%s3] sm:$0xff] 0.0
    %20 = vst [vmem:[%s3 + $0x8] sm:$0xff] 0.0
    %21 = vst [vmem:[%s3 + $0x10] sm:$0xff] 0.0
    %22 = vst [vmem:[%s3 + $0x18] sm:$0xff] 0.0
    %23 = vst [vmem:[%s3 + $0x20] sm:$0xff] 0.0
    %24 = vst [vmem:[%s3 + $0x28] sm:$0xff] 0.0
    %25 = vst [vmem:[%s3 + $0x30] sm:$0xff] 0.0
    %26 = vst [vmem:[%s3 + $0x38] sm:$0xff] 0.0
    %27 = vst [vmem:[%s3 + $0x40] sm:$0xff] 0.0
    %28 = vst [vmem:[%s3 + $0x48] sm:$0xff] 0.0
    %29 = vst [vmem:[%s3 + $0x50] sm:$0xff] 0.0
    %30 = vst [vmem:[%s3 + $0x58] sm:$0xff] 0.0
    %31 = vst [vmem:[%s3 + $0x60] sm:$0xff] 0.0
    %32 = vst [vmem:[%s3 + $0x68] sm:$0xff] 0.0
    %33 = vst [vmem:[%s3 + $0x70] sm:$0xff] 0.0
    %34 = vst [vmem:[%s3 + $0x78] sm:$0xff] 0.0
  $region17: #{rnnlm_forward.9} parent=0 // pred_fallthru
    _
  %v35 = vld [vmem:[%s3] sm:$0xff]
  %v36 = vld [vmem:[%s3 + $0x8] sm:$0xff]
  %v37 = vld [vmem:[%s3 + $0x10] sm:$0xff]
  %v38 = vld [vmem:[%s3 + $0x18] sm:$0xff]
  %v39 = vld [vmem:[%s3 + $0x20] sm:$0xff]
  %v40 = vld [vmem:[%s3 + $0x28] sm:$0xff]
  %v41 = vld [vmem:[%s3 + $0x30] sm:$0xff]
  %v42 = vld [vmem:[%s3 + $0x38] sm:$0xff]
  %v43 = vld [vmem:[%s3 + $0x40] sm:$0xff]
  %v44 = vld [vmem:[%s3 + $0x48] sm:$0xff]
  %v45 = vld [vmem:[%s3 + $0x50] sm:$0xff]
  %v46 = vld [vmem:[%s3 + $0x58] sm:$0xff]
  %v47 = vld [vmem:[%s3 + $0x60] sm:$0xff]
  %v48 = vld [vmem:[%s3 + $0x68] sm:$0xff]
  %v49 = vld [vmem:[%s3 + $0x70] sm:$0xff]
  %v50 = vld [vmem:[%s3 + $0x78] sm:$0xff]
  %v51 = vld [vmem:[%s0] sm:$0xff]
  %v52 = vld [vmem:[%s0 + $0x8] sm:$0xff]
  %v53 = vld [vmem:[%s0 + $0x10] sm:$0xff]
  %v54 = vld [vmem:[%s0 + $0x18] sm:$0xff]
  %v55 = vld [vmem:[%s0 + $0x20] sm:$0xff]
  %v56 = vld [vmem:[%s0 + $0x28] sm:$0xff]
  %v57 = vld [vmem:[%s0 + $0x30] sm:$0xff]
  %v58 = vld [vmem:[%s0 + $0x38] sm:$0xff]
  %v59 = vpack.c.bf16 %v52, %v51
  %v60 = vpack.c.bf16 %v54, %v53
  %v61 = vpack.c.bf16 %v56, %v55
  %v62 = vpack.c.bf16 %v58, %v57
  %v63 = vld [vmem:[%s1] sm:$0xff]
  %v64 = vld [vmem:[%s1 + $0x8] sm:$0xff]
  %v65 = vld [vmem:[%s1 + $0x10] sm:$0xff]
  %v66 = vld [vmem:[%s1 + $0x18] sm:$0xff]
  %v67 = vld [vmem:[%s1 + $0x20] sm:$0xff]
  %v68 = vld [vmem:[%s1 + $0x28] sm:$0xff]
  %v69 = vld [vmem:[%s1 + $0x30] sm:$0xff]
  %v70 = vld [vmem:[%s1 + $0x38] sm:$0xff]
  %v71 = vld [vmem:[%s1 + $0x40] sm:$0xff]
  %v72 = vld [vmem:[%s1 + $0x48] sm:$0xff]
  %v73 = vld [vmem:[%s1 + $0x50] sm:$0xff]
  %v74 = vld [vmem:[%s1 + $0x58] sm:$0xff]
  %v75 = vld [vmem:[%s1 + $0x60] sm:$0xff]
  %v76 = vld [vmem:[%s1 + $0x68] sm:$0xff]
  %v77 = vld [vmem:[%s1 + $0x70] sm:$0xff]
  %v78 = vld [vmem:[%s1 + $0x78] sm:$0xff]
  %v95 = vunpack.c.l.b16 %v63
  %v96 = vunpack.c.h.b16 %v63
  %v97 = vunpack.c.l.b16 %v64
  %v98 = vunpack.c.h.b16 %v64
  %v99 = vunpack.c.l.b16 %v65
  %v100 = vunpack.c.h.b16 %v65
  %v101 = vunpack.c.l.b16 %v66
  %v102 = vunpack.c.h.b16 %v66
  %v103 = vunpack.c.l.b16 %v67
  %v104 = vunpack.c.h.b16 %v67
  %v105 = vunpack.c.l.b16 %v68
  %v106 = vunpack.c.h.b16 %v68
  %v107 = vunpack.c.l.b16 %v69
  %v108 = vunpack.c.h.b16 %v69
  %v109 = vunpack.c.l.b16 %v70
  %v110 = vunpack.c.h.b16 %v70
  %v111 = vunpack.c.l.b16 %v71
  %v112 = vunpack.c.h.b16 %v71
  %v113 = vunpack.c.l.b16 %v72
  %v114 = vunpack.c.h.b16 %v72
  %v115 = vunpack.c.l.b16 %v73
  %v116 = vunpack.c.h.b16 %v73
  %v117 = vunpack.c.l.b16 %v74
  %v118 = vunpack.c.h.b16 %v74
  %v119 = vunpack.c.l.b16 %v75
  %v120 = vunpack.c.h.b16 %v75
  %v121 = vunpack.c.l.b16 %v76
  %v122 = vunpack.c.h.b16 %v76
  %v123 = vunpack.c.l.b16 %v77
  %v124 = vunpack.c.h.b16 %v77
  %v125 = vunpack.c.l.b16 %v78
  %v126 = vunpack.c.h.b16 %v78
  %v127 = vpack.c.b16 %v97, %v95
  %v128 = vpack.c.b16 %v98, %v96
  %v129 = vpack.c.b16 %v101, %v99
  %v130 = vpack.c.b16 %v102, %v100
  %v131 = vpack.c.b16 %v105, %v103
  %v132 = vpack.c.b16 %v106, %v104
  %v133 = vpack.c.b16 %v109, %v107
  %v134 = vpack.c.b16 %v110, %v108
  %v135 = vpack.c.b16 %v113, %v111
  %v136 = vpack.c.b16 %v114, %v112
  %v137 = vpack.c.b16 %v117, %v115
  %v138 = vpack.c.b16 %v118, %v116
  %v139 = vpack.c.b16 %v121, %v119
  %v140 = vpack.c.b16 %v122, %v120
  %v141 = vpack.c.b16 %v125, %v123
  %v142 = vpack.c.b16 %v126, %v124
  %159 = vmatprep.subr.bf16.mxu0 %v142
  %160 = vmatpush1.bf16.msra.mxu0 %v141
  %161 = vmatprep.subr.bf16.mxu0 %v140
  %162 = vmatpush1.bf16.msra.mxu0 %v139
  %163 = vmatprep.subr.bf16.mxu0 %v138
  %164 = vmatpush1.bf16.msra.mxu0 %v137
  %165 = vmatprep.subr.bf16.mxu0 %v136
  %166 = vmatpush1.bf16.msra.mxu0 %v135
  %167 = vmatprep.subr.bf16.mxu0 %v134
  %168 = vmatpush1.bf16.msra.mxu0 %v133
  %169 = vmatprep.subr.bf16.mxu0 %v132
  %170 = vmatpush1.bf16.msra.mxu0 %v131
  %171 = vmatprep.subr.bf16.mxu0 %v130
  %172 = vmatpush1.bf16.msra.mxu0 %v129
  %173 = vmatprep.subr.bf16.mxu0 %v128
  %174 = vmatpush1.bf16.msra.mxu0 %v127
  %175 = vmatprep.subr.bf16.mxu0 0
  %176 = vmatpush2.bf16.msra.mxu0 0
  %177 = vmatprep.subr.bf16.mxu0 0
  %178 = vmatpush2.bf16.msra.mxu0 0
  %179 = vmatprep.subr.bf16.mxu0 0
  %180 = vmatpush2.bf16.msra.mxu0 0
  %181 = vmatprep.subr.bf16.mxu0 0
  %182 = vmatpush2.bf16.msra.mxu0 0
  %183 = vmatprep.subr.bf16.mxu0 0
  %184 = vmatpush2.bf16.msra.mxu0 0
  %185 = vmatprep.subr.bf16.mxu0 0
  %186 = vmatpush2.bf16.msra.mxu0 0
  %187 = vmatprep.subr.bf16.mxu0 0
  %188 = vmatpush2.bf16.msra.mxu0 0
  %189 = vmatprep.subr.bf16.mxu0 0
  %190 = vmatpush2.bf16.msra.mxu0 0
  %191 = vmatprep.mubr.bf16.mxu0 0
  %192 = vmatmul.mubr.bf16.gmra.mxu0 %v59
  %v193 = vpop.f32.mrf.mxu0
  %v194 = vadd.f32 0.0, %v193
  %v195 = vpop.f32.mrf.mxu0
  %v196 = vadd.f32 0.0, %v195
  %v197 = vpop.f32.mrf.mxu0
  %v198 = vadd.f32 0.0, %v197
  %v199 = vpop.f32.mrf.mxu0
  %v200 = vadd.f32 0.0, %v199
  %201 = vmatprep.mubr.bf16.mxu0 0
  %202 = vmatmul.mubr.bf16.gmra.mxu0 %v60
  %v203 = vpop.f32.mrf.mxu0
  %v204 = vadd.f32 0.0, %v203
  %v205 = vpop.f32.mrf.mxu0
  %v206 = vadd.f32 0.0, %v205
  %v207 = vpop.f32.mrf.mxu0
  %v208 = vadd.f32 0.0, %v207
  %v209 = vpop.f32.mrf.mxu0
  %v210 = vadd.f32 0.0, %v209
  %211 = vmatprep.mubr.bf16.mxu0 0
  %212 = vmatmul.mubr.bf16.gmra.mxu0 %v61
  %v213 = vpop.f32.mrf.mxu0
  %v214 = vadd.f32 0.0, %v213
  %v215 = vpop.f32.mrf.mxu0
  %v216 = vadd.f32 0.0, %v215
  %v217 = vpop.f32.mrf.mxu0
  %v218 = vadd.f32 0.0, %v217
  %v219 = vpop.f32.mrf.mxu0
  %v220 = vadd.f32 0.0, %v219
  %221 = vmatprep.mubr.bf16.mxu0 0
  %222 = vmatmul.mubr.bf16.gmra.mxu0 %v62
  %v223 = vpop.f32.mrf.mxu0
  %v224 = vadd.f32 0.0, %v223
  %v225 = vpop.f32.mrf.mxu0
  %v226 = vadd.f32 0.0, %v225
  %v227 = vpop.f32.mrf.mxu0
  %v228 = vadd.f32 0.0, %v227
  %v229 = vpop.f32.mrf.mxu0
  %v230 = vadd.f32 0.0, %v229
  %231 = vdwg.mxu0
  %v232 = vadd.f32 %v35, %v194
  %v233 = vadd.f32 %v36, %v196
  %v234 = vadd.f32 %v37, %v198
  %v235 = vadd.f32 %v38, %v200
  %v236 = vadd.f32 %v39, %v204
  %v237 = vadd.f32 %v40, %v206
  %v238 = vadd.f32 %v41, %v208
  %v239 = vadd.f32 %v42, %v210
  %v240 = vadd.f32 %v43, %v214
  %v241 = vadd.f32 %v44, %v216
  %v242 = vadd.f32 %v45, %v218
  %v243 = vadd.f32 %v46, %v220
  %v244 = vadd.f32 %v47, %v224
  %v245 = vadd.f32 %v48, %v226
  %v246 = vadd.f32 %v49, %v228
  %v247 = vadd.f32 %v50, %v230
  %248 = vst [vmem:[%s3] sm:$0xff] %v232
  %249 = vst [vmem:[%s3 + $0x8] sm:$0xff] %v233
  %250 = vst [vmem:[%s3 + $0x10] sm:$0xff] %v234
  %251 = vst [vmem:[%s3 + $0x18] sm:$0xff] %v235
  %252 = vst [vmem:[%s3 + $0x20] sm:$0xff] %v236
  %253 = vst [vmem:[%s3 + $0x28] sm:$0xff] %v237
  %254 = vst [vmem:[%s3 + $0x30] sm:$0xff] %v238
  %255 = vst [vmem:[%s3 + $0x38] sm:$0xff] %v239
  %256 = vst [vmem:[%s3 + $0x40] sm:$0xff] %v240
  %257 = vst [vmem:[%s3 + $0x48] sm:$0xff] %v241
  %258 = vst [vmem:[%s3 + $0x50] sm:$0xff] %v242
  %259 = vst [vmem:[%s3 + $0x58] sm:$0xff] %v243
  %260 = vst [vmem:[%s3 + $0x60] sm:$0xff] %v244
  %261 = vst [vmem:[%s3 + $0x68] sm:$0xff] %v245
  %262 = vst [vmem:[%s3 + $0x70] sm:$0xff] %v246
  %263 = vst [vmem:[%s3 + $0x78] sm:$0xff] %v247
  // Predicated region
  $region18: #{rnnlm_forward.9} parent=0 // pred_check
    %p264 = pneg %p15
  $region19: #{rnnlm_forward.9} parent=0 // pred_check_branch
    %266 = sbr.rel (%p264) target = $region21
  $region20: #{rnnlm_forward.9} parent=0 // pred_region
    %v267 = vld [vmem:[%s3] sm:$0xff]
    %v268 = vld [vmem:[%s3 + $0x8] sm:$0xff]
    %v269 = vld [vmem:[%s3 + $0x10] sm:$0xff]
    %v270 = vld [vmem:[%s3 + $0x18] sm:$0xff]
    %v271 = vld [vmem:[%s3 + $0x20] sm:$0xff]
    %v272 = vld [vmem:[%s3 + $0x28] sm:$0xff]
    %v273 = vld [vmem:[%s3 + $0x30] sm:$0xff]
    %v274 = vld [vmem:[%s3 + $0x38] sm:$0xff]
    %v275 = vld [vmem:[%s3 + $0x40] sm:$0xff]
    %v276 = vld [vmem:[%s3 + $0x48] sm:$0xff]
    %v277 = vld [vmem:[%s3 + $0x50] sm:$0xff]
    %v278 = vld [vmem:[%s3 + $0x58] sm:$0xff]
    %v279 = vld [vmem:[%s3 + $0x60] sm:$0xff]
    %v280 = vld [vmem:[%s3 + $0x68] sm:$0xff]
    %v281 = vld [vmem:[%s3 + $0x70] sm:$0xff]
    %v282 = vld [vmem:[%s3 + $0x78] sm:$0xff]
    %v283 = vld [vmem:[%s2] sm:$0x3]
    %v285 = vlaneseq
    %v286 = vshrl.u32 %v285, 7
    %v287 = vsub.s32 0, %v286
    %v288 = vrot.slane %v283, %v287
    %v289 = vlaneseq
    %v290 = vshrl.u32 %v289, 7
    %v291 = vsub.s32 1, %v290
    %v292 = vrot.slane %v283, %v291
    %v295 = vadd.f32 %v267, %v288
    %v296 = vadd.f32 %v268, %v292
    %v297 = vadd.f32 %v269, %v288
    %v298 = vadd.f32 %v270, %v292
    %v299 = vadd.f32 %v271, %v288
    %v300 = vadd.f32 %v272, %v292
    %v301 = vadd.f32 %v273, %v288
    %v302 = vadd.f32 %v274, %v292
    %v303 = vadd.f32 %v275, %v288
    %v304 = vadd.f32 %v276, %v292
    %v305 = vadd.f32 %v277, %v288
    %v306 = vadd.f32 %v278, %v292
    %v307 = vadd.f32 %v279, %v288
    %v308 = vadd.f32 %v280, %v292
    %v309 = vadd.f32 %v281, %v288
    %v310 = vadd.f32 %v282, %v292
    %311 = vst [vmem:[%s3] sm:$0xff] %v295
    %312 = vst [vmem:[%s3 + $0x8] sm:$0xff] %v296
    %313 = vst [vmem:[%s3 + $0x10] sm:$0xff] %v297
    %314 = vst [vmem:[%s3 + $0x18] sm:$0xff] %v298
    %315 = vst [vmem:[%s3 + $0x20] sm:$0xff] %v299
    %316 = vst [vmem:[%s3 + $0x28] sm:$0xff] %v300
    %317 = vst [vmem:[%s3 + $0x30] sm:$0xff] %v301
    %318 = vst [vmem:[%s3 + $0x38] sm:$0xff] %v302
    %319 = vst [vmem:[%s3 + $0x40] sm:$0xff] %v303
    %320 = vst [vmem:[%s3 + $0x48] sm:$0xff] %v304
    %321 = vst [vmem:[%s3 + $0x50] sm:$0xff] %v305
    %322 = vst [vmem:[%s3 + $0x58] sm:$0xff] %v306
    %323 = vst [vmem:[%s3 + $0x60] sm:$0xff] %v307
    %324 = vst [vmem:[%s3 + $0x68] sm:$0xff] %v308
    %325 = vst [vmem:[%s3 + $0x70] sm:$0xff] %v309
    %326 = vst [vmem:[%s3 + $0x78] sm:$0xff] %v310
  $region21: #{rnnlm_forward.9} parent=0 // pred_fallthru
    _
  // Predicated region
  $region22: #{rnnlm_forward.9} parent=0 // pred_check
    _
  $region23: #{rnnlm_forward.9} parent=0 // pred_check_branch
    %328 = sbr.rel (0) target = $region25
  $region24: #{rnnlm_forward.9} parent=0 // pred_region
    _
  $region25: #{rnnlm_forward.9} parent=0 // pred_fallthru
    _
  // Predicated region
  $region26: #{rnnlm_forward.9} parent=0 // pred_check
    _
  $region27: #{rnnlm_forward.9} parent=0 // pred_check_branch
    %330 = sbr.rel (0) target = $region29
  $region28: #{rnnlm_forward.9} parent=0 // pred_region
    _
  $region29: #{rnnlm_forward.9} parent=0 // pred_fallthru
    _

// kernel: rnnlm_forward.5
$region0: #{rnnlm_forward.5}
  #allocation0 [shape = 'u32[]', space=smem, size = 0x4, offset = 0x4, fixed_abs, tag = 'smem constant byte address 0x4 - core index']
  #allocation1 [shape = 'u32[144,128]{1,0:T(1,128)}', space=vmem, size = 0x12000, scoped, tag = 'internal scratch']
  #allocation2 [shape = 'f32[64,512]{1,0:T(8,128)}', space=vmem, size = 0x20000, scoped, tag = 'scratch operand']
  %s0 = inlined_call_operand.vmem [shape: f32[64,128], index: 0, kind: input, shape index: {}]
  %s1 = inlined_call_operand.vmem [shape: bf16[128,512], index: 1, kind: input, shape index: {}]
  %s2 = inlined_call_operand.vmem [shape: f32[1,512], index: 2, kind: input, shape index: {}]
  %s3 = inlined_call_operand.vmem [shape: bf16[64,512], index: 3, kind: output, shape index: {}]
  %s4 = sld [smem:[#allocation0]]
  $region30: #{rnnlm_forward.5} parent=0
    _
  %s6 = ssub.s32 1, %s4
  %s7 = scalar_select 0, %s6, %s4
  // Predicated region
  $region2: #{rnnlm_forward.5} parent=0 // pred_check
    _
  $region3: #{rnnlm_forward.5} parent=0 // pred_check_branch
    %9 = sbr.rel (0) target = $region5
  $region4: #{rnnlm_forward.5} parent=0 // pred_region
    _
  $region5: #{rnnlm_forward.5} parent=0 // pred_fallthru
    _
  // Predicated region
  $region6: #{rnnlm_forward.5} parent=0 // pred_check
    _
  $region7: #{rnnlm_forward.5} parent=0 // pred_check_branch
    %11 = sbr.rel (0) target = $region9
  $region8: #{rnnlm_forward.5} parent=0 // pred_region
    _
  $region9: #{rnnlm_forward.5} parent=0 // pred_fallthru
    _
  // Predicated region
  $region10: #{rnnlm_forward.5} parent=0 // pred_check
    _
  $region11: #{rnnlm_forward.5} parent=0 // pred_check_branch
    %13 = sbr.rel (0) target = $region13
  $region12: #{rnnlm_forward.5} parent=0 // pred_region
    _
  $region13: #{rnnlm_forward.5} parent=0 // pred_fallthru
    _
  %p15 = scmp.eq.s32.totalorder 0, 0
  // Predicated region
  $region14: #{rnnlm_forward.5} parent=0 // pred_check
    %p16 = pneg %p15
  $region15: #{rnnlm_forward.5} parent=0 // pred_check_branch
    %18 = sbr.rel (%p16) target = $region17
  $region16: #{rnnlm_forward.5} parent=0 // pred_region
    %19 = vst [vmem:[#allocation2] sm:$0xff] 0.0
    %20 = vst [vmem:[#allocation2 + $0x8] sm:$0xff] 0.0
    %21 = vst [vmem:[#allocation2 + $0x10] sm:$0xff] 0.0
    %22 = vst [vmem:[#allocation2 + $0x18] sm:$0xff] 0.0
    %23 = vst [vmem:[#allocation2 + $0x20] sm:$0xff] 0.0
    %24 = vst [vmem:[#allocation2 + $0x28] sm:$0xff] 0.0
    %25 = vst [vmem:[#allocation2 + $0x30] sm:$0xff] 0.0
    %26 = vst [vmem:[#allocation2 + $0x38] sm:$0xff] 0.0
    %27 = vst [vmem:[#allocation2 + $0x40] sm:$0xff] 0.0
    %28 = vst [vmem:[#allocation2 + $0x48] sm:$0xff] 0.0
    %29 = vst [vmem:[#allocation2 + $0x50] sm:$0xff] 0.0
    %30 = vst [vmem:[#allocation2 + $0x58] sm:$0xff] 0.0
    %31 = vst [vmem:[#allocation2 + $0x60] sm:$0xff] 0.0
    %32 = vst [vmem:[#allocation2 + $0x68] sm:$0xff] 0.0
    %33 = vst [vmem:[#allocation2 + $0x70] sm:$0xff] 0.0
    %34 = vst [vmem:[#allocation2 + $0x78] sm:$0xff] 0.0
    %35 = vst [vmem:[#allocation2 + $0x80] sm:$0xff] 0.0
    %36 = vst [vmem:[#allocation2 + $0x88] sm:$0xff] 0.0
    %37 = vst [vmem:[#allocation2 + $0x90] sm:$0xff] 0.0
    %38 = vst [vmem:[#allocation2 + $0x98] sm:$0xff] 0.0
    %39 = vst [vmem:[#allocation2 + $0xa0] sm:$0xff] 0.0
    %40 = vst [vmem:[#allocation2 + $0xa8] sm:$0xff] 0.0
    %41 = vst [vmem:[#allocation2 + $0xb0] sm:$0xff] 0.0
    %42 = vst [vmem:[#allocation2 + $0xb8] sm:$0xff] 0.0
    %43 = vst [vmem:[#allocation2 + $0xc0] sm:$0xff] 0.0
    %44 = vst [vmem:[#allocation2 + $0xc8] sm:$0xff] 0.0
    %45 = vst [vmem:[#allocation2 + $0xd0] sm:$0xff] 0.0
    %46 = vst [vmem:[#allocation2 + $0xd8] sm:$0xff] 0.0
    %47 = vst [vmem:[#allocation2 + $0xe0] sm:$0xff] 0.0
    %48 = vst [vmem:[#allocation2 + $0xe8] sm:$0xff] 0.0
    %49 = vst [vmem:[#allocation2 + $0xf0] sm:$0xff] 0.0
    %50 = vst [vmem:[#allocation2 + $0xf8] sm:$0xff] 0.0
  $region17: #{rnnlm_forward.5} parent=0 // pred_fallthru
    _
  %v51 = vld [vmem:[#allocation2] sm:$0xff]
  %v52 = vld [vmem:[#allocation2 + $0x8] sm:$0xff]
  %v53 = vld [vmem:[#allocation2 + $0x10] sm:$0xff]
  %v54 = vld [vmem:[#allocation2 + $0x18] sm:$0xff]
  %v55 = vld [vmem:[#allocation2 + $0x20] sm:$0xff]
  %v56 = vld [vmem:[#allocation2 + $0x28] sm:$0xff]
  %v57 = vld [vmem:[#allocation2 + $0x30] sm:$0xff]
  %v58 = vld [vmem:[#allocation2 + $0x38] sm:$0xff]
  %v59 = vld [vmem:[#allocation2 + $0x40] sm:$0xff]
  %v60 = vld [vmem:[#allocation2 + $0x48] sm:$0xff]
  %v61 = vld [vmem:[#allocation2 + $0x50] sm:$0xff]
  %v62 = vld [vmem:[#allocation2 + $0x58] sm:$0xff]
  %v63 = vld [vmem:[#allocation2 + $0x60] sm:$0xff]
  %v64 = vld [vmem:[#allocation2 + $0x68] sm:$0xff]
  %v65 = vld [vmem:[#allocation2 + $0x70] sm:$0xff]
  %v66 = vld [vmem:[#allocation2 + $0x78] sm:$0xff]
  %v67 = vld [vmem:[#allocation2 + $0x80] sm:$0xff]
  %v68 = vld [vmem:[#allocation2 + $0x88] sm:$0xff]
  %v69 = vld [vmem:[#allocation2 + $0x90] sm:$0xff]
  %v70 = vld [vmem:[#allocation2 + $0x98] sm:$0xff]
  %v71 = vld [vmem:[#allocation2 + $0xa0] sm:$0xff]
  %v72 = vld [vmem:[#allocation2 + $0xa8] sm:$0xff]
  %v73 = vld [vmem:[#allocation2 + $0xb0] sm:$0xff]
  %v74 = vld [vmem:[#allocation2 + $0xb8] sm:$0xff]
  %v75 = vld [vmem:[#allocation2 + $0xc0] sm:$0xff]
  %v76 = vld [vmem:[#allocation2 + $0xc8] sm:$0xff]
  %v77 = vld [vmem:[#allocation2 + $0xd0] sm:$0xff]
  %v78 = vld [vmem:[#allocation2 + $0xd8] sm:$0xff]
  %v79 = vld [vmem:[#allocation2 + $0xe0] sm:$0xff]
  %v80 = vld [vmem:[#allocation2 + $0xe8] sm:$0xff]
  %v81 = vld [vmem:[#allocation2 + $0xf0] sm:$0xff]
  %v82 = vld [vmem:[#allocation2 + $0xf8] sm:$0xff]
  %v83 = vld [vmem:[%s0] sm:$0xff]
  %v84 = vld [vmem:[%s0 + $0x8] sm:$0xff]
  %v85 = vld [vmem:[%s0 + $0x10] sm:$0xff]
  %v86 = vld [vmem:[%s0 + $0x18] sm:$0xff]
  %v87 = vld [vmem:[%s0 + $0x20] sm:$0xff]
  %v88 = vld [vmem:[%s0 + $0x28] sm:$0xff]
  %v89 = vld [vmem:[%s0 + $0x30] sm:$0xff]
  %v90 = vld [vmem:[%s0 + $0x38] sm:$0xff]
  %v91 = vpack.c.bf16 %v84, %v83
  %v92 = vpack.c.bf16 %v86, %v85
  %v93 = vpack.c.bf16 %v88, %v87
  %v94 = vpack.c.bf16 %v90, %v89
  %v95 = vld [vmem:[%s1] sm:$0xff]
  %v96 = vld [vmem:[%s1 + $0x8] sm:$0xff]
  %v97 = vld [vmem:[%s1 + $0x10] sm:$0xff]
  %v98 = vld [vmem:[%s1 + $0x18] sm:$0xff]
  %v99 = vld [vmem:[%s1 + $0x20] sm:$0xff]
  %v100 = vld [vmem:[%s1 + $0x28] sm:$0xff]
  %v101 = vld [vmem:[%s1 + $0x30] sm:$0xff]
  %v102 = vld [vmem:[%s1 + $0x38] sm:$0xff]
  %v103 = vld [vmem:[%s1 + $0x40] sm:$0xff]
  %v104 = vld [vmem:[%s1 + $0x48] sm:$0xff]
  %v105 = vld [vmem:[%s1 + $0x50] sm:$0xff]
  %v106 = vld [vmem:[%s1 + $0x58] sm:$0xff]
  %v107 = vld [vmem:[%s1 + $0x60] sm:$0xff]
  %v108 = vld [vmem:[%s1 + $0x68] sm:$0xff]
  %v109 = vld [vmem:[%s1 + $0x70] sm:$0xff]
  %v110 = vld [vmem:[%s1 + $0x78] sm:$0xff]
  %v111 = vld [vmem:[%s1 + $0x80] sm:$0xff]
  %v112 = vld [vmem:[%s1 + $0x88] sm:$0xff]
  %v113 = vld [vmem:[%s1 + $0x90] sm:$0xff]
  %v114 = vld [vmem:[%s1 + $0x98] sm:$0xff]
  %v115 = vld [vmem:[%s1 + $0xa0] sm:$0xff]
  %v116 = vld [vmem:[%s1 + $0xa8] sm:$0xff]
  %v117 = vld [vmem:[%s1 + $0xb0] sm:$0xff]
  %v118 = vld [vmem:[%s1 + $0xb8] sm:$0xff]
  %v119 = vld [vmem:[%s1 + $0xc0] sm:$0xff]
  %v120 = vld [vmem:[%s1 + $0xc8] sm:$0xff]
  %v121 = vld [vmem:[%s1 + $0xd0] sm:$0xff]
  %v122 = vld [vmem:[%s1 + $0xd8] sm:$0xff]
  %v123 = vld [vmem:[%s1 + $0xe0] sm:$0xff]
  %v124 = vld [vmem:[%s1 + $0xe8] sm:$0xff]
  %v125 = vld [vmem:[%s1 + $0xf0] sm:$0xff]
  %v126 = vld [vmem:[%s1 + $0xf8] sm:$0xff]
  %v159 = vunpack.c.l.b16 %v95
  %v160 = vunpack.c.h.b16 %v95
  %v161 = vunpack.c.l.b16 %v96
  %v162 = vunpack.c.h.b16 %v96
  %v163 = vunpack.c.l.b16 %v97
  %v164 = vunpack.c.h.b16 %v97
  %v165 = vunpack.c.l.b16 %v98
  %v166 = vunpack.c.h.b16 %v98
  %v167 = vunpack.c.l.b16 %v99
  %v168 = vunpack.c.h.b16 %v99
  %v169 = vunpack.c.l.b16 %v100
  %v170 = vunpack.c.h.b16 %v100
  %v171 = vunpack.c.l.b16 %v101
  %v172 = vunpack.c.h.b16 %v101
  %v173 = vunpack.c.l.b16 %v102
  %v174 = vunpack.c.h.b16 %v102
  %v175 = vunpack.c.l.b16 %v103
  %v176 = vunpack.c.h.b16 %v103
  %v177 = vunpack.c.l.b16 %v104
  %v178 = vunpack.c.h.b16 %v104
  %v179 = vunpack.c.l.b16 %v105
  %v180 = vunpack.c.h.b16 %v105
  %v181 = vunpack.c.l.b16 %v106
  %v182 = vunpack.c.h.b16 %v106
  %v183 = vunpack.c.l.b16 %v107
  %v184 = vunpack.c.h.b16 %v107
  %v185 = vunpack.c.l.b16 %v108
  %v186 = vunpack.c.h.b16 %v108
  %v187 = vunpack.c.l.b16 %v109
  %v188 = vunpack.c.h.b16 %v109
  %v189 = vunpack.c.l.b16 %v110
  %v190 = vunpack.c.h.b16 %v110
  %v191 = vunpack.c.l.b16 %v111
  %v192 = vunpack.c.h.b16 %v111
  %v193 = vunpack.c.l.b16 %v112
  %v194 = vunpack.c.h.b16 %v112
  %v195 = vunpack.c.l.b16 %v113
  %v196 = vunpack.c.h.b16 %v113
  %v197 = vunpack.c.l.b16 %v114
  %v198 = vunpack.c.h.b16 %v114
  %v199 = vunpack.c.l.b16 %v115
  %v200 = vunpack.c.h.b16 %v115
  %v201 = vunpack.c.l.b16 %v116
  %v202 = vunpack.c.h.b16 %v116
  %v203 = vunpack.c.l.b16 %v117
  %v204 = vunpack.c.h.b16 %v117
  %v205 = vunpack.c.l.b16 %v118
  %v206 = vunpack.c.h.b16 %v118
  %v207 = vunpack.c.l.b16 %v119
  %v208 = vunpack.c.h.b16 %v119
  %v209 = vunpack.c.l.b16 %v120
  %v210 = vunpack.c.h.b16 %v120
  %v211 = vunpack.c.l.b16 %v121
  %v212 = vunpack.c.h.b16 %v121
  %v213 = vunpack.c.l.b16 %v122
  %v214 = vunpack.c.h.b16 %v122
  %v215 = vunpack.c.l.b16 %v123
  %v216 = vunpack.c.h.b16 %v123
  %v217 = vunpack.c.l.b16 %v124
  %v218 = vunpack.c.h.b16 %v124
  %v219 = vunpack.c.l.b16 %v125
  %v220 = vunpack.c.h.b16 %v125
  %v221 = vunpack.c.l.b16 %v126
  %v222 = vunpack.c.h.b16 %v126
  %v223 = vpack.c.b16 %v163, %v159
  %v224 = vpack.c.b16 %v164, %v160
  %v225 = vpack.c.b16 %v165, %v161
  %v226 = vpack.c.b16 %v166, %v162
  %v227 = vpack.c.b16 %v171, %v167
  %v228 = vpack.c.b16 %v172, %v168
  %v229 = vpack.c.b16 %v173, %v169
  %v230 = vpack.c.b16 %v174, %v170
  %v231 = vpack.c.b16 %v179, %v175
  %v232 = vpack.c.b16 %v180, %v176
  %v233 = vpack.c.b16 %v181, %v177
  %v234 = vpack.c.b16 %v182, %v178
  %v235 = vpack.c.b16 %v187, %v183
  %v236 = vpack.c.b16 %v188, %v184
  %v237 = vpack.c.b16 %v189, %v185
  %v238 = vpack.c.b16 %v190, %v186
  %v239 = vpack.c.b16 %v195, %v191
  %v240 = vpack.c.b16 %v196, %v192
  %v241 = vpack.c.b16 %v197, %v193
  %v242 = vpack.c.b16 %v198, %v194
  %v243 = vpack.c.b16 %v203, %v199
  %v244 = vpack.c.b16 %v204, %v200
  %v245 = vpack.c.b16 %v205, %v201
  %v246 = vpack.c.b16 %v206, %v202
  %v247 = vpack.c.b16 %v211, %v207
  %v248 = vpack.c.b16 %v212, %v208
  %v249 = vpack.c.b16 %v213, %v209
  %v250 = vpack.c.b16 %v214, %v210
  %v251 = vpack.c.b16 %v219, %v215
  %v252 = vpack.c.b16 %v220, %v216
  %v253 = vpack.c.b16 %v221, %v217
  %v254 = vpack.c.b16 %v222, %v218
  %287 = vmatprep.subr.bf16.mxu0 %v252
  %288 = vmatpush1.bf16.msra.mxu0 %v251
  %289 = vmatprep.subr.bf16.mxu0 %v248
  %290 = vmatpush1.bf16.msra.mxu0 %v247
  %291 = vmatprep.subr.bf16.mxu0 %v244
  %292 = vmatpush1.bf16.msra.mxu0 %v243
  %293 = vmatprep.subr.bf16.mxu0 %v240
  %294 = vmatpush1.bf16.msra.mxu0 %v239
  %295 = vmatprep.subr.bf16.mxu0 %v236
  %296 = vmatpush1.bf16.msra.mxu0 %v235
  %297 = vmatprep.subr.bf16.mxu0 %v232
  %298 = vmatpush1.bf16.msra.mxu0 %v231
  %299 = vmatprep.subr.bf16.mxu0 %v228
  %300 = vmatpush1.bf16.msra.mxu0 %v227
  %301 = vmatprep.subr.bf16.mxu0 %v224
  %302 = vmatpush1.bf16.msra.mxu0 %v223
  %303 = vmatprep.subr.bf16.mxu0 0
  %304 = vmatpush2.bf16.msra.mxu0 0
  %305 = vmatprep.subr.bf16.mxu0 0
  %306 = vmatpush2.bf16.msra.mxu0 0
  %307 = vmatprep.subr.bf16.mxu0 0
  %308 = vmatpush2.bf16.msra.mxu0 0
  %309 = vmatprep.subr.bf16.mxu0 0
  %310 = vmatpush2.bf16.msra.mxu0 0
  %311 = vmatprep.subr.bf16.mxu0 0
  %312 = vmatpush2.bf16.msra.mxu0 0
  %313 = vmatprep.subr.bf16.mxu0 0
  %314 = vmatpush2.bf16.msra.mxu0 0
  %315 = vmatprep.subr.bf16.mxu0 0
  %316 = vmatpush2.bf16.msra.mxu0 0
  %317 = vmatprep.subr.bf16.mxu0 0
  %318 = vmatpush2.bf16.msra.mxu0 0
  %319 = vmatprep.mubr.bf16.mxu0 0
  %320 = vmatmul.mubr.bf16.gmra.mxu0 %v91
  %v321 = vpop.f32.mrf.mxu0
  %v322 = vadd.f32 0.0, %v321
  %v323 = vpop.f32.mrf.mxu0
  %v324 = vadd.f32 0.0, %v323
  %v325 = vpop.f32.mrf.mxu0
  %v326 = vadd.f32 0.0, %v325
  %v327 = vpop.f32.mrf.mxu0
  %v328 = vadd.f32 0.0, %v327
  %329 = vmatprep.mubr.bf16.mxu0 0
  %330 = vmatmul.mubr.bf16.gmra.mxu0 %v92
  %v331 = vpop.f32.mrf.mxu0
  %v332 = vadd.f32 0.0, %v331
  %v333 = vpop.f32.mrf.mxu0
  %v334 = vadd.f32 0.0, %v333
  %v335 = vpop.f32.mrf.mxu0
  %v336 = vadd.f32 0.0, %v335
  %v337 = vpop.f32.mrf.mxu0
  %v338 = vadd.f32 0.0, %v337
  %339 = vmatprep.mubr.bf16.mxu0 0
  %340 = vmatmul.mubr.bf16.gmra.mxu0 %v93
  %v341 = vpop.f32.mrf.mxu0
  %v342 = vadd.f32 0.0, %v341
  %v343 = vpop.f32.mrf.mxu0
  %v344 = vadd.f32 0.0, %v343
  %v345 = vpop.f32.mrf.mxu0
  %v346 = vadd.f32 0.0, %v345
  %v347 = vpop.f32.mrf.mxu0
  %v348 = vadd.f32 0.0, %v347
  %349 = vmatprep.mubr.bf16.mxu0 0
  %350 = vmatmul.mubr.bf16.gmra.mxu0 %v94
  %v351 = vpop.f32.mrf.mxu0
  %v352 = vadd.f32 0.0, %v351
  %v353 = vpop.f32.mrf.mxu0
  %v354 = vadd.f32 0.0, %v353
  %v355 = vpop.f32.mrf.mxu0
  %v356 = vadd.f32 0.0, %v355
  %v357 = vpop.f32.mrf.mxu0
  %v358 = vadd.f32 0.0, %v357
  %359 = vdwg.mxu0
  %360 = vmatprep.subr.bf16.mxu0 %v254
  %361 = vmatpush1.bf16.msra.mxu0 %v253
  %362 = vmatprep.subr.bf16.mxu0 %v250
  %363 = vmatpush1.bf16.msra.mxu0 %v249
  %364 = vmatprep.subr.bf16.mxu0 %v246
  %365 = vmatpush1.bf16.msra.mxu0 %v245
  %366 = vmatprep.subr.bf16.mxu0 %v242
  %367 = vmatpush1.bf16.msra.mxu0 %v241
  %368 = vmatprep.subr.bf16.mxu0 %v238
  %369 = vmatpush1.bf16.msra.mxu0 %v237
  %370 = vmatprep.subr.bf16.mxu0 %v234
  %371 = vmatpush1.bf16.msra.mxu0 %v233
  %372 = vmatprep.subr.bf16.mxu0 %v230
  %373 = vmatpush1.bf16.msra.mxu0 %v229
  %374 = vmatprep.subr.bf16.mxu0 %v226
  %375 = vmatpush1.bf16.msra.mxu0 %v225
  %376 = vmatprep.subr.bf16.mxu0 0
  %377 = vmatpush2.bf16.msra.mxu0 0
  %378 = vmatprep.subr.bf16.mxu0 0
  %379 = vmatpush2.bf16.msra.mxu0 0
  %380 = vmatprep.subr.bf16.mxu0 0
  %381 = vmatpush2.bf16.msra.mxu0 0
  %382 = vmatprep.subr.bf16.mxu0 0
  %383 = vmatpush2.bf16.msra.mxu0 0
  %384 = vmatprep.subr.bf16.mxu0 0
  %385 = vmatpush2.bf16.msra.mxu0 0
  %386 = vmatprep.subr.bf16.mxu0 0
  %387 = vmatpush2.bf16.msra.mxu0 0
  %388 = vmatprep.subr.bf16.mxu0 0
  %389 = vmatpush2.bf16.msra.mxu0 0
  %390 = vmatprep.subr.bf16.mxu0 0
  %391 = vmatpush2.bf16.msra.mxu0 0
  %392 = vmatprep.mubr.bf16.mxu0 0
  %393 = vmatmul.mubr.bf16.gmra.mxu0 %v91
  %v394 = vpop.f32.mrf.mxu0
  %v395 = vadd.f32 0.0, %v394
  %v396 = vpop.f32.mrf.mxu0
  %v397 = vadd.f32 0.0, %v396
  %v398 = vpop.f32.mrf.mxu0
  %v399 = vadd.f32 0.0, %v398
  %v400 = vpop.f32.mrf.mxu0
  %v401 = vadd.f32 0.0, %v400
  %402 = vmatprep.mubr.bf16.mxu0 0
  %403 = vmatmul.mubr.bf16.gmra.mxu0 %v92
  %v404 = vpop.f32.mrf.mxu0
  %v405 = vadd.f32 0.0, %v404
  %v406 = vpop.f32.mrf.mxu0
  %v407 = vadd.f32 0.0, %v406
  %v408 = vpop.f32.mrf.mxu0
  %v409 = vadd.f32 0.0, %v408
  %v410 = vpop.f32.mrf.mxu0
  %v411 = vadd.f32 0.0, %v410
  %412 = vmatprep.mubr.bf16.mxu0 0
  %413 = vmatmul.mubr.bf16.gmra.mxu0 %v93
  %v414 = vpop.f32.mrf.mxu0
  %v415 = vadd.f32 0.0, %v414
  %v416 = vpop.f32.mrf.mxu0
  %v417 = vadd.f32 0.0, %v416
  %v418 = vpop.f32.mrf.mxu0
  %v419 = vadd.f32 0.0, %v418
  %v420 = vpop.f32.mrf.mxu0
  %v421 = vadd.f32 0.0, %v420
  %422 = vmatprep.mubr.bf16.mxu0 0
  %423 = vmatmul.mubr.bf16.gmra.mxu0 %v94
  %v424 = vpop.f32.mrf.mxu0
  %v425 = vadd.f32 0.0, %v424
  %v426 = vpop.f32.mrf.mxu0
  %v427 = vadd.f32 0.0, %v426
  %v428 = vpop.f32.mrf.mxu0
  %v429 = vadd.f32 0.0, %v428
  %v430 = vpop.f32.mrf.mxu0
  %v431 = vadd.f32 0.0, %v430
  %432 = vdwg.mxu0
  %v433 = vadd.f32 %v51, %v322
  %v434 = vadd.f32 %v52, %v324
  %v435 = vadd.f32 %v53, %v395
  %v436 = vadd.f32 %v54, %v397
  %v437 = vadd.f32 %v55, %v326
  %v438 = vadd.f32 %v56, %v328
  %v439 = vadd.f32 %v57, %v399
  %v440 = vadd.f32 %v58, %v401
  %v441 = vadd.f32 %v59, %v332
  %v442 = vadd.f32 %v60, %v334
  %v443 = vadd.f32 %v61, %v405
  %v444 = vadd.f32 %v62, %v407
  %v445 = vadd.f32 %v63, %v336
  %v446 = vadd.f32 %v64, %v338
  %v447 = vadd.f32 %v65, %v409
  %v448 = vadd.f32 %v66, %v411
  %v449 = vadd.f32 %v67, %v342
  %v450 = vadd.f32 %v68, %v344
  %v451 = vadd.f32 %v69, %v415
  %v452 = vadd.f32 %v70, %v417
  %v453 = vadd.f32 %v71, %v346
  %v454 = vadd.f32 %v72, %v348
  %v455 = vadd.f32 %v73, %v419
  %v456 = vadd.f32 %v74, %v421
  %v457 = vadd.f32 %v75, %v352
  %v458 = vadd.f32 %v76, %v354
  %v459 = vadd.f32 %v77, %v425
  %v460 = vadd.f32 %v78, %v427
  %v461 = vadd.f32 %v79, %v356
  %v462 = vadd.f32 %v80, %v358
  %v463 = vadd.f32 %v81, %v429
  %v464 = vadd.f32 %v82, %v431
  %465 = vst [vmem:[#allocation2] sm:$0xff] %v433
  %466 = vst [vmem:[#allocation2 + $0x8] sm:$0xff] %v434
  %467 = vst [vmem:[#allocation2 + $0x10] sm:$0xff] %v435
  %468 = vst [vmem:[#allocation2 + $0x18] sm:$0xff] %v436
  %469 = vst [vmem:[#allocation2 + $0x20] sm:$0xff] %v437
  %470 = vst [vmem:[#allocation2 + $0x28] sm:$0xff] %v438
  %471 = vst [vmem:[#allocation2 + $0x30] sm:$0xff] %v439
  %472 = vst [vmem:[#allocation2 + $0x38] sm:$0xff] %v440
  %473 = vst [vmem:[#allocation2 + $0x40] sm:$0xff] %v441
  %474 = vst [vmem:[#allocation2 + $0x48] sm:$0xff] %v442
  %475 = vst [vmem:[#allocation2 + $0x50] sm:$0xff] %v443
  %476 = vst [vmem:[#allocation2 + $0x58] sm:$0xff] %v444
  %477 = vst [vmem:[#allocation2 + $0x60] sm:$0xff] %v445
  %478 = vst [vmem:[#allocation2 + $0x68] sm:$0xff] %v446
  %479 = vst [vmem:[#allocation2 + $0x70] sm:$0xff] %v447
  %480 = vst [vmem:[#allocation2 + $0x78] sm:$0xff] %v448
  %481 = vst [vmem:[#allocation2 + $0x80] sm:$0xff] %v449
  %482 = vst [vmem:[#allocation2 + $0x88] sm:$0xff] %v450
  %483 = vst [vmem:[#allocation2 + $0x90] sm:$0xff] %v451
  %484 = vst [vmem:[#allocation2 + $0x98] sm:$0xff] %v452
  %485 = vst [vmem:[#allocation2 + $0xa0] sm:$0xff] %v453
  %486 = vst [vmem:[#allocation2 + $0xa8] sm:$0xff] %v454
  %487 = vst [vmem:[#allocation2 + $0xb0] sm:$0xff] %v455
  %488 = vst [vmem:[#allocation2 + $0xb8] sm:$0xff] %v456
  %489 = vst [vmem:[#allocation2 + $0xc0] sm:$0xff] %v457
  %490 = vst [vmem:[#allocation2 + $0xc8] sm:$0xff] %v458
  %491 = vst [vmem:[#allocation2 + $0xd0] sm:$0xff] %v459
  %492 = vst [vmem:[#allocation2 + $0xd8] sm:$0xff] %v460
  %493 = vst [vmem:[#allocation2 + $0xe0] sm:$0xff] %v461
  %494 = vst [vmem:[#allocation2 + $0xe8] sm:$0xff] %v462
  %495 = vst [vmem:[#allocation2 + $0xf0] sm:$0xff] %v463
  %496 = vst [vmem:[#allocation2 + $0xf8] sm:$0xff] %v464
  // Predicated region
  $region18: #{rnnlm_forward.5} parent=0 // pred_check
    %p497 = pneg %p15
  $region19: #{rnnlm_forward.5} parent=0 // pred_check_branch
    %499 = sbr.rel (%p497) target = $region21
  $region20: #{rnnlm_forward.5} parent=0 // pred_region
    %v500 = vld [vmem:[#allocation2] sm:$0xff]
    %v501 = vld [vmem:[#allocation2 + $0x8] sm:$0xff]
    %v502 = vld [vmem:[#allocation2 + $0x10] sm:$0xff]
    %v503 = vld [vmem:[#allocation2 + $0x18] sm:$0xff]
    %v504 = vld [vmem:[#allocation2 + $0x20] sm:$0xff]
    %v505 = vld [vmem:[#allocation2 + $0x28] sm:$0xff]
    %v506 = vld [vmem:[#allocation2 + $0x30] sm:$0xff]
    %v507 = vld [vmem:[#allocation2 + $0x38] sm:$0xff]
    %v508 = vld [vmem:[#allocation2 + $0x40] sm:$0xff]
    %v509 = vld [vmem:[#allocation2 + $0x48] sm:$0xff]
    %v510 = vld [vmem:[#allocation2 + $0x50] sm:$0xff]
    %v511 = vld [vmem:[#allocation2 + $0x58] sm:$0xff]
    %v512 = vld [vmem:[#allocation2 + $0x60] sm:$0xff]
    %v513 = vld [vmem:[#allocation2 + $0x68] sm:$0xff]
    %v514 = vld [vmem:[#allocation2 + $0x70] sm:$0xff]
    %v515 = vld [vmem:[#allocation2 + $0x78] sm:$0xff]
    %v516 = vld [vmem:[#allocation2 + $0x80] sm:$0xff]
    %v517 = vld [vmem:[#allocation2 + $0x88] sm:$0xff]
    %v518 = vld [vmem:[#allocation2 + $0x90] sm:$0xff]
    %v519 = vld [vmem:[#allocation2 + $0x98] sm:$0xff]
    %v520 = vld [vmem:[#allocation2 + $0xa0] sm:$0xff]
    %v521 = vld [vmem:[#allocation2 + $0xa8] sm:$0xff]
    %v522 = vld [vmem:[#allocation2 + $0xb0] sm:$0xff]
    %v523 = vld [vmem:[#allocation2 + $0xb8] sm:$0xff]
    %v524 = vld [vmem:[#allocation2 + $0xc0] sm:$0xff]
    %v525 = vld [vmem:[#allocation2 + $0xc8] sm:$0xff]
    %v526 = vld [vmem:[#allocation2 + $0xd0] sm:$0xff]
    %v527 = vld [vmem:[#allocation2 + $0xd8] sm:$0xff]
    %v528 = vld [vmem:[#allocation2 + $0xe0] sm:$0xff]
    %v529 = vld [vmem:[#allocation2 + $0xe8] sm:$0xff]
    %v530 = vld [vmem:[#allocation2 + $0xf0] sm:$0xff]
    %v531 = vld [vmem:[#allocation2 + $0xf8] sm:$0xff]
    %v532 = vld [vmem:[%s2] sm:$0xf]
    %v534 = vlaneseq
    %v535 = vshrl.u32 %v534, 7
    %v536 = vsub.s32 0, %v535
    %v537 = vrot.slane %v532, %v536
    %v538 = vlaneseq
    %v539 = vshrl.u32 %v538, 7
    %v540 = vsub.s32 1, %v539
    %v541 = vrot.slane %v532, %v540
    %v542 = vlaneseq
    %v543 = vshrl.u32 %v542, 7
    %v544 = vsub.s32 2, %v543
    %v545 = vrot.slane %v532, %v544
    %v546 = vlaneseq
    %v547 = vshrl.u32 %v546, 7
    %v548 = vsub.s32 3, %v547
    %v549 = vrot.slane %v532, %v548
    %v554 = vadd.f32 %v500, %v537
    %v555 = vadd.f32 %v501, %v541
    %v556 = vadd.f32 %v502, %v545
    %v557 = vadd.f32 %v503, %v549
    %v558 = vadd.f32 %v504, %v537
    %v559 = vadd.f32 %v505, %v541
    %v560 = vadd.f32 %v506, %v545
    %v561 = vadd.f32 %v507, %v549
    %v562 = vadd.f32 %v508, %v537
    %v563 = vadd.f32 %v509, %v541
    %v564 = vadd.f32 %v510, %v545
    %v565 = vadd.f32 %v511, %v549
    %v566 = vadd.f32 %v512, %v537
    %v567 = vadd.f32 %v513, %v541
    %v568 = vadd.f32 %v514, %v545
    %v569 = vadd.f32 %v515, %v549
    %v570 = vadd.f32 %v516, %v537
    %v571 = vadd.f32 %v517, %v541
    %v572 = vadd.f32 %v518, %v545
    %v573 = vadd.f32 %v519, %v549
    %v574 = vadd.f32 %v520, %v537
    %v575 = vadd.f32 %v521, %v541
    %v576 = vadd.f32 %v522, %v545
    %v577 = vadd.f32 %v523, %v549
    %v578 = vadd.f32 %v524, %v537
    %v579 = vadd.f32 %v525, %v541
    %v580 = vadd.f32 %v526, %v545
    %v581 = vadd.f32 %v527, %v549
    %v582 = vadd.f32 %v528, %v537
    %v583 = vadd.f32 %v529, %v541
    %v584 = vadd.f32 %v530, %v545
    %v585 = vadd.f32 %v531, %v549
    %v586 = vpack.c.bf16 %v558, %v554
    %v587 = vpack.c.bf16 %v559, %v555
    %v588 = vpack.c.bf16 %v560, %v556
    %v589 = vpack.c.bf16 %v561, %v557
    %v590 = vpack.c.bf16 %v566, %v562
    %v591 = vpack.c.bf16 %v567, %v563
    %v592 = vpack.c.bf16 %v568, %v564
    %v593 = vpack.c.bf16 %v569, %v565
    %v594 = vpack.c.bf16 %v574, %v570
    %v595 = vpack.c.bf16 %v575, %v571
    %v596 = vpack.c.bf16 %v576, %v572
    %v597 = vpack.c.bf16 %v577, %v573
    %v598 = vpack.c.bf16 %v582, %v578
    %v599 = vpack.c.bf16 %v583, %v579
    %v600 = vpack.c.bf16 %v584, %v580
    %v601 = vpack.c.bf16 %v585, %v581
    %v618 = vunpack.c.l.b16 %v586
    %v619 = vunpack.c.l.b16 %v587
    %v620 = vunpack.c.l.b16 %v588
    %v621 = vunpack.c.l.b16 %v589
    %v622 = vunpack.c.h.b16 %v586
    %v623 = vunpack.c.h.b16 %v587
    %v624 = vunpack.c.h.b16 %v588
    %v625 = vunpack.c.h.b16 %v589
    %v626 = vunpack.c.l.b16 %v590
    %v627 = vunpack.c.l.b16 %v591
    %v628 = vunpack.c.l.b16 %v592
    %v629 = vunpack.c.l.b16 %v593
    %v630 = vunpack.c.h.b16 %v590
    %v631 = vunpack.c.h.b16 %v591
    %v632 = vunpack.c.h.b16 %v592
    %v633 = vunpack.c.h.b16 %v593
    %v634 = vunpack.c.l.b16 %v594
    %v635 = vunpack.c.l.b16 %v595
    %v636 = vunpack.c.l.b16 %v596
    %v637 = vunpack.c.l.b16 %v597
    %v638 = vunpack.c.h.b16 %v594
    %v639 = vunpack.c.h.b16 %v595
    %v640 = vunpack.c.h.b16 %v596
    %v641 = vunpack.c.h.b16 %v597
    %v642 = vunpack.c.l.b16 %v598
    %v643 = vunpack.c.l.b16 %v599
    %v644 = vunpack.c.l.b16 %v600
    %v645 = vunpack.c.l.b16 %v601
    %v646 = vunpack.c.h.b16 %v598
    %v647 = vunpack.c.h.b16 %v599
    %v648 = vunpack.c.h.b16 %v600
    %v649 = vunpack.c.h.b16 %v601
    %v650 = vpack.c.b16 %v619, %v618
    %v651 = vpack.c.b16 %v621, %v620
    %v652 = vpack.c.b16 %v623, %v622
    %v653 = vpack.c.b16 %v625, %v624
    %v654 = vpack.c.b16 %v627, %v626
    %v655 = vpack.c.b16 %v629, %v628
    %v656 = vpack.c.b16 %v631, %v630
    %v657 = vpack.c.b16 %v633, %v632
    %v658 = vpack.c.b16 %v635, %v634
    %v659 = vpack.c.b16 %v637, %v636
    %v660 = vpack.c.b16 %v639, %v638
    %v661 = vpack.c.b16 %v641, %v640
    %v662 = vpack.c.b16 %v643, %v642
    %v663 = vpack.c.b16 %v645, %v644
    %v664 = vpack.c.b16 %v647, %v646
    %v665 = vpack.c.b16 %v649, %v648
    %682 = vst [vmem:[%s3] sm:$0xff] %v650
    %683 = vst [vmem:[%s3 + $0x8] sm:$0xff] %v651
    %684 = vst [vmem:[%s3 + $0x10] sm:$0xff] %v652
    %685 = vst [vmem:[%s3 + $0x18] sm:$0xff] %v653
    %686 = vst [vmem:[%s3 + $0x20] sm:$0xff] %v654
    %687 = vst [vmem:[%s3 + $0x28] sm:$0xff] %v655
    %688 = vst [vmem:[%s3 + $0x30] sm:$0xff] %v656
    %689 = vst [vmem:[%s3 + $0x38] sm:$0xff] %v657
    %690 = vst [vmem:[%s3 + $0x40] sm:$0xff] %v658
    %691 = vst [vmem:[%s3 + $0x48] sm:$0xff] %v659
    %692 = vst [vmem:[%s3 + $0x50] sm:$0xff] %v660
    %693 = vst [vmem:[%s3 + $0x58] sm:$0xff] %v661
    %694 = vst [vmem:[%s3 + $0x60] sm:$0xff] %v662
    %695 = vst [vmem:[%s3 + $0x68] sm:$0xff] %v663
    %696 = vst [vmem:[%s3 + $0x70] sm:$0xff] %v664
    %697 = vst [vmem:[%s3 + $0x78] sm:$0xff] %v665
  $region21: #{rnnlm_forward.5} parent=0 // pred_fallthru
    _
  // Predicated region
  $region22: #{rnnlm_forward.5} parent=0 // pred_check
    _
  $region23: #{rnnlm_forward.5} parent=0 // pred_check_branch
    %699 = sbr.rel (0) target = $region25
  $region24: #{rnnlm_forward.5} parent=0 // pred_region
    _
  $region25: #{rnnlm_forward.5} parent=0 // pred_fallthru
    _
  // Predicated region
  $region26: #{rnnlm_forward.5} parent=0 // pred_check
    _
  $region27: #{rnnlm_forward.5} parent=0 // pred_check_branch
    %701 = sbr.rel (0) target = $region29
  $region28: #{rnnlm_forward.5} parent=0 // pred_region
    _
  $region29: #{rnnlm_forward.5} parent=0 // pred_fallthru
    _

// kernel: rnnlm_forward.6
$region0: #{rnnlm_forward.6}
  #allocation0 [shape = 'u32[]', space=smem, size = 0x4, offset = 0x4, fixed_abs, tag = 'smem constant byte address 0x4 - core index']
  #allocation1 [shape = 'u32[144,128]{1,0:T(1,128)}', space=vmem, size = 0x12000, scoped, tag = 'internal scratch']
  #allocation2 [shape = 'f32[8,128]{1,0:T(8,128)}', space=vmem, size = 0x1000, scoped, tag = 'scratch operand']
  #allocation3 [shape = 'f32[8,128]{1,0:T(8,128)}', space=vmem, size = 0x1000, scoped, tag = 'scratch operand']
  %s0 = inlined_call_operand.vmem [shape: bf16[8,8,512], index: 0, kind: input, shape index: {}]
  %s1 = inlined_call_operand.vmem [shape: bf16[128,512], index: 1, kind: input, shape index: {}]
  %s2 = inlined_call_operand.vmem [shape: f32[8,128], index: 2, kind: input, shape index: {}]
  %s3 = inlined_call_operand.vmem [shape: f32[8,128], index: 3, kind: input, shape index: {}]
  %s4 = inlined_call_operand.vmem [shape: f32[8,8,128], index: 4, kind: output, shape index: {0}]
  %s5 = inlined_call_operand.vmem [shape: f32[8,128], index: 5, kind: output, shape index: {1}]
  %s6 = inlined_call_operand.vmem [shape: f32[8,128], index: 6, kind: output, shape index: {2}]
  %7 = xla_tuple %s4, %s5, %s6
  %s8 = sld [smem:[#allocation0]]
  $region50: #{rnnlm_forward.6} parent=0
    _
  %s10 = ssub.s32 1, %s8
  %s11 = scalar_select 0, %s10, %s8
  // Predicated region
  $region2: #{rnnlm_forward.6} parent=0 // pred_check
    _
  $region3: #{rnnlm_forward.6} parent=0 // pred_check_branch
    %13 = sbr.rel (0) target = $region5
  $region4: #{rnnlm_forward.6} parent=0 // pred_region
    _
  $region5: #{rnnlm_forward.6} parent=0 // pred_fallthru
    _
  // Predicated region
  $region6: #{rnnlm_forward.6} parent=0 // pred_check
    _
  $region7: #{rnnlm_forward.6} parent=0 // pred_check_branch
    %15 = sbr.rel (0) target = $region9
  $region8: #{rnnlm_forward.6} parent=0 // pred_region
    _
  $region9: #{rnnlm_forward.6} parent=0 // pred_fallthru
    _
  // Predicated region
  $region10: #{rnnlm_forward.6} parent=0 // pred_check
    _
  $region11: #{rnnlm_forward.6} parent=0 // pred_check_branch
    %17 = sbr.rel (0) target = $region13
  $region12: #{rnnlm_forward.6} parent=0 // pred_region
    _
  $region13: #{rnnlm_forward.6} parent=0 // pred_fallthru
    _
  // Predicated region
  $region14: #{rnnlm_forward.6} parent=0 // pred_check
    _
  $region15: #{rnnlm_forward.6} parent=0 // pred_check_branch
    %19 = sbr.rel (0) target = $region17
  $region16: #{rnnlm_forward.6} parent=0 // pred_region
    _
  $region17: #{rnnlm_forward.6} parent=0 // pred_fallthru
    _
  %p21 = scmp.eq.s32.totalorder 0, 0
  // Predicated region
  $region18: #{rnnlm_forward.6} parent=0 // pred_check
    %p22 = pneg %p21
  $region19: #{rnnlm_forward.6} parent=0 // pred_check_branch
    %24 = sbr.rel (%p22) target = $region21
  $region20: #{rnnlm_forward.6} parent=0 // pred_region
    %v25 = vld [vmem:[%s2] sm:$0xff]
    %26 = vst [vmem:[#allocation2] sm:$0xff] %v25
    %v27 = vld [vmem:[%s3] sm:$0xff]
    %28 = vst [vmem:[#allocation3] sm:$0xff] %v27
  $region21: #{rnnlm_forward.6} parent=0 // pred_fallthru
    _
  %v29 = vld [vmem:[#allocation2] sm:$0xff]
  %v30 = vld [vmem:[#allocation3] sm:$0xff]
  %v31 = vld [vmem:[%s0] sm:$0xff]
  %v32 = vld [vmem:[%s0 + $0x8] sm:$0xff]
  %v33 = vunpack.c.l.bf16 %v31
  %v34 = vunpack.c.h.bf16 %v31
  %v35 = vunpack.c.l.bf16 %v32
  %v36 = vunpack.c.h.bf16 %v32
  %v37 = vpack.c.bf16 %v29, %v29
  %v38 = vld [vmem:[%s1] sm:$0xff]
  %v39 = vld [vmem:[%s1 + $0x8] sm:$0xff]
  %v40 = vld [vmem:[%s1 + $0x10] sm:$0xff]
  %v41 = vld [vmem:[%s1 + $0x18] sm:$0xff]
  %v42 = vld [vmem:[%s1 + $0x20] sm:$0xff]
  %v43 = vld [vmem:[%s1 + $0x28] sm:$0xff]
  %v44 = vld [vmem:[%s1 + $0x30] sm:$0xff]
  %v45 = vld [vmem:[%s1 + $0x38] sm:$0xff]
  %v46 = vld [vmem:[%s1 + $0x40] sm:$0xff]
  %v47 = vld [vmem:[%s1 + $0x48] sm:$0xff]
  %v48 = vld [vmem:[%s1 + $0x50] sm:$0xff]
  %v49 = vld [vmem:[%s1 + $0x58] sm:$0xff]
  %v50 = vld [vmem:[%s1 + $0x60] sm:$0xff]
  %v51 = vld [vmem:[%s1 + $0x68] sm:$0xff]
  %v52 = vld [vmem:[%s1 + $0x70] sm:$0xff]
  %v53 = vld [vmem:[%s1 + $0x78] sm:$0xff]
  %v54 = vld [vmem:[%s1 + $0x80] sm:$0xff]
  %v55 = vld [vmem:[%s1 + $0x88] sm:$0xff]
  %v56 = vld [vmem:[%s1 + $0x90] sm:$0xff]
  %v57 = vld [vmem:[%s1 + $0x98] sm:$0xff]
  %v58 = vld [vmem:[%s1 + $0xa0] sm:$0xff]
  %v59 = vld [vmem:[%s1 + $0xa8] sm:$0xff]
  %v60 = vld [vmem:[%s1 + $0xb0] sm:$0xff]
  %v61 = vld [vmem:[%s1 + $0xb8] sm:$0xff]
  %v62 = vld [vmem:[%s1 + $0xc0] sm:$0xff]
  %v63 = vld [vmem:[%s1 + $0xc8] sm:$0xff]
  %v64 = vld [vmem:[%s1 + $0xd0] sm:$0xff]
  %v65 = vld [vmem:[%s1 + $0xd8] sm:$0xff]
  %v66 = vld [vmem:[%s1 + $0xe0] sm:$0xff]
  %v67 = vld [vmem:[%s1 + $0xe8] sm:$0xff]
  %v68 = vld [vmem:[%s1 + $0xf0] sm:$0xff]
  %v69 = vld [vmem:[%s1 + $0xf8] sm:$0xff]
  %v102 = vunpack.c.l.b16 %v38
  %v103 = vunpack.c.h.b16 %v38
  %v104 = vunpack.c.l.b16 %v39
  %v105 = vunpack.c.h.b16 %v39
  %v106 = vunpack.c.l.b16 %v40
  %v107 = vunpack.c.h.b16 %v40
  %v108 = vunpack.c.l.b16 %v41
  %v109 = vunpack.c.h.b16 %v41
  %v110 = vunpack.c.l.b16 %v42
  %v111 = vunpack.c.h.b16 %v42
  %v112 = vunpack.c.l.b16 %v43
  %v113 = vunpack.c.h.b16 %v43
  %v114 = vunpack.c.l.b16 %v44
  %v115 = vunpack.c.h.b16 %v44
  %v116 = vunpack.c.l.b16 %v45
  %v117 = vunpack.c.h.b16 %v45
  %v118 = vunpack.c.l.b16 %v46
  %v119 = vunpack.c.h.b16 %v46
  %v120 = vunpack.c.l.b16 %v47
  %v121 = vunpack.c.h.b16 %v47
  %v122 = vunpack.c.l.b16 %v48
  %v123 = vunpack.c.h.b16 %v48
  %v124 = vunpack.c.l.b16 %v49
  %v125 = vunpack.c.h.b16 %v49
  %v126 = vunpack.c.l.b16 %v50
  %v127 = vunpack.c.h.b16 %v50
  %v128 = vunpack.c.l.b16 %v51
  %v129 = vunpack.c.h.b16 %v51
  %v130 = vunpack.c.l.b16 %v52
  %v131 = vunpack.c.h.b16 %v52
  %v132 = vunpack.c.l.b16 %v53
  %v133 = vunpack.c.h.b16 %v53
  %v134 = vunpack.c.l.b16 %v54
  %v135 = vunpack.c.h.b16 %v54
  %v136 = vunpack.c.l.b16 %v55
  %v137 = vunpack.c.h.b16 %v55
  %v138 = vunpack.c.l.b16 %v56
  %v139 = vunpack.c.h.b16 %v56
  %v140 = vunpack.c.l.b16 %v57
  %v141 = vunpack.c.h.b16 %v57
  %v142 = vunpack.c.l.b16 %v58
  %v143 = vunpack.c.h.b16 %v58
  %v144 = vunpack.c.l.b16 %v59
  %v145 = vunpack.c.h.b16 %v59
  %v146 = vunpack.c.l.b16 %v60
  %v147 = vunpack.c.h.b16 %v60
  %v148 = vunpack.c.l.b16 %v61
  %v149 = vunpack.c.h.b16 %v61
  %v150 = vunpack.c.l.b16 %v62
  %v151 = vunpack.c.h.b16 %v62
  %v152 = vunpack.c.l.b16 %v63
  %v153 = vunpack.c.h.b16 %v63
  %v154 = vunpack.c.l.b16 %v64
  %v155 = vunpack.c.h.b16 %v64
  %v156 = vunpack.c.l.b16 %v65
  %v157 = vunpack.c.h.b16 %v65
  %v158 = vunpack.c.l.b16 %v66
  %v159 = vunpack.c.h.b16 %v66
  %v160 = vunpack.c.l.b16 %v67
  %v161 = vunpack.c.h.b16 %v67
  %v162 = vunpack.c.l.b16 %v68
  %v163 = vunpack.c.h.b16 %v68
  %v164 = vunpack.c.l.b16 %v69
  %v165 = vunpack.c.h.b16 %v69
  %v166 = vpack.c.b16 %v106, %v102
  %v167 = vpack.c.b16 %v107, %v103
  %v168 = vpack.c.b16 %v108, %v104
  %v169 = vpack.c.b16 %v109, %v105
  %v170 = vpack.c.b16 %v114, %v110
  %v171 = vpack.c.b16 %v115, %v111
  %v172 = vpack.c.b16 %v116, %v112
  %v173 = vpack.c.b16 %v117, %v113
  %v174 = vpack.c.b16 %v122, %v118
  %v175 = vpack.c.b16 %v123, %v119
  %v176 = vpack.c.b16 %v124, %v120
  %v177 = vpack.c.b16 %v125, %v121
  %v178 = vpack.c.b16 %v130, %v126
  %v179 = vpack.c.b16 %v131, %v127
  %v180 = vpack.c.b16 %v132, %v128
  %v181 = vpack.c.b16 %v133, %v129
  %v182 = vpack.c.b16 %v138, %v134
  %v183 = vpack.c.b16 %v139, %v135
  %v184 = vpack.c.b16 %v140, %v136
  %v185 = vpack.c.b16 %v141, %v137
  %v186 = vpack.c.b16 %v146, %v142
  %v187 = vpack.c.b16 %v147, %v143
  %v188 = vpack.c.b16 %v148, %v144
  %v189 = vpack.c.b16 %v149, %v145
  %v190 = vpack.c.b16 %v154, %v150
  %v191 = vpack.c.b16 %v155, %v151
  %v192 = vpack.c.b16 %v156, %v152
  %v193 = vpack.c.b16 %v157, %v153
  %v194 = vpack.c.b16 %v162, %v158
  %v195 = vpack.c.b16 %v163, %v159
  %v196 = vpack.c.b16 %v164, %v160
  %v197 = vpack.c.b16 %v165, %v161
  %230 = vmatprep.subr.bf16.mxu0 %v195
  %231 = vmatpush1.bf16.msra.mxu0 %v194
  %232 = vmatprep.subr.bf16.mxu0 %v191
  %233 = vmatpush1.bf16.msra.mxu0 %v190
  %234 = vmatprep.subr.bf16.mxu0 %v187
  %235 = vmatpush1.bf16.msra.mxu0 %v186
  %236 = vmatprep.subr.bf16.mxu0 %v183
  %237 = vmatpush1.bf16.msra.mxu0 %v182
  %238 = vmatprep.subr.bf16.mxu0 %v179
  %239 = vmatpush1.bf16.msra.mxu0 %v178
  %240 = vmatprep.subr.bf16.mxu0 %v175
  %241 = vmatpush1.bf16.msra.mxu0 %v174
  %242 = vmatprep.subr.bf16.mxu0 %v171
  %243 = vmatpush1.bf16.msra.mxu0 %v170
  %244 = vmatprep.subr.bf16.mxu0 %v167
  %245 = vmatpush1.bf16.msra.mxu0 %v166
  %246 = vmatprep.subr.bf16.mxu0 0
  %247 = vmatpush2.bf16.msra.mxu0 0
  %248 = vmatprep.subr.bf16.mxu0 0
  %249 = vmatpush2.bf16.msra.mxu0 0
  %250 = vmatprep.subr.bf16.mxu0 0
  %251 = vmatpush2.bf16.msra.mxu0 0
  %252 = vmatprep.subr.bf16.mxu0 0
  %253 = vmatpush2.bf16.msra.mxu0 0
  %254 = vmatprep.subr.bf16.mxu0 0
  %255 = vmatpush2.bf16.msra.mxu0 0
  %256 = vmatprep.subr.bf16.mxu0 0
  %257 = vmatpush2.bf16.msra.mxu0 0
  %258 = vmatprep.subr.bf16.mxu0 0
  %259 = vmatpush2.bf16.msra.mxu0 0
  %260 = vmatprep.subr.bf16.mxu0 0
  %261 = vmatpush2.bf16.msra.mxu0 0
  %262 = vmatprep.mubr.bf16.mxu0 0
  %263 = vmatmul.mubr.bf16.gmra.mxu0 %v37
  %v264 = vpop.f32.mrf.mxu0
  %v265 = vadd.f32 0.0, %v264
  %v266 = vpop.f32.mrf.mxu0
  %v267 = vadd.f32 0.0, %v266
  %v268 = vpop.f32.mrf.mxu0
  %v269 = vpop.f32.mrf.mxu0
  %270 = vdwg.mxu0
  %271 = vmatprep.subr.bf16.mxu0 %v197
  %272 = vmatpush1.bf16.msra.mxu0 %v196
  %273 = vmatprep.subr.bf16.mxu0 %v193
  %274 = vmatpush1.bf16.msra.mxu0 %v192
  %275 = vmatprep.subr.bf16.mxu0 %v189
  %276 = vmatpush1.bf16.msra.mxu0 %v188
  %277 = vmatprep.subr.bf16.mxu0 %v185
  %278 = vmatpush1.bf16.msra.mxu0 %v184
  %279 = vmatprep.subr.bf16.mxu0 %v181
  %280 = vmatpush1.bf16.msra.mxu0 %v180
  %281 = vmatprep.subr.bf16.mxu0 %v177
  %282 = vmatpush1.bf16.msra.mxu0 %v176
  %283 = vmatprep.subr.bf16.mxu0 %v173
  %284 = vmatpush1.bf16.msra.mxu0 %v172
  %285 = vmatprep.subr.bf16.mxu0 %v169
  %286 = vmatpush1.bf16.msra.mxu0 %v168
  %287 = vmatprep.subr.bf16.mxu0 0
  %288 = vmatpush2.bf16.msra.mxu0 0
  %289 = vmatprep.subr.bf16.mxu0 0
  %290 = vmatpush2.bf16.msra.mxu0 0
  %291 = vmatprep.subr.bf16.mxu0 0
  %292 = vmatpush2.bf16.msra.mxu0 0
  %293 = vmatprep.subr.bf16.mxu0 0
  %294 = vmatpush2.bf16.msra.mxu0 0
  %295 = vmatprep.subr.bf16.mxu0 0
  %296 = vmatpush2.bf16.msra.mxu0 0
  %297 = vmatprep.subr.bf16.mxu0 0
  %298 = vmatpush2.bf16.msra.mxu0 0
  %299 = vmatprep.subr.bf16.mxu0 0
  %300 = vmatpush2.bf16.msra.mxu0 0
  %301 = vmatprep.subr.bf16.mxu0 0
  %302 = vmatpush2.bf16.msra.mxu0 0
  %303 = vmatprep.mubr.bf16.mxu0 0
  %304 = vmatmul.mubr.bf16.gmra.mxu0 %v37
  %v305 = vpop.f32.mrf.mxu0
  %v306 = vadd.f32 0.0, %v305
  %v307 = vpop.f32.mrf.mxu0
  %v308 = vadd.f32 0.0, %v307
  %v309 = vpop.f32.mrf.mxu0
  %v310 = vpop.f32.mrf.mxu0
  %311 = vdwg.mxu0
  %v312 = vadd.f32 %v33, %v265
  %v313 = vadd.f32 %v34, %v267
  %v314 = vadd.f32 %v35, %v306
  %v315 = vadd.f32 %v36, %v308
  %v316 = vxor.u32 %v312, 2147483648
  %v317 = vmul.f32 %v316, 1.442695
  %v318 = vpow.pop %v317
  %v319 = vadd.f32 %v318, 1.0
  %v320 = vrcp.pop %v319
  %v321 = vmul.f32 1.0, %v320
  %v322 = vxor.u32 %v313, 2147483648
  %v323 = vmul.f32 %v322, 1.442695
  %v324 = vpow.pop %v323
  %v325 = vadd.f32 %v324, 1.0
  %v326 = vrcp.pop %v325
  %v327 = vmul.f32 1.0, %v326
  %v328 = vtanh.pop %v314
  %v329 = vxor.u32 %v315, 2147483648
  %v330 = vmul.f32 %v329, 1.442695
  %v331 = vpow.pop %v330
  %v332 = vadd.f32 %v331, 1.0
  %v333 = vrcp.pop %v332
  %v334 = vmul.f32 1.0, %v333
  %v335 = vmul.f32 %v327, %v30
  %v336 = vmul.f32 %v321, %v328
  %v337 = vadd.f32 %v335, %v336
  %v338 = vtanh.pop %v337
  %v339 = vmul.f32 %v334, %v338
  %340 = vst [vmem:[%s4] sm:$0xff] %v339
  %s341 = scalar_lea.vmem %s0, 16
  %v342 = vld [vmem:[%s341] sm:$0xff]
  %v343 = vld [vmem:[%s341 + $0x8] sm:$0xff]
  %v344 = vunpack.c.l.bf16 %v342
  %v345 = vunpack.c.h.bf16 %v342
  %v346 = vunpack.c.l.bf16 %v343
  %v347 = vunpack.c.h.bf16 %v343
  %v348 = vpack.c.bf16 %v339, %v339
  %v349 = vld [vmem:[%s1] sm:$0xff]
  %v350 = vld [vmem:[%s1 + $0x8] sm:$0xff]
  %v351 = vld [vmem:[%s1 + $0x10] sm:$0xff]
  %v352 = vld [vmem:[%s1 + $0x18] sm:$0xff]
  %v353 = vld [vmem:[%s1 + $0x20] sm:$0xff]
  %v354 = vld [vmem:[%s1 + $0x28] sm:$0xff]
  %v355 = vld [vmem:[%s1 + $0x30] sm:$0xff]
  %v356 = vld [vmem:[%s1 + $0x38] sm:$0xff]
  %v357 = vld [vmem:[%s1 + $0x40] sm:$0xff]
  %v358 = vld [vmem:[%s1 + $0x48] sm:$0xff]
  %v359 = vld [vmem:[%s1 + $0x50] sm:$0xff]
  %v360 = vld [vmem:[%s1 + $0x58] sm:$0xff]
  %v361 = vld [vmem:[%s1 + $0x60] sm:$0xff]
  %v362 = vld [vmem:[%s1 + $0x68] sm:$0xff]
  %v363 = vld [vmem:[%s1 + $0x70] sm:$0xff]
  %v364 = vld [vmem:[%s1 + $0x78] sm:$0xff]
  %v365 = vld [vmem:[%s1 + $0x80] sm:$0xff]
  %v366 = vld [vmem:[%s1 + $0x88] sm:$0xff]
  %v367 = vld [vmem:[%s1 + $0x90] sm:$0xff]
  %v368 = vld [vmem:[%s1 + $0x98] sm:$0xff]
  %v369 = vld [vmem:[%s1 + $0xa0] sm:$0xff]
  %v370 = vld [vmem:[%s1 + $0xa8] sm:$0xff]
  %v371 = vld [vmem:[%s1 + $0xb0] sm:$0xff]
  %v372 = vld [vmem:[%s1 + $0xb8] sm:$0xff]
  %v373 = vld [vmem:[%s1 + $0xc0] sm:$0xff]
  %v374 = vld [vmem:[%s1 + $0xc8] sm:$0xff]
  %v375 = vld [vmem:[%s1 + $0xd0] sm:$0xff]
  %v376 = vld [vmem:[%s1 + $0xd8] sm:$0xff]
  %v377 = vld [vmem:[%s1 + $0xe0] sm:$0xff]
  %v378 = vld [vmem:[%s1 + $0xe8] sm:$0xff]
  %v379 = vld [vmem:[%s1 + $0xf0] sm:$0xff]
  %v380 = vld [vmem:[%s1 + $0xf8] sm:$0xff]
  %v413 = vunpack.c.l.b16 %v349
  %v414 = vunpack.c.h.b16 %v349
  %v415 = vunpack.c.l.b16 %v350
  %v416 = vunpack.c.h.b16 %v350
  %v417 = vunpack.c.l.b16 %v351
  %v418 = vunpack.c.h.b16 %v351
  %v419 = vunpack.c.l.b16 %v352
  %v420 = vunpack.c.h.b16 %v352
  %v421 = vunpack.c.l.b16 %v353
  %v422 = vunpack.c.h.b16 %v353
  %v423 = vunpack.c.l.b16 %v354
  %v424 = vunpack.c.h.b16 %v354
  %v425 = vunpack.c.l.b16 %v355
  %v426 = vunpack.c.h.b16 %v355
  %v427 = vunpack.c.l.b16 %v356
  %v428 = vunpack.c.h.b16 %v356
  %v429 = vunpack.c.l.b16 %v357
  %v430 = vunpack.c.h.b16 %v357
  %v431 = vunpack.c.l.b16 %v358
  %v432 = vunpack.c.h.b16 %v358
  %v433 = vunpack.c.l.b16 %v359
  %v434 = vunpack.c.h.b16 %v359
  %v435 = vunpack.c.l.b16 %v360
  %v436 = vunpack.c.h.b16 %v360
  %v437 = vunpack.c.l.b16 %v361
  %v438 = vunpack.c.h.b16 %v361
  %v439 = vunpack.c.l.b16 %v362
  %v440 = vunpack.c.h.b16 %v362
  %v441 = vunpack.c.l.b16 %v363
  %v442 = vunpack.c.h.b16 %v363
  %v443 = vunpack.c.l.b16 %v364
  %v444 = vunpack.c.h.b16 %v364
  %v445 = vunpack.c.l.b16 %v365
  %v446 = vunpack.c.h.b16 %v365
  %v447 = vunpack.c.l.b16 %v366
  %v448 = vunpack.c.h.b16 %v366
  %v449 = vunpack.c.l.b16 %v367
  %v450 = vunpack.c.h.b16 %v367
  %v451 = vunpack.c.l.b16 %v368
  %v452 = vunpack.c.h.b16 %v368
  %v453 = vunpack.c.l.b16 %v369
  %v454 = vunpack.c.h.b16 %v369
  %v455 = vunpack.c.l.b16 %v370
  %v456 = vunpack.c.h.b16 %v370
  %v457 = vunpack.c.l.b16 %v371
  %v458 = vunpack.c.h.b16 %v371
  %v459 = vunpack.c.l.b16 %v372
  %v460 = vunpack.c.h.b16 %v372
  %v461 = vunpack.c.l.b16 %v373
  %v462 = vunpack.c.h.b16 %v373
  %v463 = vunpack.c.l.b16 %v374
  %v464 = vunpack.c.h.b16 %v374
  %v465 = vunpack.c.l.b16 %v375
  %v466 = vunpack.c.h.b16 %v375
  %v467 = vunpack.c.l.b16 %v376
  %v468 = vunpack.c.h.b16 %v376
  %v469 = vunpack.c.l.b16 %v377
  %v470 = vunpack.c.h.b16 %v377
  %v471 = vunpack.c.l.b16 %v378
  %v472 = vunpack.c.h.b16 %v378
  %v473 = vunpack.c.l.b16 %v379
  %v474 = vunpack.c.h.b16 %v379
  %v475 = vunpack.c.l.b16 %v380
  %v476 = vunpack.c.h.b16 %v380
  %v477 = vpack.c.b16 %v417, %v413
  %v478 = vpack.c.b16 %v418, %v414
  %v479 = vpack.c.b16 %v419, %v415
  %v480 = vpack.c.b16 %v420, %v416
  %v481 = vpack.c.b16 %v425, %v421
  %v482 = vpack.c.b16 %v426, %v422
  %v483 = vpack.c.b16 %v427, %v423
  %v484 = vpack.c.b16 %v428, %v424
  %v485 = vpack.c.b16 %v433, %v429
  %v486 = vpack.c.b16 %v434, %v430
  %v487 = vpack.c.b16 %v435, %v431
  %v488 = vpack.c.b16 %v436, %v432
  %v489 = vpack.c.b16 %v441, %v437
  %v490 = vpack.c.b16 %v442, %v438
  %v491 = vpack.c.b16 %v443, %v439
  %v492 = vpack.c.b16 %v444, %v440
  %v493 = vpack.c.b16 %v449, %v445
  %v494 = vpack.c.b16 %v450, %v446
  %v495 = vpack.c.b16 %v451, %v447
  %v496 = vpack.c.b16 %v452, %v448
  %v497 = vpack.c.b16 %v457, %v453
  %v498 = vpack.c.b16 %v458, %v454
  %v499 = vpack.c.b16 %v459, %v455
  %v500 = vpack.c.b16 %v460, %v456
  %v501 = vpack.c.b16 %v465, %v461
  %v502 = vpack.c.b16 %v466, %v462
  %v503 = vpack.c.b16 %v467, %v463
  %v504 = vpack.c.b16 %v468, %v464
  %v505 = vpack.c.b16 %v473, %v469
  %v506 = vpack.c.b16 %v474, %v470
  %v507 = vpack.c.b16 %v475, %v471
  %v508 = vpack.c.b16 %v476, %v472
  %541 = vmatprep.subr.bf16.mxu0 %v506
  %542 = vmatpush1.bf16.msra.mxu0 %v505
  %543 = vmatprep.subr.bf16.mxu0 %v502
  %544 = vmatpush1.bf16.msra.mxu0 %v501
  %545 = vmatprep.subr.bf16.mxu0 %v498
  %546 = vmatpush1.bf16.msra.mxu0 %v497
  %547 = vmatprep.subr.bf16.mxu0 %v494
  %548 = vmatpush1.bf16.msra.mxu0 %v493
  %549 = vmatprep.subr.bf16.mxu0 %v490
  %550 = vmatpush1.bf16.msra.mxu0 %v489
  %551 = vmatprep.subr.bf16.mxu0 %v486
  %552 = vmatpush1.bf16.msra.mxu0 %v485
  %553 = vmatprep.subr.bf16.mxu0 %v482
  %554 = vmatpush1.bf16.msra.mxu0 %v481
  %555 = vmatprep.subr.bf16.mxu0 %v478
  %556 = vmatpush1.bf16.msra.mxu0 %v477
  %557 = vmatprep.subr.bf16.mxu0 0
  %558 = vmatpush2.bf16.msra.mxu0 0
  %559 = vmatprep.subr.bf16.mxu0 0
  %560 = vmatpush2.bf16.msra.mxu0 0
  %561 = vmatprep.subr.bf16.mxu0 0
  %562 = vmatpush2.bf16.msra.mxu0 0
  %563 = vmatprep.subr.bf16.mxu0 0
  %564 = vmatpush2.bf16.msra.mxu0 0
  %565 = vmatprep.subr.bf16.mxu0 0
  %566 = vmatpush2.bf16.msra.mxu0 0
  %567 = vmatprep.subr.bf16.mxu0 0
  %568 = vmatpush2.bf16.msra.mxu0 0
  %569 = vmatprep.subr.bf16.mxu0 0
  %570 = vmatpush2.bf16.msra.mxu0 0
  %571 = vmatprep.subr.bf16.mxu0 0
  %572 = vmatpush2.bf16.msra.mxu0 0
  %573 = vmatprep.mubr.bf16.mxu0 0
  %574 = vmatmul.mubr.bf16.gmra.mxu0 %v348
  %v575 = vpop.f32.mrf.mxu0
  %v576 = vadd.f32 0.0, %v575
  %v577 = vpop.f32.mrf.mxu0
  %v578 = vadd.f32 0.0, %v577
  %v579 = vpop.f32.mrf.mxu0
  %v580 = vpop.f32.mrf.mxu0
  %581 = vdwg.mxu0
  %582 = vmatprep.subr.bf16.mxu0 %v508
  %583 = vmatpush1.bf16.msra.mxu0 %v507
  %584 = vmatprep.subr.bf16.mxu0 %v504
  %585 = vmatpush1.bf16.msra.mxu0 %v503
  %586 = vmatprep.subr.bf16.mxu0 %v500
  %587 = vmatpush1.bf16.msra.mxu0 %v499
  %588 = vmatprep.subr.bf16.mxu0 %v496
  %589 = vmatpush1.bf16.msra.mxu0 %v495
  %590 = vmatprep.subr.bf16.mxu0 %v492
  %591 = vmatpush1.bf16.msra.mxu0 %v491
  %592 = vmatprep.subr.bf16.mxu0 %v488
  %593 = vmatpush1.bf16.msra.mxu0 %v487
  %594 = vmatprep.subr.bf16.mxu0 %v484
  %595 = vmatpush1.bf16.msra.mxu0 %v483
  %596 = vmatprep.subr.bf16.mxu0 %v480
  %597 = vmatpush1.bf16.msra.mxu0 %v479
  %598 = vmatprep.subr.bf16.mxu0 0
  %599 = vmatpush2.bf16.msra.mxu0 0
  %600 = vmatprep.subr.bf16.mxu0 0
  %601 = vmatpush2.bf16.msra.mxu0 0
  %602 = vmatprep.subr.bf16.mxu0 0
  %603 = vmatpush2.bf16.msra.mxu0 0
  %604 = vmatprep.subr.bf16.mxu0 0
  %605 = vmatpush2.bf16.msra.mxu0 0
  %606 = vmatprep.subr.bf16.mxu0 0
  %607 = vmatpush2.bf16.msra.mxu0 0
  %608 = vmatprep.subr.bf16.mxu0 0
  %609 = vmatpush2.bf16.msra.mxu0 0
  %610 = vmatprep.subr.bf16.mxu0 0
  %611 = vmatpush2.bf16.msra.mxu0 0
  %612 = vmatprep.subr.bf16.mxu0 0
  %613 = vmatpush2.bf16.msra.mxu0 0
  %614 = vmatprep.mubr.bf16.mxu0 0
  %615 = vmatmul.mubr.bf16.gmra.mxu0 %v348
  %v616 = vpop.f32.mrf.mxu0
  %v617 = vadd.f32 0.0, %v616
  %v618 = vpop.f32.mrf.mxu0
  %v619 = vadd.f32 0.0, %v618
  %v620 = vpop.f32.mrf.mxu0
  %v621 = vpop.f32.mrf.mxu0
  %622 = vdwg.mxu0
  %v623 = vadd.f32 %v344, %v576
  %v624 = vadd.f32 %v345, %v578
  %v625 = vadd.f32 %v346, %v617
  %v626 = vadd.f32 %v347, %v619
  %v627 = vxor.u32 %v623, 2147483648
  %v628 = vmul.f32 %v627, 1.442695
  %v629 = vpow.pop %v628
  %v630 = vadd.f32 %v629, 1.0
  %v631 = vrcp.pop %v630
  %v632 = vmul.f32 1.0, %v631
  %v633 = vxor.u32 %v624, 2147483648
  %v634 = vmul.f32 %v633, 1.442695
  %v635 = vpow.pop %v634
  %v636 = vadd.f32 %v635, 1.0
  %v637 = vrcp.pop %v636
  %v638 = vmul.f32 1.0, %v637
  %v639 = vtanh.pop %v625
  %v640 = vxor.u32 %v626, 2147483648
  %v641 = vmul.f32 %v640, 1.442695
  %v642 = vpow.pop %v641
  %v643 = vadd.f32 %v642, 1.0
  %v644 = vrcp.pop %v643
  %v645 = vmul.f32 1.0, %v644
  %v646 = vmul.f32 %v638, %v337
  %v647 = vmul.f32 %v632, %v639
  %v648 = vadd.f32 %v646, %v647
  %v649 = vtanh.pop %v648
  %v650 = vmul.f32 %v645, %v649
  %s651 = scalar_lea.vmem %s4, 8
  %652 = vst [vmem:[%s651] sm:$0xff] %v650
  %s653 = scalar_lea.vmem %s0, 32
  %v654 = vld [vmem:[%s653] sm:$0xff]
  %v655 = vld [vmem:[%s653 + $0x8] sm:$0xff]
  %v656 = vunpack.c.l.bf16 %v654
  %v657 = vunpack.c.h.bf16 %v654
  %v658 = vunpack.c.l.bf16 %v655
  %v659 = vunpack.c.h.bf16 %v655
  %v660 = vpack.c.bf16 %v650, %v650
  %v661 = vld [vmem:[%s1] sm:$0xff]
  %v662 = vld [vmem:[%s1 + $0x8] sm:$0xff]
  %v663 = vld [vmem:[%s1 + $0x10] sm:$0xff]
  %v664 = vld [vmem:[%s1 + $0x18] sm:$0xff]
  %v665 = vld [vmem:[%s1 + $0x20] sm:$0xff]
  %v666 = vld [vmem:[%s1 + $0x28] sm:$0xff]
  %v667 = vld [vmem:[%s1 + $0x30] sm:$0xff]
  %v668 = vld [vmem:[%s1 + $0x38] sm:$0xff]
  %v669 = vld [vmem:[%s1 + $0x40] sm:$0xff]
  %v670 = vld [vmem:[%s1 + $0x48] sm:$0xff]
  %v671 = vld [vmem:[%s1 + $0x50] sm:$0xff]
  %v672 = vld [vmem:[%s1 + $0x58] sm:$0xff]
  %v673 = vld [vmem:[%s1 + $0x60] sm:$0xff]
  %v674 = vld [vmem:[%s1 + $0x68] sm:$0xff]
  %v675 = vld [vmem:[%s1 + $0x70] sm:$0xff]
  %v676 = vld [vmem:[%s1 + $0x78] sm:$0xff]
  %v677 = vld [vmem:[%s1 + $0x80] sm:$0xff]
  %v678 = vld [vmem:[%s1 + $0x88] sm:$0xff]
  %v679 = vld [vmem:[%s1 + $0x90] sm:$0xff]
  %v680 = vld [vmem:[%s1 + $0x98] sm:$0xff]
  %v681 = vld [vmem:[%s1 + $0xa0] sm:$0xff]
  %v682 = vld [vmem:[%s1 + $0xa8] sm:$0xff]
  %v683 = vld [vmem:[%s1 + $0xb0] sm:$0xff]
  %v684 = vld [vmem:[%s1 + $0xb8] sm:$0xff]
  %v685 = vld [vmem:[%s1 + $0xc0] sm:$0xff]
  %v686 = vld [vmem:[%s1 + $0xc8] sm:$0xff]
  %v687 = vld [vmem:[%s1 + $0xd0] sm:$0xff]
  %v688 = vld [vmem:[%s1 + $0xd8] sm:$0xff]
  %v689 = vld [vmem:[%s1 + $0xe0] sm:$0xff]
  %v690 = vld [vmem:[%s1 + $0xe8] sm:$0xff]
  %v691 = vld [vmem:[%s1 + $0xf0] sm:$0xff]
  %v692 = vld [vmem:[%s1 + $0xf8] sm:$0xff]
  %v725 = vunpack.c.l.b16 %v661
  %v726 = vunpack.c.h.b16 %v661
  %v727 = vunpack.c.l.b16 %v662
  %v728 = vunpack.c.h.b16 %v662
  %v729 = vunpack.c.l.b16 %v663
  %v730 = vunpack.c.h.b16 %v663
  %v731 = vunpack.c.l.b16 %v664
  %v732 = vunpack.c.h.b16 %v664
  %v733 = vunpack.c.l.b16 %v665
  %v734 = vunpack.c.h.b16 %v665
  %v735 = vunpack.c.l.b16 %v666
  %v736 = vunpack.c.h.b16 %v666
  %v737 = vunpack.c.l.b16 %v667
  %v738 = vunpack.c.h.b16 %v667
  %v739 = vunpack.c.l.b16 %v668
  %v740 = vunpack.c.h.b16 %v668
  %v741 = vunpack.c.l.b16 %v669
  %v742 = vunpack.c.h.b16 %v669
  %v743 = vunpack.c.l.b16 %v670
  %v744 = vunpack.c.h.b16 %v670
  %v745 = vunpack.c.l.b16 %v671
  %v746 = vunpack.c.h.b16 %v671
  %v747 = vunpack.c.l.b16 %v672
  %v748 = vunpack.c.h.b16 %v672
  %v749 = vunpack.c.l.b16 %v673
  %v750 = vunpack.c.h.b16 %v673
  %v751 = vunpack.c.l.b16 %v674
  %v752 = vunpack.c.h.b16 %v674
  %v753 = vunpack.c.l.b16 %v675
  %v754 = vunpack.c.h.b16 %v675
  %v755 = vunpack.c.l.b16 %v676
  %v756 = vunpack.c.h.b16 %v676
  %v757 = vunpack.c.l.b16 %v677
  %v758 = vunpack.c.h.b16 %v677
  %v759 = vunpack.c.l.b16 %v678
  %v760 = vunpack.c.h.b16 %v678
  %v761 = vunpack.c.l.b16 %v679
  %v762 = vunpack.c.h.b16 %v679
  %v763 = vunpack.c.l.b16 %v680
  %v764 = vunpack.c.h.b16 %v680
  %v765 = vunpack.c.l.b16 %v681
  %v766 = vunpack.c.h.b16 %v681
  %v767 = vunpack.c.l.b16 %v682
  %v768 = vunpack.c.h.b16 %v682
  %v769 = vunpack.c.l.b16 %v683
  %v770 = vunpack.c.h.b16 %v683
  %v771 = vunpack.c.l.b16 %v684
  %v772 = vunpack.c.h.b16 %v684
  %v773 = vunpack.c.l.b16 %v685
  %v774 = vunpack.c.h.b16 %v685
  %v775 = vunpack.c.l.b16 %v686
  %v776 = vunpack.c.h.b16 %v686
  %v777 = vunpack.c.l.b16 %v687
  %v778 = vunpack.c.h.b16 %v687
  %v779 = vunpack.c.l.b16 %v688
  %v780 = vunpack.c.h.b16 %v688
  %v781 = vunpack.c.l.b16 %v689
  %v782 = vunpack.c.h.b16 %v689
  %v783 = vunpack.c.l.b16 %v690
  %v784 = vunpack.c.h.b16 %v690
  %v785 = vunpack.c.l.b16 %v691
  %v786 = vunpack.c.h.b16 %v691
  %v787 = vunpack.c.l.b16 %v692
  %v788 = vunpack.c.h.b16 %v692
  %v789 = vpack.c.b16 %v729, %v725
  %v790 = vpack.c.b16 %v730, %v726
  %v791 = vpack.c.b16 %v731, %v727
  %v792 = vpack.c.b16 %v732, %v728
  %v793 = vpack.c.b16 %v737, %v733
  %v794 = vpack.c.b16 %v738, %v734
  %v795 = vpack.c.b16 %v739, %v735
  %v796 = vpack.c.b16 %v740, %v736
  %v797 = vpack.c.b16 %v745, %v741
  %v798 = vpack.c.b16 %v746, %v742
  %v799 = vpack.c.b16 %v747, %v743
  %v800 = vpack.c.b16 %v748, %v744
  %v801 = vpack.c.b16 %v753, %v749
  %v802 = vpack.c.b16 %v754, %v750
  %v803 = vpack.c.b16 %v755, %v751
  %v804 = vpack.c.b16 %v756, %v752
  %v805 = vpack.c.b16 %v761, %v757
  %v806 = vpack.c.b16 %v762, %v758
  %v807 = vpack.c.b16 %v763, %v759
  %v808 = vpack.c.b16 %v764, %v760
  %v809 = vpack.c.b16 %v769, %v765
  %v810 = vpack.c.b16 %v770, %v766
  %v811 = vpack.c.b16 %v771, %v767
  %v812 = vpack.c.b16 %v772, %v768
  %v813 = vpack.c.b16 %v777, %v773
  %v814 = vpack.c.b16 %v778, %v774
  %v815 = vpack.c.b16 %v779, %v775
  %v816 = vpack.c.b16 %v780, %v776
  %v817 = vpack.c.b16 %v785, %v781
  %v818 = vpack.c.b16 %v786, %v782
  %v819 = vpack.c.b16 %v787, %v783
  %v820 = vpack.c.b16 %v788, %v784
  %853 = vmatprep.subr.bf16.mxu0 %v818
  %854 = vmatpush1.bf16.msra.mxu0 %v817
  %855 = vmatprep.subr.bf16.mxu0 %v814
  %856 = vmatpush1.bf16.msra.mxu0 %v813
  %857 = vmatprep.subr.bf16.mxu0 %v810
  %858 = vmatpush1.bf16.msra.mxu0 %v809
  %859 = vmatprep.subr.bf16.mxu0 %v806
  %860 = vmatpush1.bf16.msra.mxu0 %v805
  %861 = vmatprep.subr.bf16.mxu0 %v802
  %862 = vmatpush1.bf16.msra.mxu0 %v801
  %863 = vmatprep.subr.bf16.mxu0 %v798
  %864 = vmatpush1.bf16.msra.mxu0 %v797
  %865 = vmatprep.subr.bf16.mxu0 %v794
  %866 = vmatpush1.bf16.msra.mxu0 %v793
  %867 = vmatprep.subr.bf16.mxu0 %v790
  %868 = vmatpush1.bf16.msra.mxu0 %v789
  %869 = vmatprep.subr.bf16.mxu0 0
  %870 = vmatpush2.bf16.msra.mxu0 0
  %871 = vmatprep.subr.bf16.mxu0 0
  %872 = vmatpush2.bf16.msra.mxu0 0
  %873 = vmatprep.subr.bf16.mxu0 0
  %874 = vmatpush2.bf16.msra.mxu0 0
  %875 = vmatprep.subr.bf16.mxu0 0
  %876 = vmatpush2.bf16.msra.mxu0 0
  %877 = vmatprep.subr.bf16.mxu0 0
  %878 = vmatpush2.bf16.msra.mxu0 0
  %879 = vmatprep.subr.bf16.mxu0 0
  %880 = vmatpush2.bf16.msra.mxu0 0
  %881 = vmatprep.subr.bf16.mxu0 0
  %882 = vmatpush2.bf16.msra.mxu0 0
  %883 = vmatprep.subr.bf16.mxu0 0
  %884 = vmatpush2.bf16.msra.mxu0 0
  %885 = vmatprep.mubr.bf16.mxu0 0
  %886 = vmatmul.mubr.bf16.gmra.mxu0 %v660
  %v887 = vpop.f32.mrf.mxu0
  %v888 = vadd.f32 0.0, %v887
  %v889 = vpop.f32.mrf.mxu0
  %v890 = vadd.f32 0.0, %v889
  %v891 = vpop.f32.mrf.mxu0
  %v892 = vpop.f32.mrf.mxu0
  %893 = vdwg.mxu0
  %894 = vmatprep.subr.bf16.mxu0 %v820
  %895 = vmatpush1.bf16.msra.mxu0 %v819
  %896 = vmatprep.subr.bf16.mxu0 %v816
  %897 = vmatpush1.bf16.msra.mxu0 %v815
  %898 = vmatprep.subr.bf16.mxu0 %v812
  %899 = vmatpush1.bf16.msra.mxu0 %v811
  %900 = vmatprep.subr.bf16.mxu0 %v808
  %901 = vmatpush1.bf16.msra.mxu0 %v807
  %902 = vmatprep.subr.bf16.mxu0 %v804
  %903 = vmatpush1.bf16.msra.mxu0 %v803
  %904 = vmatprep.subr.bf16.mxu0 %v800
  %905 = vmatpush1.bf16.msra.mxu0 %v799
  %906 = vmatprep.subr.bf16.mxu0 %v796
  %907 = vmatpush1.bf16.msra.mxu0 %v795
  %908 = vmatprep.subr.bf16.mxu0 %v792
  %909 = vmatpush1.bf16.msra.mxu0 %v791
  %910 = vmatprep.subr.bf16.mxu0 0
  %911 = vmatpush2.bf16.msra.mxu0 0
  %912 = vmatprep.subr.bf16.mxu0 0
  %913 = vmatpush2.bf16.msra.mxu0 0
  %914 = vmatprep.subr.bf16.mxu0 0
  %915 = vmatpush2.bf16.msra.mxu0 0
  %916 = vmatprep.subr.bf16.mxu0 0
  %917 = vmatpush2.bf16.msra.mxu0 0
  %918 = vmatprep.subr.bf16.mxu0 0
  %919 = vmatpush2.bf16.msra.mxu0 0
  %920 = vmatprep.subr.bf16.mxu0 0
  %921 = vmatpush2.bf16.msra.mxu0 0
  %922 = vmatprep.subr.bf16.mxu0 0
  %923 = vmatpush2.bf16.msra.mxu0 0
  %924 = vmatprep.subr.bf16.mxu0 0
  %925 = vmatpush2.bf16.msra.mxu0 0
  %926 = vmatprep.mubr.bf16.mxu0 0
  %927 = vmatmul.mubr.bf16.gmra.mxu0 %v660
  %v928 = vpop.f32.mrf.mxu0
  %v929 = vadd.f32 0.0, %v928
  %v930 = vpop.f32.mrf.mxu0
  %v931 = vadd.f32 0.0, %v930
  %v932 = vpop.f32.mrf.mxu0
  %v933 = vpop.f32.mrf.mxu0
  %934 = vdwg.mxu0
  %v935 = vadd.f32 %v656, %v888
  %v936 = vadd.f32 %v657, %v890
  %v937 = vadd.f32 %v658, %v929
  %v938 = vadd.f32 %v659, %v931
  %v939 = vxor.u32 %v935, 2147483648
  %v940 = vmul.f32 %v939, 1.442695
  %v941 = vpow.pop %v940
  %v942 = vadd.f32 %v941, 1.0
  %v943 = vrcp.pop %v942
  %v944 = vmul.f32 1.0, %v943
  %v945 = vxor.u32 %v936, 2147483648
  %v946 = vmul.f32 %v945, 1.442695
  %v947 = vpow.pop %v946
  %v948 = vadd.f32 %v947, 1.0
  %v949 = vrcp.pop %v948
  %v950 = vmul.f32 1.0, %v949
  %v951 = vtanh.pop %v937
  %v952 = vxor.u32 %v938, 2147483648
  %v953 = vmul.f32 %v952, 1.442695
  %v954 = vpow.pop %v953
  %v955 = vadd.f32 %v954, 1.0
  %v956 = vrcp.pop %v955
  %v957 = vmul.f32 1.0, %v956
  %v958 = vmul.f32 %v950, %v648
  %v959 = vmul.f32 %v944, %v951
  %v960 = vadd.f32 %v958, %v959
  %v961 = vtanh.pop %v960
  %v962 = vmul.f32 %v957, %v961
  %s963 = scalar_lea.vmem %s4, 16
  %964 = vst [vmem:[%s963] sm:$0xff] %v962
  %s965 = scalar_lea.vmem %s0, 48
  %v966 = vld [vmem:[%s965] sm:$0xff]
  %v967 = vld [vmem:[%s965 + $0x8] sm:$0xff]
  %v968 = vunpack.c.l.bf16 %v966
  %v969 = vunpack.c.h.bf16 %v966
  %v970 = vunpack.c.l.bf16 %v967
  %v971 = vunpack.c.h.bf16 %v967
  %v972 = vpack.c.bf16 %v962, %v962
  %v973 = vld [vmem:[%s1] sm:$0xff]
  %v974 = vld [vmem:[%s1 + $0x8] sm:$0xff]
  %v975 = vld [vmem:[%s1 + $0x10] sm:$0xff]
  %v976 = vld [vmem:[%s1 + $0x18] sm:$0xff]
  %v977 = vld [vmem:[%s1 + $0x20] sm:$0xff]
  %v978 = vld [vmem:[%s1 + $0x28] sm:$0xff]
  %v979 = vld [vmem:[%s1 + $0x30] sm:$0xff]
  %v980 = vld [vmem:[%s1 + $0x38] sm:$0xff]
  %v981 = vld [vmem:[%s1 + $0x40] sm:$0xff]
  %v982 = vld [vmem:[%s1 + $0x48] sm:$0xff]
  %v983 = vld [vmem:[%s1 + $0x50] sm:$0xff]
  %v984 = vld [vmem:[%s1 + $0x58] sm:$0xff]
  %v985 = vld [vmem:[%s1 + $0x60] sm:$0xff]
  %v986 = vld [vmem:[%s1 + $0x68] sm:$0xff]
  %v987 = vld [vmem:[%s1 + $0x70] sm:$0xff]
  %v988 = vld [vmem:[%s1 + $0x78] sm:$0xff]
  %v989 = vld [vmem:[%s1 + $0x80] sm:$0xff]
  %v990 = vld [vmem:[%s1 + $0x88] sm:$0xff]
  %v991 = vld [vmem:[%s1 + $0x90] sm:$0xff]
  %v992 = vld [vmem:[%s1 + $0x98] sm:$0xff]
  %v993 = vld [vmem:[%s1 + $0xa0] sm:$0xff]
  %v994 = vld [vmem:[%s1 + $0xa8] sm:$0xff]
  %v995 = vld [vmem:[%s1 + $0xb0] sm:$0xff]
  %v996 = vld [vmem:[%s1 + $0xb8] sm:$0xff]
  %v997 = vld [vmem:[%s1 + $0xc0] sm:$0xff]
  %v998 = vld [vmem:[%s1 + $0xc8] sm:$0xff]
  %v999 = vld [vmem:[%s1 + $0xd0] sm:$0xff]
  %v1000 = vld [vmem:[%s1 + $0xd8] sm:$0xff]
  %v1001 = vld [vmem:[%s1 + $0xe0] sm:$0xff]
  %v1002 = vld [vmem:[%s1 + $0xe8] sm:$0xff]
  %v1003 = vld [vmem:[%s1 + $0xf0] sm:$0xff]
  %v1004 = vld [vmem:[%s1 + $0xf8] sm:$0xff]
  %v1037 = vunpack.c.l.b16 %v973
  %v1038 = vunpack.c.h.b16 %v973
  %v1039 = vunpack.c.l.b16 %v974
  %v1040 = vunpack.c.h.b16 %v974
  %v1041 = vunpack.c.l.b16 %v975
  %v1042 = vunpack.c.h.b16 %v975
  %v1043 = vunpack.c.l.b16 %v976
  %v1044 = vunpack.c.h.b16 %v976
  %v1045 = vunpack.c.l.b16 %v977
  %v1046 = vunpack.c.h.b16 %v977
  %v1047 = vunpack.c.l.b16 %v978
  %v1048 = vunpack.c.h.b16 %v978
  %v1049 = vunpack.c.l.b16 %v979
  %v1050 = vunpack.c.h.b16 %v979
  %v1051 = vunpack.c.l.b16 %v980
  %v1052 = vunpack.c.h.b16 %v980
  %v1053 = vunpack.c.l.b16 %v981
  %v1054 = vunpack.c.h.b16 %v981
  %v1055 = vunpack.c.l.b16 %v982
  %v1056 = vunpack.c.h.b16 %v982
  %v1057 = vunpack.c.l.b16 %v983
  %v1058 = vunpack.c.h.b16 %v983
  %v1059 = vunpack.c.l.b16 %v984
  %v1060 = vunpack.c.h.b16 %v984
  %v1061 = vunpack.c.l.b16 %v985
  %v1062 = vunpack.c.h.b16 %v985
  %v1063 = vunpack.c.l.b16 %v986
  %v1064 = vunpack.c.h.b16 %v986
  %v1065 = vunpack.c.l.b16 %v987
  %v1066 = vunpack.c.h.b16 %v987
  %v1067 = vunpack.c.l.b16 %v988
  %v1068 = vunpack.c.h.b16 %v988
  %v1069 = vunpack.c.l.b16 %v989
  %v1070 = vunpack.c.h.b16 %v989
  %v1071 = vunpack.c.l.b16 %v990
  %v1072 = vunpack.c.h.b16 %v990
  %v1073 = vunpack.c.l.b16 %v991
  %v1074 = vunpack.c.h.b16 %v991
  %v1075 = vunpack.c.l.b16 %v992
  %v1076 = vunpack.c.h.b16 %v992
  %v1077 = vunpack.c.l.b16 %v993
  %v1078 = vunpack.c.h.b16 %v993
  %v1079 = vunpack.c.l.b16 %v994
  %v1080 = vunpack.c.h.b16 %v994
  %v1081 = vunpack.c.l.b16 %v995
  %v1082 = vunpack.c.h.b16 %v995
  %v1083 = vunpack.c.l.b16 %v996
  %v1084 = vunpack.c.h.b16 %v996
  %v1085 = vunpack.c.l.b16 %v997
  %v1086 = vunpack.c.h.b16 %v997
  %v1087 = vunpack.c.l.b16 %v998
  %v1088 = vunpack.c.h.b16 %v998
  %v1089 = vunpack.c.l.b16 %v999
  %v1090 = vunpack.c.h.b16 %v999
  %v1091 = vunpack.c.l.b16 %v1000
  %v1092 = vunpack.c.h.b16 %v1000
  %v1093 = vunpack.c.l.b16 %v1001
  %v1094 = vunpack.c.h.b16 %v1001
  %v1095 = vunpack.c.l.b16 %v1002
  %v1096 = vunpack.c.h.b16 %v1002
  %v1097 = vunpack.c.l.b16 %v1003
  %v1098 = vunpack.c.h.b16 %v1003
  %v1099 = vunpack.c.l.b16 %v1004
  %v1100 = vunpack.c.h.b16 %v1004
  %v1101 = vpack.c.b16 %v1041, %v1037
  %v1102 = vpack.c.b16 %v1042, %v1038
  %v1103 = vpack.c.b16 %v1043, %v1039
  %v1104 = vpack.c.b16 %v1044, %v1040
  %v1105 = vpack.c.b16 %v1049, %v1045
  %v1106 = vpack.c.b16 %v1050, %v1046
  %v1107 = vpack.c.b16 %v1051, %v1047
  %v1108 = vpack.c.b16 %v1052, %v1048
  %v1109 = vpack.c.b16 %v1057, %v1053
  %v1110 = vpack.c.b16 %v1058, %v1054
  %v1111 = vpack.c.b16 %v1059, %v1055
  %v1112 = vpack.c.b16 %v1060, %v1056
  %v1113 = vpack.c.b16 %v1065, %v1061
  %v1114 = vpack.c.b16 %v1066, %v1062
  %v1115 = vpack.c.b16 %v1067, %v1063
  %v1116 = vpack.c.b16 %v1068, %v1064
  %v1117 = vpack.c.b16 %v1073, %v1069
  %v1118 = vpack.c.b16 %v1074, %v1070
  %v1119 = vpack.c.b16 %v1075, %v1071
  %v1120 = vpack.c.b16 %v1076, %v1072
  %v1121 = vpack.c.b16 %v1081, %v1077
  %v1122 = vpack.c.b16 %v1082, %v1078
  %v1123 = vpack.c.b16 %v1083, %v1079
  %v1124 = vpack.c.b16 %v1084, %v1080
  %v1125 = vpack.c.b16 %v1089, %v1085
  %v1126 = vpack.c.b16 %v1090, %v1086
  %v1127 = vpack.c.b16 %v1091, %v1087
  %v1128 = vpack.c.b16 %v1092, %v1088
  %v1129 = vpack.c.b16 %v1097, %v1093
  %v1130 = vpack.c.b16 %v1098, %v1094
  %v1131 = vpack.c.b16 %v1099, %v1095
  %v1132 = vpack.c.b16 %v1100, %v1096
  %1165 = vmatprep.subr.bf16.mxu0 %v1130
  %1166 = vmatpush1.bf16.msra.mxu0 %v1129
  %1167 = vmatprep.subr.bf16.mxu0 %v1126
  %1168 = vmatpush1.bf16.msra.mxu0 %v1125
  %1169 = vmatprep.subr.bf16.mxu0 %v1122
  %1170 = vmatpush1.bf16.msra.mxu0 %v1121
  %1171 = vmatprep.subr.bf16.mxu0 %v1118
  %1172 = vmatpush1.bf16.msra.mxu0 %v1117
  %1173 = vmatprep.subr.bf16.mxu0 %v1114
  %1174 = vmatpush1.bf16.msra.mxu0 %v1113
  %1175 = vmatprep.subr.bf16.mxu0 %v1110
  %1176 = vmatpush1.bf16.msra.mxu0 %v1109
  %1177 = vmatprep.subr.bf16.mxu0 %v1106
  %1178 = vmatpush1.bf16.msra.mxu0 %v1105
  %1179 = vmatprep.subr.bf16.mxu0 %v1102
  %1180 = vmatpush1.bf16.msra.mxu0 %v1101
  %1181 = vmatprep.subr.bf16.mxu0 0
  %1182 = vmatpush2.bf16.msra.mxu0 0
  %1183 = vmatprep.subr.bf16.mxu0 0
  %1184 = vmatpush2.bf16.msra.mxu0 0
  %1185 = vmatprep.subr.bf16.mxu0 0
  %1186 = vmatpush2.bf16.msra.mxu0 0
  %1187 = vmatprep.subr.bf16.mxu0 0
  %1188 = vmatpush2.bf16.msra.mxu0 0
  %1189 = vmatprep.subr.bf16.mxu0 0
  %1190 = vmatpush2.bf16.msra.mxu0 0
  %1191 = vmatprep.subr.bf16.mxu0 0
  %1192 = vmatpush2.bf16.msra.mxu0 0
  %1193 = vmatprep.subr.bf16.mxu0 0
  %1194 = vmatpush2.bf16.msra.mxu0 0
  %1195 = vmatprep.subr.bf16.mxu0 0
  %1196 = vmatpush2.bf16.msra.mxu0 0
  %1197 = vmatprep.mubr.bf16.mxu0 0
  %1198 = vmatmul.mubr.bf16.gmra.mxu0 %v972
  %v1199 = vpop.f32.mrf.mxu0
  %v1200 = vadd.f32 0.0, %v1199
  %v1201 = vpop.f32.mrf.mxu0
  %v1202 = vadd.f32 0.0, %v1201
  %v1203 = vpop.f32.mrf.mxu0
  %v1204 = vpop.f32.mrf.mxu0
  %1205 = vdwg.mxu0
  %1206 = vmatprep.subr.bf16.mxu0 %v1132
  %1207 = vmatpush1.bf16.msra.mxu0 %v1131
  %1208 = vmatprep.subr.bf16.mxu0 %v1128
  %1209 = vmatpush1.bf16.msra.mxu0 %v1127
  %1210 = vmatprep.subr.bf16.mxu0 %v1124
  %1211 = vmatpush1.bf16.msra.mxu0 %v1123
  %1212 = vmatprep.subr.bf16.mxu0 %v1120
  %1213 = vmatpush1.bf16.msra.mxu0 %v1119
  %1214 = vmatprep.subr.bf16.mxu0 %v1116
  %1215 = vmatpush1.bf16.msra.mxu0 %v1115
  %1216 = vmatprep.subr.bf16.mxu0 %v1112
  %1217 = vmatpush1.bf16.msra.mxu0 %v1111
  %1218 = vmatprep.subr.bf16.mxu0 %v1108
  %1219 = vmatpush1.bf16.msra.mxu0 %v1107
  %1220 = vmatprep.subr.bf16.mxu0 %v1104
  %1221 = vmatpush1.bf16.msra.mxu0 %v1103
  %1222 = vmatprep.subr.bf16.mxu0 0
  %1223 = vmatpush2.bf16.msra.mxu0 0
  %1224 = vmatprep.subr.bf16.mxu0 0
  %1225 = vmatpush2.bf16.msra.mxu0 0
  %1226 = vmatprep.subr.bf16.mxu0 0
  %1227 = vmatpush2.bf16.msra.mxu0 0
  %1228 = vmatprep.subr.bf16.mxu0 0
  %1229 = vmatpush2.bf16.msra.mxu0 0
  %1230 = vmatprep.subr.bf16.mxu0 0
  %1231 = vmatpush2.bf16.msra.mxu0 0
  %1232 = vmatprep.subr.bf16.mxu0 0
  %1233 = vmatpush2.bf16.msra.mxu0 0
  %1234 = vmatprep.subr.bf16.mxu0 0
  %1235 = vmatpush2.bf16.msra.mxu0 0
  %1236 = vmatprep.subr.bf16.mxu0 0
  %1237 = vmatpush2.bf16.msra.mxu0 0
  %1238 = vmatprep.mubr.bf16.mxu0 0
  %1239 = vmatmul.mubr.bf16.gmra.mxu0 %v972
  %v1240 = vpop.f32.mrf.mxu0
  %v1241 = vadd.f32 0.0, %v1240
  %v1242 = vpop.f32.mrf.mxu0
  %v1243 = vadd.f32 0.0, %v1242
  %v1244 = vpop.f32.mrf.mxu0
  %v1245 = vpop.f32.mrf.mxu0
  %1246 = vdwg.mxu0
  %v1247 = vadd.f32 %v968, %v1200
  %v1248 = vadd.f32 %v969, %v1202
  %v1249 = vadd.f32 %v970, %v1241
  %v1250 = vadd.f32 %v971, %v1243
  %v1251 = vxor.u32 %v1247, 2147483648
  %v1252 = vmul.f32 %v1251, 1.442695
  %v1253 = vpow.pop %v1252
  %v1254 = vadd.f32 %v1253, 1.0
  %v1255 = vrcp.pop %v1254
  %v1256 = vmul.f32 1.0, %v1255
  %v1257 = vxor.u32 %v1248, 2147483648
  %v1258 = vmul.f32 %v1257, 1.442695
  %v1259 = vpow.pop %v1258
  %v1260 = vadd.f32 %v1259, 1.0
  %v1261 = vrcp.pop %v1260
  %v1262 = vmul.f32 1.0, %v1261
  %v1263 = vtanh.pop %v1249
  %v1264 = vxor.u32 %v1250, 2147483648
  %v1265 = vmul.f32 %v1264, 1.442695
  %v1266 = vpow.pop %v1265
  %v1267 = vadd.f32 %v1266, 1.0
  %v1268 = vrcp.pop %v1267
  %v1269 = vmul.f32 1.0, %v1268
  %v1270 = vmul.f32 %v1262, %v960
  %v1271 = vmul.f32 %v1256, %v1263
  %v1272 = vadd.f32 %v1270, %v1271
  %v1273 = vtanh.pop %v1272
  %v1274 = vmul.f32 %v1269, %v1273
  %s1275 = scalar_lea.vmem %s4, 24
  %1276 = vst [vmem:[%s1275] sm:$0xff] %v1274
  %s1277 = scalar_lea.vmem %s0, 64
  %v1278 = vld [vmem:[%s1277] sm:$0xff]
  %v1279 = vld [vmem:[%s1277 + $0x8] sm:$0xff]
  %v1280 = vunpack.c.l.bf16 %v1278
  %v1281 = vunpack.c.h.bf16 %v1278
  %v1282 = vunpack.c.l.bf16 %v1279
  %v1283 = vunpack.c.h.bf16 %v1279
  %v1284 = vpack.c.bf16 %v1274, %v1274
  %v1285 = vld [vmem:[%s1] sm:$0xff]
  %v1286 = vld [vmem:[%s1 + $0x8] sm:$0xff]
  %v1287 = vld [vmem:[%s1 + $0x10] sm:$0xff]
  %v1288 = vld [vmem:[%s1 + $0x18] sm:$0xff]
  %v1289 = vld [vmem:[%s1 + $0x20] sm:$0xff]
  %v1290 = vld [vmem:[%s1 + $0x28] sm:$0xff]
  %v1291 = vld [vmem:[%s1 + $0x30] sm:$0xff]
  %v1292 = vld [vmem:[%s1 + $0x38] sm:$0xff]
  %v1293 = vld [vmem:[%s1 + $0x40] sm:$0xff]
  %v1294 = vld [vmem:[%s1 + $0x48] sm:$0xff]
  %v1295 = vld [vmem:[%s1 + $0x50] sm:$0xff]
  %v1296 = vld [vmem:[%s1 + $0x58] sm:$0xff]
  %v1297 = vld [vmem:[%s1 + $0x60] sm:$0xff]
  %v1298 = vld [vmem:[%s1 + $0x68] sm:$0xff]
  %v1299 = vld [vmem:[%s1 + $0x70] sm:$0xff]
  %v1300 = vld [vmem:[%s1 + $0x78] sm:$0xff]
  %v1301 = vld [vmem:[%s1 + $0x80] sm:$0xff]
  %v1302 = vld [vmem:[%s1 + $0x88] sm:$0xff]
  %v1303 = vld [vmem:[%s1 + $0x90] sm:$0xff]
  %v1304 = vld [vmem:[%s1 + $0x98] sm:$0xff]
  %v1305 = vld [vmem:[%s1 + $0xa0] sm:$0xff]
  %v1306 = vld [vmem:[%s1 + $0xa8] sm:$0xff]
  %v1307 = vld [vmem:[%s1 + $0xb0] sm:$0xff]
  %v1308 = vld [vmem:[%s1 + $0xb8] sm:$0xff]
  %v1309 = vld [vmem:[%s1 + $0xc0] sm:$0xff]
  %v1310 = vld [vmem:[%s1 + $0xc8] sm:$0xff]
  %v1311 = vld [vmem:[%s1 + $0xd0] sm:$0xff]
  %v1312 = vld [vmem:[%s1 + $0xd8] sm:$0xff]
  %v1313 = vld [vmem:[%s1 + $0xe0] sm:$0xff]
  %v1314 = vld [vmem:[%s1 + $0xe8] sm:$0xff]
  %v1315 = vld [vmem:[%s1 + $0xf0] sm:$0xff]
  %v1316 = vld [vmem:[%s1 + $0xf8] sm:$0xff]
  %v1349 = vunpack.c.l.b16 %v1285
  %v1350 = vunpack.c.h.b16 %v1285
  %v1351 = vunpack.c.l.b16 %v1286
  %v1352 = vunpack.c.h.b16 %v1286
  %v1353 = vunpack.c.l.b16 %v1287
  %v1354 = vunpack.c.h.b16 %v1287
  %v1355 = vunpack.c.l.b16 %v1288
  %v1356 = vunpack.c.h.b16 %v1288
  %v1357 = vunpack.c.l.b16 %v1289
  %v1358 = vunpack.c.h.b16 %v1289
  %v1359 = vunpack.c.l.b16 %v1290
  %v1360 = vunpack.c.h.b16 %v1290
  %v1361 = vunpack.c.l.b16 %v1291
  %v1362 = vunpack.c.h.b16 %v1291
  %v1363 = vunpack.c.l.b16 %v1292
  %v1364 = vunpack.c.h.b16 %v1292
  %v1365 = vunpack.c.l.b16 %v1293
  %v1366 = vunpack.c.h.b16 %v1293
  %v1367 = vunpack.c.l.b16 %v1294
  %v1368 = vunpack.c.h.b16 %v1294
  %v1369 = vunpack.c.l.b16 %v1295
  %v1370 = vunpack.c.h.b16 %v1295
  %v1371 = vunpack.c.l.b16 %v1296
  %v1372 = vunpack.c.h.b16 %v1296
  %v1373 = vunpack.c.l.b16 %v1297
  %v1374 = vunpack.c.h.b16 %v1297
  %v1375 = vunpack.c.l.b16 %v1298
  %v1376 = vunpack.c.h.b16 %v1298
  %v1377 = vunpack.c.l.b16 %v1299
  %v1378 = vunpack.c.h.b16 %v1299
  %v1379 = vunpack.c.l.b16 %v1300
  %v1380 = vunpack.c.h.b16 %v1300
  %v1381 = vunpack.c.l.b16 %v1301
  %v1382 = vunpack.c.h.b16 %v1301
  %v1383 = vunpack.c.l.b16 %v1302
  %v1384 = vunpack.c.h.b16 %v1302
  %v1385 = vunpack.c.l.b16 %v1303
  %v1386 = vunpack.c.h.b16 %v1303
  %v1387 = vunpack.c.l.b16 %v1304
  %v1388 = vunpack.c.h.b16 %v1304
  %v1389 = vunpack.c.l.b16 %v1305
  %v1390 = vunpack.c.h.b16 %v1305
  %v1391 = vunpack.c.l.b16 %v1306
  %v1392 = vunpack.c.h.b16 %v1306
  %v1393 = vunpack.c.l.b16 %v1307
  %v1394 = vunpack.c.h.b16 %v1307
  %v1395 = vunpack.c.l.b16 %v1308
  %v1396 = vunpack.c.h.b16 %v1308
  %v1397 = vunpack.c.l.b16 %v1309
  %v1398 = vunpack.c.h.b16 %v1309
  %v1399 = vunpack.c.l.b16 %v1310
  %v1400 = vunpack.c.h.b16 %v1310
  %v1401 = vunpack.c.l.b16 %v1311
  %v1402 = vunpack.c.h.b16 %v1311
  %v1403 = vunpack.c.l.b16 %v1312
  %v1404 = vunpack.c.h.b16 %v1312
  %v1405 = vunpack.c.l.b16 %v1313
  %v1406 = vunpack.c.h.b16 %v1313
  %v1407 = vunpack.c.l.b16 %v1314
  %v1408 = vunpack.c.h.b16 %v1314
  %v1409 = vunpack.c.l.b16 %v1315
  %v1410 = vunpack.c.h.b16 %v1315
  %v1411 = vunpack.c.l.b16 %v1316
  %v1412 = vunpack.c.h.b16 %v1316
  %v1413 = vpack.c.b16 %v1353, %v1349
  %v1414 = vpack.c.b16 %v1354, %v1350
  %v1415 = vpack.c.b16 %v1355, %v1351
  %v1416 = vpack.c.b16 %v1356, %v1352
  %v1417 = vpack.c.b16 %v1361, %v1357
  %v1418 = vpack.c.b16 %v1362, %v1358
  %v1419 = vpack.c.b16 %v1363, %v1359
  %v1420 = vpack.c.b16 %v1364, %v1360
  %v1421 = vpack.c.b16 %v1369, %v1365
  %v1422 = vpack.c.b16 %v1370, %v1366
  %v1423 = vpack.c.b16 %v1371, %v1367
  %v1424 = vpack.c.b16 %v1372, %v1368
  %v1425 = vpack.c.b16 %v1377, %v1373
  %v1426 = vpack.c.b16 %v1378, %v1374
  %v1427 = vpack.c.b16 %v1379, %v1375
  %v1428 = vpack.c.b16 %v1380, %v1376
  %v1429 = vpack.c.b16 %v1385, %v1381
  %v1430 = vpack.c.b16 %v1386, %v1382
  %v1431 = vpack.c.b16 %v1387, %v1383
  %v1432 = vpack.c.b16 %v1388, %v1384
  %v1433 = vpack.c.b16 %v1393, %v1389
  %v1434 = vpack.c.b16 %v1394, %v1390
  %v1435 = vpack.c.b16 %v1395, %v1391
  %v1436 = vpack.c.b16 %v1396, %v1392
  %v1437 = vpack.c.b16 %v1401, %v1397
  %v1438 = vpack.c.b16 %v1402, %v1398
  %v1439 = vpack.c.b16 %v1403, %v1399
  %v1440 = vpack.c.b16 %v1404, %v1400
  %v1441 = vpack.c.b16 %v1409, %v1405
  %v1442 = vpack.c.b16 %v1410, %v1406
  %v1443 = vpack.c.b16 %v1411, %v1407
  %v1444 = vpack.c.b16 %v1412, %v1408
  %1477 = vmatprep.subr.bf16.mxu0 %v1442
  %1478 = vmatpush1.bf16.msra.mxu0 %v1441
  %1479 = vmatprep.subr.bf16.mxu0 %v1438
  %1480 = vmatpush1.bf16.msra.mxu0 %v1437
  %1481 = vmatprep.subr.bf16.mxu0 %v1434
  %1482 = vmatpush1.bf16.msra.mxu0 %v1433
  %1483 = vmatprep.subr.bf16.mxu0 %v1430
  %1484 = vmatpush1.bf16.msra.mxu0 %v1429
  %1485 = vmatprep.subr.bf16.mxu0 %v1426
  %1486 = vmatpush1.bf16.msra.mxu0 %v1425
  %1487 = vmatprep.subr.bf16.mxu0 %v1422
  %1488 = vmatpush1.bf16.msra.mxu0 %v1421
  %1489 = vmatprep.subr.bf16.mxu0 %v1418
  %1490 = vmatpush1.bf16.msra.mxu0 %v1417
  %1491 = vmatprep.subr.bf16.mxu0 %v1414
  %1492 = vmatpush1.bf16.msra.mxu0 %v1413
  %1493 = vmatprep.subr.bf16.mxu0 0
  %1494 = vmatpush2.bf16.msra.mxu0 0
  %1495 = vmatprep.subr.bf16.mxu0 0
  %1496 = vmatpush2.bf16.msra.mxu0 0
  %1497 = vmatprep.subr.bf16.mxu0 0
  %1498 = vmatpush2.bf16.msra.mxu0 0
  %1499 = vmatprep.subr.bf16.mxu0 0
  %1500 = vmatpush2.bf16.msra.mxu0 0
  %1501 = vmatprep.subr.bf16.mxu0 0
  %1502 = vmatpush2.bf16.msra.mxu0 0
  %1503 = vmatprep.subr.bf16.mxu0 0
  %1504 = vmatpush2.bf16.msra.mxu0 0
  %1505 = vmatprep.subr.bf16.mxu0 0
  %1506 = vmatpush2.bf16.msra.mxu0 0
  %1507 = vmatprep.subr.bf16.mxu0 0
  %1508 = vmatpush2.bf16.msra.mxu0 0
  %1509 = vmatprep.mubr.bf16.mxu0 0
  %1510 = vmatmul.mubr.bf16.gmra.mxu0 %v1284
  %v1511 = vpop.f32.mrf.mxu0
  %v1512 = vadd.f32 0.0, %v1511
  %v1513 = vpop.f32.mrf.mxu0
  %v1514 = vadd.f32 0.0, %v1513
  %v1515 = vpop.f32.mrf.mxu0
  %v1516 = vpop.f32.mrf.mxu0
  %1517 = vdwg.mxu0
  %1518 = vmatprep.subr.bf16.mxu0 %v1444
  %1519 = vmatpush1.bf16.msra.mxu0 %v1443
  %1520 = vmatprep.subr.bf16.mxu0 %v1440
  %1521 = vmatpush1.bf16.msra.mxu0 %v1439
  %1522 = vmatprep.subr.bf16.mxu0 %v1436
  %1523 = vmatpush1.bf16.msra.mxu0 %v1435
  %1524 = vmatprep.subr.bf16.mxu0 %v1432
  %1525 = vmatpush1.bf16.msra.mxu0 %v1431
  %1526 = vmatprep.subr.bf16.mxu0 %v1428
  %1527 = vmatpush1.bf16.msra.mxu0 %v1427
  %1528 = vmatprep.subr.bf16.mxu0 %v1424
  %1529 = vmatpush1.bf16.msra.mxu0 %v1423
  %1530 = vmatprep.subr.bf16.mxu0 %v1420
  %1531 = vmatpush1.bf16.msra.mxu0 %v1419
  %1532 = vmatprep.subr.bf16.mxu0 %v1416
  %1533 = vmatpush1.bf16.msra.mxu0 %v1415
  %1534 = vmatprep.subr.bf16.mxu0 0
  %1535 = vmatpush2.bf16.msra.mxu0 0
  %1536 = vmatprep.subr.bf16.mxu0 0
  %1537 = vmatpush2.bf16.msra.mxu0 0
  %1538 = vmatprep.subr.bf16.mxu0 0
  %1539 = vmatpush2.bf16.msra.mxu0 0
  %1540 = vmatprep.subr.bf16.mxu0 0
  %1541 = vmatpush2.bf16.msra.mxu0 0
  %1542 = vmatprep.subr.bf16.mxu0 0
  %1543 = vmatpush2.bf16.msra.mxu0 0
  %1544 = vmatprep.subr.bf16.mxu0 0
  %1545 = vmatpush2.bf16.msra.mxu0 0
  %1546 = vmatprep.subr.bf16.mxu0 0
  %1547 = vmatpush2.bf16.msra.mxu0 0
  %1548 = vmatprep.subr.bf16.mxu0 0
  %1549 = vmatpush2.bf16.msra.mxu0 0
  %1550 = vmatprep.mubr.bf16.mxu0 0
  %1551 = vmatmul.mubr.bf16.gmra.mxu0 %v1284
  %v1552 = vpop.f32.mrf.mxu0
  %v1553 = vadd.f32 0.0, %v1552
  %v1554 = vpop.f32.mrf.mxu0
  %v1555 = vadd.f32 0.0, %v1554
  %v1556 = vpop.f32.mrf.mxu0
  %v1557 = vpop.f32.mrf.mxu0
  %1558 = vdwg.mxu0
  %v1559 = vadd.f32 %v1280, %v1512
  %v1560 = vadd.f32 %v1281, %v1514
  %v1561 = vadd.f32 %v1282, %v1553
  %v1562 = vadd.f32 %v1283, %v1555
  %v1563 = vxor.u32 %v1559, 2147483648
  %v1564 = vmul.f32 %v1563, 1.442695
  %v1565 = vpow.pop %v1564
  %v1566 = vadd.f32 %v1565, 1.0
  %v1567 = vrcp.pop %v1566
  %v1568 = vmul.f32 1.0, %v1567
  %v1569 = vxor.u32 %v1560, 2147483648
  %v1570 = vmul.f32 %v1569, 1.442695
  %v1571 = vpow.pop %v1570
  %v1572 = vadd.f32 %v1571, 1.0
  %v1573 = vrcp.pop %v1572
  %v1574 = vmul.f32 1.0, %v1573
  %v1575 = vtanh.pop %v1561
  %v1576 = vxor.u32 %v1562, 2147483648
  %v1577 = vmul.f32 %v1576, 1.442695
  %v1578 = vpow.pop %v1577
  %v1579 = vadd.f32 %v1578, 1.0
  %v1580 = vrcp.pop %v1579
  %v1581 = vmul.f32 1.0, %v1580
  %v1582 = vmul.f32 %v1574, %v1272
  %v1583 = vmul.f32 %v1568, %v1575
  %v1584 = vadd.f32 %v1582, %v1583
  %v1585 = vtanh.pop %v1584
  %v1586 = vmul.f32 %v1581, %v1585
  %s1587 = scalar_lea.vmem %s4, 32
  %1588 = vst [vmem:[%s1587] sm:$0xff] %v1586
  %s1589 = scalar_lea.vmem %s0, 80
  %v1590 = vld [vmem:[%s1589] sm:$0xff]
  %v1591 = vld [vmem:[%s1589 + $0x8] sm:$0xff]
  %v1592 = vunpack.c.l.bf16 %v1590
  %v1593 = vunpack.c.h.bf16 %v1590
  %v1594 = vunpack.c.l.bf16 %v1591
  %v1595 = vunpack.c.h.bf16 %v1591
  %v1596 = vpack.c.bf16 %v1586, %v1586
  %v1597 = vld [vmem:[%s1] sm:$0xff]
  %v1598 = vld [vmem:[%s1 + $0x8] sm:$0xff]
  %v1599 = vld [vmem:[%s1 + $0x10] sm:$0xff]
  %v1600 = vld [vmem:[%s1 + $0x18] sm:$0xff]
  %v1601 = vld [vmem:[%s1 + $0x20] sm:$0xff]
  %v1602 = vld [vmem:[%s1 + $0x28] sm:$0xff]
  %v1603 = vld [vmem:[%s1 + $0x30] sm:$0xff]
  %v1604 = vld [vmem:[%s1 + $0x38] sm:$0xff]
  %v1605 = vld [vmem:[%s1 + $0x40] sm:$0xff]
  %v1606 = vld [vmem:[%s1 + $0x48] sm:$0xff]
  %v1607 = vld [vmem:[%s1 + $0x50] sm:$0xff]
  %v1608 = vld [vmem:[%s1 + $0x58] sm:$0xff]
  %v1609 = vld [vmem:[%s1 + $0x60] sm:$0xff]
  %v1610 = vld [vmem:[%s1 + $0x68] sm:$0xff]
  %v1611 = vld [vmem:[%s1 + $0x70] sm:$0xff]
  %v1612 = vld [vmem:[%s1 + $0x78] sm:$0xff]
  %v1613 = vld [vmem:[%s1 + $0x80] sm:$0xff]
  %v1614 = vld [vmem:[%s1 + $0x88] sm:$0xff]
  %v1615 = vld [vmem:[%s1 + $0x90] sm:$0xff]
  %v1616 = vld [vmem:[%s1 + $0x98] sm:$0xff]
  %v1617 = vld [vmem:[%s1 + $0xa0] sm:$0xff]
  %v1618 = vld [vmem:[%s1 + $0xa8] sm:$0xff]
  %v1619 = vld [vmem:[%s1 + $0xb0] sm:$0xff]
  %v1620 = vld [vmem:[%s1 + $0xb8] sm:$0xff]
  %v1621 = vld [vmem:[%s1 + $0xc0] sm:$0xff]
  %v1622 = vld [vmem:[%s1 + $0xc8] sm:$0xff]
  %v1623 = vld [vmem:[%s1 + $0xd0] sm:$0xff]
  %v1624 = vld [vmem:[%s1 + $0xd8] sm:$0xff]
  %v1625 = vld [vmem:[%s1 + $0xe0] sm:$0xff]
  %v1626 = vld [vmem:[%s1 + $0xe8] sm:$0xff]
  %v1627 = vld [vmem:[%s1 + $0xf0] sm:$0xff]
  %v1628 = vld [vmem:[%s1 + $0xf8] sm:$0xff]
  %v1661 = vunpack.c.l.b16 %v1597
  %v1662 = vunpack.c.h.b16 %v1597
  %v1663 = vunpack.c.l.b16 %v1598
  %v1664 = vunpack.c.h.b16 %v1598
  %v1665 = vunpack.c.l.b16 %v1599
  %v1666 = vunpack.c.h.b16 %v1599
  %v1667 = vunpack.c.l.b16 %v1600
  %v1668 = vunpack.c.h.b16 %v1600
  %v1669 = vunpack.c.l.b16 %v1601
  %v1670 = vunpack.c.h.b16 %v1601
  %v1671 = vunpack.c.l.b16 %v1602
  %v1672 = vunpack.c.h.b16 %v1602
  %v1673 = vunpack.c.l.b16 %v1603
  %v1674 = vunpack.c.h.b16 %v1603
  %v1675 = vunpack.c.l.b16 %v1604
  %v1676 = vunpack.c.h.b16 %v1604
  %v1677 = vunpack.c.l.b16 %v1605
  %v1678 = vunpack.c.h.b16 %v1605
  %v1679 = vunpack.c.l.b16 %v1606
  %v1680 = vunpack.c.h.b16 %v1606
  %v1681 = vunpack.c.l.b16 %v1607
  %v1682 = vunpack.c.h.b16 %v1607
  %v1683 = vunpack.c.l.b16 %v1608
  %v1684 = vunpack.c.h.b16 %v1608
  %v1685 = vunpack.c.l.b16 %v1609
  %v1686 = vunpack.c.h.b16 %v1609
  %v1687 = vunpack.c.l.b16 %v1610
  %v1688 = vunpack.c.h.b16 %v1610
  %v1689 = vunpack.c.l.b16 %v1611
  %v1690 = vunpack.c.h.b16 %v1611
  %v1691 = vunpack.c.l.b16 %v1612
  %v1692 = vunpack.c.h.b16 %v1612
  %v1693 = vunpack.c.l.b16 %v1613
  %v1694 = vunpack.c.h.b16 %v1613
  %v1695 = vunpack.c.l.b16 %v1614
  %v1696 = vunpack.c.h.b16 %v1614
  %v1697 = vunpack.c.l.b16 %v1615
  %v1698 = vunpack.c.h.b16 %v1615
  %v1699 = vunpack.c.l.b16 %v1616
  %v1700 = vunpack.c.h.b16 %v1616
  %v1701 = vunpack.c.l.b16 %v1617
  %v1702 = vunpack.c.h.b16 %v1617
  %v1703 = vunpack.c.l.b16 %v1618
  %v1704 = vunpack.c.h.b16 %v1618
  %v1705 = vunpack.c.l.b16 %v1619
  %v1706 = vunpack.c.h.b16 %v1619
  %v1707 = vunpack.c.l.b16 %v1620
  %v1708 = vunpack.c.h.b16 %v1620
  %v1709 = vunpack.c.l.b16 %v1621
  %v1710 = vunpack.c.h.b16 %v1621
  %v1711 = vunpack.c.l.b16 %v1622
  %v1712 = vunpack.c.h.b16 %v1622
  %v1713 = vunpack.c.l.b16 %v1623
  %v1714 = vunpack.c.h.b16 %v1623
  %v1715 = vunpack.c.l.b16 %v1624
  %v1716 = vunpack.c.h.b16 %v1624
  %v1717 = vunpack.c.l.b16 %v1625
  %v1718 = vunpack.c.h.b16 %v1625
  %v1719 = vunpack.c.l.b16 %v1626
  %v1720 = vunpack.c.h.b16 %v1626
  %v1721 = vunpack.c.l.b16 %v1627
  %v1722 = vunpack.c.h.b16 %v1627
  %v1723 = vunpack.c.l.b16 %v1628
  %v1724 = vunpack.c.h.b16 %v1628
  %v1725 = vpack.c.b16 %v1665, %v1661
  %v1726 = vpack.c.b16 %v1666, %v1662
  %v1727 = vpack.c.b16 %v1667, %v1663
  %v1728 = vpack.c.b16 %v1668, %v1664
  %v1729 = vpack.c.b16 %v1673, %v1669
  %v1730 = vpack.c.b16 %v1674, %v1670
  %v1731 = vpack.c.b16 %v1675, %v1671
  %v1732 = vpack.c.b16 %v1676, %v1672
  %v1733 = vpack.c.b16 %v1681, %v1677
  %v1734 = vpack.c.b16 %v1682, %v1678
  %v1735 = vpack.c.b16 %v1683, %v1679
  %v1736 = vpack.c.b16 %v1684, %v1680
  %v1737 = vpack.c.b16 %v1689, %v1685
  %v1738 = vpack.c.b16 %v1690, %v1686
  %v1739 = vpack.c.b16 %v1691, %v1687
  %v1740 = vpack.c.b16 %v1692, %v1688
  %v1741 = vpack.c.b16 %v1697, %v1693
  %v1742 = vpack.c.b16 %v1698, %v1694
  %v1743 = vpack.c.b16 %v1699, %v1695
  %v1744 = vpack.c.b16 %v1700, %v1696
  %v1745 = vpack.c.b16 %v1705, %v1701
  %v1746 = vpack.c.b16 %v1706, %v1702
  %v1747 = vpack.c.b16 %v1707, %v1703
  %v1748 = vpack.c.b16 %v1708, %v1704
  %v1749 = vpack.c.b16 %v1713, %v1709
  %v1750 = vpack.c.b16 %v1714, %v1710
  %v1751 = vpack.c.b16 %v1715, %v1711
  %v1752 = vpack.c.b16 %v1716, %v1712
  %v1753 = vpack.c.b16 %v1721, %v1717
  %v1754 = vpack.c.b16 %v1722, %v1718
  %v1755 = vpack.c.b16 %v1723, %v1719
  %v1756 = vpack.c.b16 %v1724, %v1720
  %1789 = vmatprep.subr.bf16.mxu0 %v1754
  %1790 = vmatpush1.bf16.msra.mxu0 %v1753
  %1791 = vmatprep.subr.bf16.mxu0 %v1750
  %1792 = vmatpush1.bf16.msra.mxu0 %v1749
  %1793 = vmatprep.subr.bf16.mxu0 %v1746
  %1794 = vmatpush1.bf16.msra.mxu0 %v1745
  %1795 = vmatprep.subr.bf16.mxu0 %v1742
  %1796 = vmatpush1.bf16.msra.mxu0 %v1741
  %1797 = vmatprep.subr.bf16.mxu0 %v1738
  %1798 = vmatpush1.bf16.msra.mxu0 %v1737
  %1799 = vmatprep.subr.bf16.mxu0 %v1734
  %1800 = vmatpush1.bf16.msra.mxu0 %v1733
  %1801 = vmatprep.subr.bf16.mxu0 %v1730
  %1802 = vmatpush1.bf16.msra.mxu0 %v1729
  %1803 = vmatprep.subr.bf16.mxu0 %v1726
  %1804 = vmatpush1.bf16.msra.mxu0 %v1725
  %1805 = vmatprep.subr.bf16.mxu0 0
  %1806 = vmatpush2.bf16.msra.mxu0 0
  %1807 = vmatprep.subr.bf16.mxu0 0
  %1808 = vmatpush2.bf16.msra.mxu0 0
  %1809 = vmatprep.subr.bf16.mxu0 0
  %1810 = vmatpush2.bf16.msra.mxu0 0
  %1811 = vmatprep.subr.bf16.mxu0 0
  %1812 = vmatpush2.bf16.msra.mxu0 0
  %1813 = vmatprep.subr.bf16.mxu0 0
  %1814 = vmatpush2.bf16.msra.mxu0 0
  %1815 = vmatprep.subr.bf16.mxu0 0
  %1816 = vmatpush2.bf16.msra.mxu0 0
  %1817 = vmatprep.subr.bf16.mxu0 0
  %1818 = vmatpush2.bf16.msra.mxu0 0
  %1819 = vmatprep.subr.bf16.mxu0 0
  %1820 = vmatpush2.bf16.msra.mxu0 0
  %1821 = vmatprep.mubr.bf16.mxu0 0
  %1822 = vmatmul.mubr.bf16.gmra.mxu0 %v1596
  %v1823 = vpop.f32.mrf.mxu0
  %v1824 = vadd.f32 0.0, %v1823
  %v1825 = vpop.f32.mrf.mxu0
  %v1826 = vadd.f32 0.0, %v1825
  %v1827 = vpop.f32.mrf.mxu0
  %v1828 = vpop.f32.mrf.mxu0
  %1829 = vdwg.mxu0
  %1830 = vmatprep.subr.bf16.mxu0 %v1756
  %1831 = vmatpush1.bf16.msra.mxu0 %v1755
  %1832 = vmatprep.subr.bf16.mxu0 %v1752
  %1833 = vmatpush1.bf16.msra.mxu0 %v1751
  %1834 = vmatprep.subr.bf16.mxu0 %v1748
  %1835 = vmatpush1.bf16.msra.mxu0 %v1747
  %1836 = vmatprep.subr.bf16.mxu0 %v1744
  %1837 = vmatpush1.bf16.msra.mxu0 %v1743
  %1838 = vmatprep.subr.bf16.mxu0 %v1740
  %1839 = vmatpush1.bf16.msra.mxu0 %v1739
  %1840 = vmatprep.subr.bf16.mxu0 %v1736
  %1841 = vmatpush1.bf16.msra.mxu0 %v1735
  %1842 = vmatprep.subr.bf16.mxu0 %v1732
  %1843 = vmatpush1.bf16.msra.mxu0 %v1731
  %1844 = vmatprep.subr.bf16.mxu0 %v1728
  %1845 = vmatpush1.bf16.msra.mxu0 %v1727
  %1846 = vmatprep.subr.bf16.mxu0 0
  %1847 = vmatpush2.bf16.msra.mxu0 0
  %1848 = vmatprep.subr.bf16.mxu0 0
  %1849 = vmatpush2.bf16.msra.mxu0 0
  %1850 = vmatprep.subr.bf16.mxu0 0
  %1851 = vmatpush2.bf16.msra.mxu0 0
  %1852 = vmatprep.subr.bf16.mxu0 0
  %1853 = vmatpush2.bf16.msra.mxu0 0
  %1854 = vmatprep.subr.bf16.mxu0 0
  %1855 = vmatpush2.bf16.msra.mxu0 0
  %1856 = vmatprep.subr.bf16.mxu0 0
  %1857 = vmatpush2.bf16.msra.mxu0 0
  %1858 = vmatprep.subr.bf16.mxu0 0
  %1859 = vmatpush2.bf16.msra.mxu0 0
  %1860 = vmatprep.subr.bf16.mxu0 0
  %1861 = vmatpush2.bf16.msra.mxu0 0
  %1862 = vmatprep.mubr.bf16.mxu0 0
  %1863 = vmatmul.mubr.bf16.gmra.mxu0 %v1596
  %v1864 = vpop.f32.mrf.mxu0
  %v1865 = vadd.f32 0.0, %v1864
  %v1866 = vpop.f32.mrf.mxu0
  %v1867 = vadd.f32 0.0, %v1866
  %v1868 = vpop.f32.mrf.mxu0
  %v1869 = vpop.f32.mrf.mxu0
  %1870 = vdwg.mxu0
  %v1871 = vadd.f32 %v1592, %v1824
  %v1872 = vadd.f32 %v1593, %v1826
  %v1873 = vadd.f32 %v1594, %v1865
  %v1874 = vadd.f32 %v1595, %v1867
  %v1875 = vxor.u32 %v1871, 2147483648
  %v1876 = vmul.f32 %v1875, 1.442695
  %v1877 = vpow.pop %v1876
  %v1878 = vadd.f32 %v1877, 1.0
  %v1879 = vrcp.pop %v1878
  %v1880 = vmul.f32 1.0, %v1879
  %v1881 = vxor.u32 %v1872, 2147483648
  %v1882 = vmul.f32 %v1881, 1.442695
  %v1883 = vpow.pop %v1882
  %v1884 = vadd.f32 %v1883, 1.0
  %v1885 = vrcp.pop %v1884
  %v1886 = vmul.f32 1.0, %v1885
  %v1887 = vtanh.pop %v1873
  %v1888 = vxor.u32 %v1874, 2147483648
  %v1889 = vmul.f32 %v1888, 1.442695
  %v1890 = vpow.pop %v1889
  %v1891 = vadd.f32 %v1890, 1.0
  %v1892 = vrcp.pop %v1891
  %v1893 = vmul.f32 1.0, %v1892
  %v1894 = vmul.f32 %v1886, %v1584
  %v1895 = vmul.f32 %v1880, %v1887
  %v1896 = vadd.f32 %v1894, %v1895
  %v1897 = vtanh.pop %v1896
  %v1898 = vmul.f32 %v1893, %v1897
  %s1899 = scalar_lea.vmem %s4, 40
  %1900 = vst [vmem:[%s1899] sm:$0xff] %v1898
  %s1901 = scalar_lea.vmem %s0, 96
  %v1902 = vld [vmem:[%s1901] sm:$0xff]
  %v1903 = vld [vmem:[%s1901 + $0x8] sm:$0xff]
  %v1904 = vunpack.c.l.bf16 %v1902
  %v1905 = vunpack.c.h.bf16 %v1902
  %v1906 = vunpack.c.l.bf16 %v1903
  %v1907 = vunpack.c.h.bf16 %v1903
  %v1908 = vpack.c.bf16 %v1898, %v1898
  %v1909 = vld [vmem:[%s1] sm:$0xff]
  %v1910 = vld [vmem:[%s1 + $0x8] sm:$0xff]
  %v1911 = vld [vmem:[%s1 + $0x10] sm:$0xff]
  %v1912 = vld [vmem:[%s1 + $0x18] sm:$0xff]
  %v1913 = vld [vmem:[%s1 + $0x20] sm:$0xff]
  %v1914 = vld [vmem:[%s1 + $0x28] sm:$0xff]
  %v1915 = vld [vmem:[%s1 + $0x30] sm:$0xff]
  %v1916 = vld [vmem:[%s1 + $0x38] sm:$0xff]
  %v1917 = vld [vmem:[%s1 + $0x40] sm:$0xff]
  %v1918 = vld [vmem:[%s1 + $0x48] sm:$0xff]
  %v1919 = vld [vmem:[%s1 + $0x50] sm:$0xff]
  %v1920 = vld [vmem:[%s1 + $0x58] sm:$0xff]
  %v1921 = vld [vmem:[%s1 + $0x60] sm:$0xff]
  %v1922 = vld [vmem:[%s1 + $0x68] sm:$0xff]
  %v1923 = vld [vmem:[%s1 + $0x70] sm:$0xff]
  %v1924 = vld [vmem:[%s1 + $0x78] sm:$0xff]
  %v1925 = vld [vmem:[%s1 + $0x80] sm:$0xff]
  %v1926 = vld [vmem:[%s1 + $0x88] sm:$0xff]
  %v1927 = vld [vmem:[%s1 + $0x90] sm:$0xff]
  %v1928 = vld [vmem:[%s1 + $0x98] sm:$0xff]
  %v1929 = vld [vmem:[%s1 + $0xa0] sm:$0xff]
  %v1930 = vld [vmem:[%s1 + $0xa8] sm:$0xff]
  %v1931 = vld [vmem:[%s1 + $0xb0] sm:$0xff]
  %v1932 = vld [vmem:[%s1 + $0xb8] sm:$0xff]
  %v1933 = vld [vmem:[%s1 + $0xc0] sm:$0xff]
  %v1934 = vld [vmem:[%s1 + $0xc8] sm:$0xff]
  %v1935 = vld [vmem:[%s1 + $0xd0] sm:$0xff]
  %v1936 = vld [vmem:[%s1 + $0xd8] sm:$0xff]
  %v1937 = vld [vmem:[%s1 + $0xe0] sm:$0xff]
  %v1938 = vld [vmem:[%s1 + $0xe8] sm:$0xff]
  %v1939 = vld [vmem:[%s1 + $0xf0] sm:$0xff]
  %v1940 = vld [vmem:[%s1 + $0xf8] sm:$0xff]
  %v1973 = vunpack.c.l.b16 %v1909
  %v1974 = vunpack.c.h.b16 %v1909
  %v1975 = vunpack.c.l.b16 %v1910
  %v1976 = vunpack.c.h.b16 %v1910
  %v1977 = vunpack.c.l.b16 %v1911
  %v1978 = vunpack.c.h.b16 %v1911
  %v1979 = vunpack.c.l.b16 %v1912
  %v1980 = vunpack.c.h.b16 %v1912
  %v1981 = vunpack.c.l.b16 %v1913
  %v1982 = vunpack.c.h.b16 %v1913
  %v1983 = vunpack.c.l.b16 %v1914
  %v1984 = vunpack.c.h.b16 %v1914
  %v1985 = vunpack.c.l.b16 %v1915
  %v1986 = vunpack.c.h.b16 %v1915
  %v1987 = vunpack.c.l.b16 %v1916
  %v1988 = vunpack.c.h.b16 %v1916
  %v1989 = vunpack.c.l.b16 %v1917
  %v1990 = vunpack.c.h.b16 %v1917
  %v1991 = vunpack.c.l.b16 %v1918
  %v1992 = vunpack.c.h.b16 %v1918
  %v1993 = vunpack.c.l.b16 %v1919
  %v1994 = vunpack.c.h.b16 %v1919
  %v1995 = vunpack.c.l.b16 %v1920
  %v1996 = vunpack.c.h.b16 %v1920
  %v1997 = vunpack.c.l.b16 %v1921
  %v1998 = vunpack.c.h.b16 %v1921
  %v1999 = vunpack.c.l.b16 %v1922
  %v2000 = vunpack.c.h.b16 %v1922
  %v2001 = vunpack.c.l.b16 %v1923
  %v2002 = vunpack.c.h.b16 %v1923
  %v2003 = vunpack.c.l.b16 %v1924
  %v2004 = vunpack.c.h.b16 %v1924
  %v2005 = vunpack.c.l.b16 %v1925
  %v2006 = vunpack.c.h.b16 %v1925
  %v2007 = vunpack.c.l.b16 %v1926
  %v2008 = vunpack.c.h.b16 %v1926
  %v2009 = vunpack.c.l.b16 %v1927
  %v2010 = vunpack.c.h.b16 %v1927
  %v2011 = vunpack.c.l.b16 %v1928
  %v2012 = vunpack.c.h.b16 %v1928
  %v2013 = vunpack.c.l.b16 %v1929
  %v2014 = vunpack.c.h.b16 %v1929
  %v2015 = vunpack.c.l.b16 %v1930
  %v2016 = vunpack.c.h.b16 %v1930
  %v2017 = vunpack.c.l.b16 %v1931
  %v2018 = vunpack.c.h.b16 %v1931
  %v2019 = vunpack.c.l.b16 %v1932
  %v2020 = vunpack.c.h.b16 %v1932
  %v2021 = vunpack.c.l.b16 %v1933
  %v2022 = vunpack.c.h.b16 %v1933
  %v2023 = vunpack.c.l.b16 %v1934
  %v2024 = vunpack.c.h.b16 %v1934
  %v2025 = vunpack.c.l.b16 %v1935
  %v2026 = vunpack.c.h.b16 %v1935
  %v2027 = vunpack.c.l.b16 %v1936
  %v2028 = vunpack.c.h.b16 %v1936
  %v2029 = vunpack.c.l.b16 %v1937
  %v2030 = vunpack.c.h.b16 %v1937
  %v2031 = vunpack.c.l.b16 %v1938
  %v2032 = vunpack.c.h.b16 %v1938
  %v2033 = vunpack.c.l.b16 %v1939
  %v2034 = vunpack.c.h.b16 %v1939
  %v2035 = vunpack.c.l.b16 %v1940
  %v2036 = vunpack.c.h.b16 %v1940
  %v2037 = vpack.c.b16 %v1977, %v1973
  %v2038 = vpack.c.b16 %v1978, %v1974
  %v2039 = vpack.c.b16 %v1979, %v1975
  %v2040 = vpack.c.b16 %v1980, %v1976
  %v2041 = vpack.c.b16 %v1985, %v1981
  %v2042 = vpack.c.b16 %v1986, %v1982
  %v2043 = vpack.c.b16 %v1987, %v1983
  %v2044 = vpack.c.b16 %v1988, %v1984
  %v2045 = vpack.c.b16 %v1993, %v1989
  %v2046 = vpack.c.b16 %v1994, %v1990
  %v2047 = vpack.c.b16 %v1995, %v1991
  %v2048 = vpack.c.b16 %v1996, %v1992
  %v2049 = vpack.c.b16 %v2001, %v1997
  %v2050 = vpack.c.b16 %v2002, %v1998
  %v2051 = vpack.c.b16 %v2003, %v1999
  %v2052 = vpack.c.b16 %v2004, %v2000
  %v2053 = vpack.c.b16 %v2009, %v2005
  %v2054 = vpack.c.b16 %v2010, %v2006
  %v2055 = vpack.c.b16 %v2011, %v2007
  %v2056 = vpack.c.b16 %v2012, %v2008
  %v2057 = vpack.c.b16 %v2017, %v2013
  %v2058 = vpack.c.b16 %v2018, %v2014
  %v2059 = vpack.c.b16 %v2019, %v2015
  %v2060 = vpack.c.b16 %v2020, %v2016
  %v2061 = vpack.c.b16 %v2025, %v2021
  %v2062 = vpack.c.b16 %v2026, %v2022
  %v2063 = vpack.c.b16 %v2027, %v2023
  %v2064 = vpack.c.b16 %v2028, %v2024
  %v2065 = vpack.c.b16 %v2033, %v2029
  %v2066 = vpack.c.b16 %v2034, %v2030
  %v2067 = vpack.c.b16 %v2035, %v2031
  %v2068 = vpack.c.b16 %v2036, %v2032
  %2101 = vmatprep.subr.bf16.mxu0 %v2066
  %2102 = vmatpush1.bf16.msra.mxu0 %v2065
  %2103 = vmatprep.subr.bf16.mxu0 %v2062
  %2104 = vmatpush1.bf16.msra.mxu0 %v2061
  %2105 = vmatprep.subr.bf16.mxu0 %v2058
  %2106 = vmatpush1.bf16.msra.mxu0 %v2057
  %2107 = vmatprep.subr.bf16.mxu0 %v2054
  %2108 = vmatpush1.bf16.msra.mxu0 %v2053
  %2109 = vmatprep.subr.bf16.mxu0 %v2050
  %2110 = vmatpush1.bf16.msra.mxu0 %v2049
  %2111 = vmatprep.subr.bf16.mxu0 %v2046
  %2112 = vmatpush1.bf16.msra.mxu0 %v2045
  %2113 = vmatprep.subr.bf16.mxu0 %v2042
  %2114 = vmatpush1.bf16.msra.mxu0 %v2041
  %2115 = vmatprep.subr.bf16.mxu0 %v2038
  %2116 = vmatpush1.bf16.msra.mxu0 %v2037
  %2117 = vmatprep.subr.bf16.mxu0 0
  %2118 = vmatpush2.bf16.msra.mxu0 0
  %2119 = vmatprep.subr.bf16.mxu0 0
  %2120 = vmatpush2.bf16.msra.mxu0 0
  %2121 = vmatprep.subr.bf16.mxu0 0
  %2122 = vmatpush2.bf16.msra.mxu0 0
  %2123 = vmatprep.subr.bf16.mxu0 0
  %2124 = vmatpush2.bf16.msra.mxu0 0
  %2125 = vmatprep.subr.bf16.mxu0 0
  %2126 = vmatpush2.bf16.msra.mxu0 0
  %2127 = vmatprep.subr.bf16.mxu0 0
  %2128 = vmatpush2.bf16.msra.mxu0 0
  %2129 = vmatprep.subr.bf16.mxu0 0
  %2130 = vmatpush2.bf16.msra.mxu0 0
  %2131 = vmatprep.subr.bf16.mxu0 0
  %2132 = vmatpush2.bf16.msra.mxu0 0
  %2133 = vmatprep.mubr.bf16.mxu0 0
  %2134 = vmatmul.mubr.bf16.gmra.mxu0 %v1908
  %v2135 = vpop.f32.mrf.mxu0
  %v2136 = vadd.f32 0.0, %v2135
  %v2137 = vpop.f32.mrf.mxu0
  %v2138 = vadd.f32 0.0, %v2137
  %v2139 = vpop.f32.mrf.mxu0
  %v2140 = vpop.f32.mrf.mxu0
  %2141 = vdwg.mxu0
  %2142 = vmatprep.subr.bf16.mxu0 %v2068
  %2143 = vmatpush1.bf16.msra.mxu0 %v2067
  %2144 = vmatprep.subr.bf16.mxu0 %v2064
  %2145 = vmatpush1.bf16.msra.mxu0 %v2063
  %2146 = vmatprep.subr.bf16.mxu0 %v2060
  %2147 = vmatpush1.bf16.msra.mxu0 %v2059
  %2148 = vmatprep.subr.bf16.mxu0 %v2056
  %2149 = vmatpush1.bf16.msra.mxu0 %v2055
  %2150 = vmatprep.subr.bf16.mxu0 %v2052
  %2151 = vmatpush1.bf16.msra.mxu0 %v2051
  %2152 = vmatprep.subr.bf16.mxu0 %v2048
  %2153 = vmatpush1.bf16.msra.mxu0 %v2047
  %2154 = vmatprep.subr.bf16.mxu0 %v2044
  %2155 = vmatpush1.bf16.msra.mxu0 %v2043
  %2156 = vmatprep.subr.bf16.mxu0 %v2040
  %2157 = vmatpush1.bf16.msra.mxu0 %v2039
  %2158 = vmatprep.subr.bf16.mxu0 0
  %2159 = vmatpush2.bf16.msra.mxu0 0
  %2160 = vmatprep.subr.bf16.mxu0 0
  %2161 = vmatpush2.bf16.msra.mxu0 0
  %2162 = vmatprep.subr.bf16.mxu0 0
  %2163 = vmatpush2.bf16.msra.mxu0 0
  %2164 = vmatprep.subr.bf16.mxu0 0
  %2165 = vmatpush2.bf16.msra.mxu0 0
  %2166 = vmatprep.subr.bf16.mxu0 0
  %2167 = vmatpush2.bf16.msra.mxu0 0
  %2168 = vmatprep.subr.bf16.mxu0 0
  %2169 = vmatpush2.bf16.msra.mxu0 0
  %2170 = vmatprep.subr.bf16.mxu0 0
  %2171 = vmatpush2.bf16.msra.mxu0 0
  %2172 = vmatprep.subr.bf16.mxu0 0
  %2173 = vmatpush2.bf16.msra.mxu0 0
  %2174 = vmatprep.mubr.bf16.mxu0 0
  %2175 = vmatmul.mubr.bf16.gmra.mxu0 %v1908
  %v2176 = vpop.f32.mrf.mxu0
  %v2177 = vadd.f32 0.0, %v2176
  %v2178 = vpop.f32.mrf.mxu0
  %v2179 = vadd.f32 0.0, %v2178
  %v2180 = vpop.f32.mrf.mxu0
  %v2181 = vpop.f32.mrf.mxu0
  %2182 = vdwg.mxu0
  %v2183 = vadd.f32 %v1904, %v2136
  %v2184 = vadd.f32 %v1905, %v2138
  %v2185 = vadd.f32 %v1906, %v2177
  %v2186 = vadd.f32 %v1907, %v2179
  %v2187 = vxor.u32 %v2183, 2147483648
  %v2188 = vmul.f32 %v2187, 1.442695
  %v2189 = vpow.pop %v2188
  %v2190 = vadd.f32 %v2189, 1.0
  %v2191 = vrcp.pop %v2190
  %v2192 = vmul.f32 1.0, %v2191
  %v2193 = vxor.u32 %v2184, 2147483648
  %v2194 = vmul.f32 %v2193, 1.442695
  %v2195 = vpow.pop %v2194
  %v2196 = vadd.f32 %v2195, 1.0
  %v2197 = vrcp.pop %v2196
  %v2198 = vmul.f32 1.0, %v2197
  %v2199 = vtanh.pop %v2185
  %v2200 = vxor.u32 %v2186, 2147483648
  %v2201 = vmul.f32 %v2200, 1.442695
  %v2202 = vpow.pop %v2201
  %v2203 = vadd.f32 %v2202, 1.0
  %v2204 = vrcp.pop %v2203
  %v2205 = vmul.f32 1.0, %v2204
  %v2206 = vmul.f32 %v2198, %v1896
  %v2207 = vmul.f32 %v2192, %v2199
  %v2208 = vadd.f32 %v2206, %v2207
  %v2209 = vtanh.pop %v2208
  %v2210 = vmul.f32 %v2205, %v2209
  %s2211 = scalar_lea.vmem %s4, 48
  %2212 = vst [vmem:[%s2211] sm:$0xff] %v2210
  %s2213 = scalar_lea.vmem %s0, 112
  %v2214 = vld [vmem:[%s2213] sm:$0xff]
  %v2215 = vld [vmem:[%s2213 + $0x8] sm:$0xff]
  %v2216 = vunpack.c.l.bf16 %v2214
  %v2217 = vunpack.c.h.bf16 %v2214
  %v2218 = vunpack.c.l.bf16 %v2215
  %v2219 = vunpack.c.h.bf16 %v2215
  %v2220 = vpack.c.bf16 %v2210, %v2210
  %v2221 = vld [vmem:[%s1] sm:$0xff]
  %v2222 = vld [vmem:[%s1 + $0x8] sm:$0xff]
  %v2223 = vld [vmem:[%s1 + $0x10] sm:$0xff]
  %v2224 = vld [vmem:[%s1 + $0x18] sm:$0xff]
  %v2225 = vld [vmem:[%s1 + $0x20] sm:$0xff]
  %v2226 = vld [vmem:[%s1 + $0x28] sm:$0xff]
  %v2227 = vld [vmem:[%s1 + $0x30] sm:$0xff]
  %v2228 = vld [vmem:[%s1 + $0x38] sm:$0xff]
  %v2229 = vld [vmem:[%s1 + $0x40] sm:$0xff]
  %v2230 = vld [vmem:[%s1 + $0x48] sm:$0xff]
  %v2231 = vld [vmem:[%s1 + $0x50] sm:$0xff]
  %v2232 = vld [vmem:[%s1 + $0x58] sm:$0xff]
  %v2233 = vld [vmem:[%s1 + $0x60] sm:$0xff]
  %v2234 = vld [vmem:[%s1 + $0x68] sm:$0xff]
  %v2235 = vld [vmem:[%s1 + $0x70] sm:$0xff]
  %v2236 = vld [vmem:[%s1 + $0x78] sm:$0xff]
  %v2237 = vld [vmem:[%s1 + $0x80] sm:$0xff]
  %v2238 = vld [vmem:[%s1 + $0x88] sm:$0xff]
  %v2239 = vld [vmem:[%s1 + $0x90] sm:$0xff]
  %v2240 = vld [vmem:[%s1 + $0x98] sm:$0xff]
  %v2241 = vld [vmem:[%s1 + $0xa0] sm:$0xff]
  %v2242 = vld [vmem:[%s1 + $0xa8] sm:$0xff]
  %v2243 = vld [vmem:[%s1 + $0xb0] sm:$0xff]
  %v2244 = vld [vmem:[%s1 + $0xb8] sm:$0xff]
  %v2245 = vld [vmem:[%s1 + $0xc0] sm:$0xff]
  %v2246 = vld [vmem:[%s1 + $0xc8] sm:$0xff]
  %v2247 = vld [vmem:[%s1 + $0xd0] sm:$0xff]
  %v2248 = vld [vmem:[%s1 + $0xd8] sm:$0xff]
  %v2249 = vld [vmem:[%s1 + $0xe0] sm:$0xff]
  %v2250 = vld [vmem:[%s1 + $0xe8] sm:$0xff]
  %v2251 = vld [vmem:[%s1 + $0xf0] sm:$0xff]
  %v2252 = vld [vmem:[%s1 + $0xf8] sm:$0xff]
  %v2285 = vunpack.c.l.b16 %v2221
  %v2286 = vunpack.c.h.b16 %v2221
  %v2287 = vunpack.c.l.b16 %v2222
  %v2288 = vunpack.c.h.b16 %v2222
  %v2289 = vunpack.c.l.b16 %v2223
  %v2290 = vunpack.c.h.b16 %v2223
  %v2291 = vunpack.c.l.b16 %v2224
  %v2292 = vunpack.c.h.b16 %v2224
  %v2293 = vunpack.c.l.b16 %v2225
  %v2294 = vunpack.c.h.b16 %v2225
  %v2295 = vunpack.c.l.b16 %v2226
  %v2296 = vunpack.c.h.b16 %v2226
  %v2297 = vunpack.c.l.b16 %v2227
  %v2298 = vunpack.c.h.b16 %v2227
  %v2299 = vunpack.c.l.b16 %v2228
  %v2300 = vunpack.c.h.b16 %v2228
  %v2301 = vunpack.c.l.b16 %v2229
  %v2302 = vunpack.c.h.b16 %v2229
  %v2303 = vunpack.c.l.b16 %v2230
  %v2304 = vunpack.c.h.b16 %v2230
  %v2305 = vunpack.c.l.b16 %v2231
  %v2306 = vunpack.c.h.b16 %v2231
  %v2307 = vunpack.c.l.b16 %v2232
  %v2308 = vunpack.c.h.b16 %v2232
  %v2309 = vunpack.c.l.b16 %v2233
  %v2310 = vunpack.c.h.b16 %v2233
  %v2311 = vunpack.c.l.b16 %v2234
  %v2312 = vunpack.c.h.b16 %v2234
  %v2313 = vunpack.c.l.b16 %v2235
  %v2314 = vunpack.c.h.b16 %v2235
  %v2315 = vunpack.c.l.b16 %v2236
  %v2316 = vunpack.c.h.b16 %v2236
  %v2317 = vunpack.c.l.b16 %v2237
  %v2318 = vunpack.c.h.b16 %v2237
  %v2319 = vunpack.c.l.b16 %v2238
  %v2320 = vunpack.c.h.b16 %v2238
  %v2321 = vunpack.c.l.b16 %v2239
  %v2322 = vunpack.c.h.b16 %v2239
  %v2323 = vunpack.c.l.b16 %v2240
  %v2324 = vunpack.c.h.b16 %v2240
  %v2325 = vunpack.c.l.b16 %v2241
  %v2326 = vunpack.c.h.b16 %v2241
  %v2327 = vunpack.c.l.b16 %v2242
  %v2328 = vunpack.c.h.b16 %v2242
  %v2329 = vunpack.c.l.b16 %v2243
  %v2330 = vunpack.c.h.b16 %v2243
  %v2331 = vunpack.c.l.b16 %v2244
  %v2332 = vunpack.c.h.b16 %v2244
  %v2333 = vunpack.c.l.b16 %v2245
  %v2334 = vunpack.c.h.b16 %v2245
  %v2335 = vunpack.c.l.b16 %v2246
  %v2336 = vunpack.c.h.b16 %v2246
  %v2337 = vunpack.c.l.b16 %v2247
  %v2338 = vunpack.c.h.b16 %v2247
  %v2339 = vunpack.c.l.b16 %v2248
  %v2340 = vunpack.c.h.b16 %v2248
  %v2341 = vunpack.c.l.b16 %v2249
  %v2342 = vunpack.c.h.b16 %v2249
  %v2343 = vunpack.c.l.b16 %v2250
  %v2344 = vunpack.c.h.b16 %v2250
  %v2345 = vunpack.c.l.b16 %v2251
  %v2346 = vunpack.c.h.b16 %v2251
  %v2347 = vunpack.c.l.b16 %v2252
  %v2348 = vunpack.c.h.b16 %v2252
  %v2349 = vpack.c.b16 %v2289, %v2285
  %v2350 = vpack.c.b16 %v2290, %v2286
  %v2351 = vpack.c.b16 %v2291, %v2287
  %v2352 = vpack.c.b16 %v2292, %v2288
  %v2353 = vpack.c.b16 %v2297, %v2293
  %v2354 = vpack.c.b16 %v2298, %v2294
  %v2355 = vpack.c.b16 %v2299, %v2295
  %v2356 = vpack.c.b16 %v2300, %v2296
  %v2357 = vpack.c.b16 %v2305, %v2301
  %v2358 = vpack.c.b16 %v2306, %v2302
  %v2359 = vpack.c.b16 %v2307, %v2303
  %v2360 = vpack.c.b16 %v2308, %v2304
  %v2361 = vpack.c.b16 %v2313, %v2309
  %v2362 = vpack.c.b16 %v2314, %v2310
  %v2363 = vpack.c.b16 %v2315, %v2311
  %v2364 = vpack.c.b16 %v2316, %v2312
  %v2365 = vpack.c.b16 %v2321, %v2317
  %v2366 = vpack.c.b16 %v2322, %v2318
  %v2367 = vpack.c.b16 %v2323, %v2319
  %v2368 = vpack.c.b16 %v2324, %v2320
  %v2369 = vpack.c.b16 %v2329, %v2325
  %v2370 = vpack.c.b16 %v2330, %v2326
  %v2371 = vpack.c.b16 %v2331, %v2327
  %v2372 = vpack.c.b16 %v2332, %v2328
  %v2373 = vpack.c.b16 %v2337, %v2333
  %v2374 = vpack.c.b16 %v2338, %v2334
  %v2375 = vpack.c.b16 %v2339, %v2335
  %v2376 = vpack.c.b16 %v2340, %v2336
  %v2377 = vpack.c.b16 %v2345, %v2341
  %v2378 = vpack.c.b16 %v2346, %v2342
  %v2379 = vpack.c.b16 %v2347, %v2343
  %v2380 = vpack.c.b16 %v2348, %v2344
  %2413 = vmatprep.subr.bf16.mxu0 %v2378
  %2414 = vmatpush1.bf16.msra.mxu0 %v2377
  %2415 = vmatprep.subr.bf16.mxu0 %v2374
  %2416 = vmatpush1.bf16.msra.mxu0 %v2373
  %2417 = vmatprep.subr.bf16.mxu0 %v2370
  %2418 = vmatpush1.bf16.msra.mxu0 %v2369
  %2419 = vmatprep.subr.bf16.mxu0 %v2366
  %2420 = vmatpush1.bf16.msra.mxu0 %v2365
  %2421 = vmatprep.subr.bf16.mxu0 %v2362
  %2422 = vmatpush1.bf16.msra.mxu0 %v2361
  %2423 = vmatprep.subr.bf16.mxu0 %v2358
  %2424 = vmatpush1.bf16.msra.mxu0 %v2357
  %2425 = vmatprep.subr.bf16.mxu0 %v2354
  %2426 = vmatpush1.bf16.msra.mxu0 %v2353
  %2427 = vmatprep.subr.bf16.mxu0 %v2350
  %2428 = vmatpush1.bf16.msra.mxu0 %v2349
  %2429 = vmatprep.subr.bf16.mxu0 0
  %2430 = vmatpush2.bf16.msra.mxu0 0
  %2431 = vmatprep.subr.bf16.mxu0 0
  %2432 = vmatpush2.bf16.msra.mxu0 0
  %2433 = vmatprep.subr.bf16.mxu0 0
  %2434 = vmatpush2.bf16.msra.mxu0 0
  %2435 = vmatprep.subr.bf16.mxu0 0
  %2436 = vmatpush2.bf16.msra.mxu0 0
  %2437 = vmatprep.subr.bf16.mxu0 0
  %2438 = vmatpush2.bf16.msra.mxu0 0
  %2439 = vmatprep.subr.bf16.mxu0 0
  %2440 = vmatpush2.bf16.msra.mxu0 0
  %2441 = vmatprep.subr.bf16.mxu0 0
  %2442 = vmatpush2.bf16.msra.mxu0 0
  %2443 = vmatprep.subr.bf16.mxu0 0
  %2444 = vmatpush2.bf16.msra.mxu0 0
  %2445 = vmatprep.mubr.bf16.mxu0 0
  %2446 = vmatmul.mubr.bf16.gmra.mxu0 %v2220
  %v2447 = vpop.f32.mrf.mxu0
  %v2448 = vadd.f32 0.0, %v2447
  %v2449 = vpop.f32.mrf.mxu0
  %v2450 = vadd.f32 0.0, %v2449
  %v2451 = vpop.f32.mrf.mxu0
  %v2452 = vpop.f32.mrf.mxu0
  %2453 = vdwg.mxu0
  %2454 = vmatprep.subr.bf16.mxu0 %v2380
  %2455 = vmatpush1.bf16.msra.mxu0 %v2379
  %2456 = vmatprep.subr.bf16.mxu0 %v2376
  %2457 = vmatpush1.bf16.msra.mxu0 %v2375
  %2458 = vmatprep.subr.bf16.mxu0 %v2372
  %2459 = vmatpush1.bf16.msra.mxu0 %v2371
  %2460 = vmatprep.subr.bf16.mxu0 %v2368
  %2461 = vmatpush1.bf16.msra.mxu0 %v2367
  %2462 = vmatprep.subr.bf16.mxu0 %v2364
  %2463 = vmatpush1.bf16.msra.mxu0 %v2363
  %2464 = vmatprep.subr.bf16.mxu0 %v2360
  %2465 = vmatpush1.bf16.msra.mxu0 %v2359
  %2466 = vmatprep.subr.bf16.mxu0 %v2356
  %2467 = vmatpush1.bf16.msra.mxu0 %v2355
  %2468 = vmatprep.subr.bf16.mxu0 %v2352
  %2469 = vmatpush1.bf16.msra.mxu0 %v2351
  %2470 = vmatprep.subr.bf16.mxu0 0
  %2471 = vmatpush2.bf16.msra.mxu0 0
  %2472 = vmatprep.subr.bf16.mxu0 0
  %2473 = vmatpush2.bf16.msra.mxu0 0
  %2474 = vmatprep.subr.bf16.mxu0 0
  %2475 = vmatpush2.bf16.msra.mxu0 0
  %2476 = vmatprep.subr.bf16.mxu0 0
  %2477 = vmatpush2.bf16.msra.mxu0 0
  %2478 = vmatprep.subr.bf16.mxu0 0
  %2479 = vmatpush2.bf16.msra.mxu0 0
  %2480 = vmatprep.subr.bf16.mxu0 0
  %2481 = vmatpush2.bf16.msra.mxu0 0
  %2482 = vmatprep.subr.bf16.mxu0 0
  %2483 = vmatpush2.bf16.msra.mxu0 0
  %2484 = vmatprep.subr.bf16.mxu0 0
  %2485 = vmatpush2.bf16.msra.mxu0 0
  %2486 = vmatprep.mubr.bf16.mxu0 0
  %2487 = vmatmul.mubr.bf16.gmra.mxu0 %v2220
  %v2488 = vpop.f32.mrf.mxu0
  %v2489 = vadd.f32 0.0, %v2488
  %v2490 = vpop.f32.mrf.mxu0
  %v2491 = vadd.f32 0.0, %v2490
  %v2492 = vpop.f32.mrf.mxu0
  %v2493 = vpop.f32.mrf.mxu0
  %2494 = vdwg.mxu0
  %v2495 = vadd.f32 %v2216, %v2448
  %v2496 = vadd.f32 %v2217, %v2450
  %v2497 = vadd.f32 %v2218, %v2489
  %v2498 = vadd.f32 %v2219, %v2491
  %v2499 = vxor.u32 %v2495, 2147483648
  %v2500 = vmul.f32 %v2499, 1.442695
  %v2501 = vpow.pop %v2500
  %v2502 = vadd.f32 %v2501, 1.0
  %v2503 = vrcp.pop %v2502
  %v2504 = vmul.f32 1.0, %v2503
  %v2505 = vxor.u32 %v2496, 2147483648
  %v2506 = vmul.f32 %v2505, 1.442695
  %v2507 = vpow.pop %v2506
  %v2508 = vadd.f32 %v2507, 1.0
  %v2509 = vrcp.pop %v2508
  %v2510 = vmul.f32 1.0, %v2509
  %v2511 = vtanh.pop %v2497
  %v2512 = vxor.u32 %v2498, 2147483648
  %v2513 = vmul.f32 %v2512, 1.442695
  %v2514 = vpow.pop %v2513
  %v2515 = vadd.f32 %v2514, 1.0
  %v2516 = vrcp.pop %v2515
  %v2517 = vmul.f32 1.0, %v2516
  %v2518 = vmul.f32 %v2510, %v2208
  %v2519 = vmul.f32 %v2504, %v2511
  %v2520 = vadd.f32 %v2518, %v2519
  %v2521 = vtanh.pop %v2520
  %v2522 = vmul.f32 %v2517, %v2521
  %s2523 = scalar_lea.vmem %s4, 56
  %2524 = vst [vmem:[%s2523] sm:$0xff] %v2522
  %2525 = vst [vmem:[#allocation2] sm:$0xff] %v2522
  %2526 = vst [vmem:[#allocation3] sm:$0xff] %v2520
  // Predicated region
  $region22: #{rnnlm_forward.6} parent=0 // pred_check
    %p2527 = pneg %p21
  $region23: #{rnnlm_forward.6} parent=0 // pred_check_branch
    %2529 = sbr.rel (%p2527) target = $region25
  $region24: #{rnnlm_forward.6} parent=0 // pred_region
    %2530 = vst [vmem:[%s5] sm:$0xff] %v2522
    %2531 = vst [vmem:[%s6] sm:$0xff] %v2520
  $region25: #{rnnlm_forward.6} parent=0 // pred_fallthru
    _
  // Predicated region
  $region26: #{rnnlm_forward.6} parent=0 // pred_check
    _
  $region27: #{rnnlm_forward.6} parent=0 // pred_check_branch
    %2533 = sbr.rel (0) target = $region29
  $region28: #{rnnlm_forward.6} parent=0 // pred_region
    _
  $region29: #{rnnlm_forward.6} parent=0 // pred_fallthru
    _
  // Predicated region
  $region30: #{rnnlm_forward.6} parent=0 // pred_check
    _
  $region31: #{rnnlm_forward.6} parent=0 // pred_check_branch
    %2535 = sbr.rel (0) target = $region33
  $region32: #{rnnlm_forward.6} parent=0 // pred_region
    _
  $region33: #{rnnlm_forward.6} parent=0 // pred_fallthru
    _
  // Predicated region
  $region34: #{rnnlm_forward.6} parent=0 // pred_check
    _
  $region35: #{rnnlm_forward.6} parent=0 // pred_check_branch
    %2537 = sbr.rel (0) target = $region37
  $region36: #{rnnlm_forward.6} parent=0 // pred_region
    _
  $region37: #{rnnlm_forward.6} parent=0 // pred_fallthru
    _
  // Predicated region
  $region38: #{rnnlm_forward.6} parent=0 // pred_check
    _
  $region39: #{rnnlm_forward.6} parent=0 // pred_check_branch
    %2539 = sbr.rel (0) target = $region41
  $region40: #{rnnlm_forward.6} parent=0 // pred_region
    _
  $region41: #{rnnlm_forward.6} parent=0 // pred_fallthru
    _
  // Predicated region
  $region42: #{rnnlm_forward.6} parent=0 // pred_check
    _
  $region43: #{rnnlm_forward.6} parent=0 // pred_check_branch
    %2541 = sbr.rel (0) target = $region45
  $region44: #{rnnlm_forward.6} parent=0 // pred_region
    _
  $region45: #{rnnlm_forward.6} parent=0 // pred_fallthru
    _
  // Predicated region
  $region46: #{rnnlm_forward.6} parent=0 // pred_check
    _
  $region47: #{rnnlm_forward.6} parent=0 // pred_check_branch
    %2543 = sbr.rel (0) target = $region49
  $region48: #{rnnlm_forward.6} parent=0 // pred_region
    _
  $region49: #{rnnlm_forward.6} parent=0 // pred_fallthru
    _

</llo_original>
